<compile_context>
chip_gen: v5e
topology: v5e:2x2
jax: 0.10.0
libtpu: 0.0.40
codegen_flags: <defaults>
</compile_context>

<pallas_src>
import functools

import jax
import jax.numpy as jnp
import numpy as np
from jax.experimental import pallas as pl
from jax.experimental.pallas import tpu as pltpu


# ------------------------------- fused kernel ------------------------------- #

def _tower_kernel(x_ref, m_ref,
                  w_in, b_in,
                  wd1, bd1, w11, b11,
                  wd2, bd2, w12, b12,
                  w_out, b_out,
                  out_ref, final_ref,
                  pad1_scr, pad2_scr,
                  *, num_layers, t_pad, t_valid, feat,
                  k1, k2, padmax1, padmax2, mxu_dtype):
    F = feat
    T = t_pad
    cdt = mxu_dtype

    x = x_ref[...].astype(cdt)                         # (dim, T), MXU operand dtype
    m = m_ref[...].astype(jnp.float32)                 # (1, T)
    # hoisted broadcast (JAX does not CSE broadcast_in_dim) — reused by every layer
    mask_f = jnp.broadcast_to(m, (F, T))

    # cross-stage fused input 1x1 conv: (2F, dim) @ (dim, T) -> (2F, T), f32 accumulate
    h0 = jnp.dot(w_in[...], x, preferred_element_type=jnp.float32) + b_in[...]
    if t_valid < T:
        # zero the lane-padded tail so the dilated convs see the same zero halo as the
        # reference's 'same' padding at the true sequence end (mask is zero-padded too,
        # so the tail stays zero after every residual layer).
        tail = (jax.lax.broadcasted_iota(jnp.int32, (1, T), 1) < t_valid)
        h0 = h0 * tail.astype(jnp.float32)

    # zero ONLY the halo columns; the interior is rewritten every layer, so the halo
    # stays zero ('same' conv zero padding).  Unconditional per grid step (megacore-safe).
    pad1_scr[:, :padmax1] = jnp.zeros((F, padmax1), cdt)
    pad1_scr[:, padmax1 + T:] = jnp.zeros((F, padmax1), cdt)
    pad2_scr[:, :padmax2] = jnp.zeros((F, padmax2), cdt)
    pad2_scr[:, padmax2 + T:] = jnp.zeros((F, padmax2), cdt)

    def run_stage(out0, wd, bd, w1, b1, pad_scr, K, padmax):
        out = out0                                      # f32 residual accumulator
        for i in range(num_layers):                     # static unroll, dilation = 2**i
            d = 2 ** i
            p = d * (K - 1) // 2                        # == dilation + dilation*(K-3)/2
            base = padmax - p
            # activation into scratch interior (MXU dtype; halves vst/vld bytes vs f32)
            pad_scr[:, padmax:padmax + T] = out.astype(cdt)
            # K-tap dilated conv as K accumulating MXU matmuls over lane-shifted views
            # (no concat materialization / VMEM round trip).
            acc = jnp.dot(wd[i * K], pad_scr[:, base:base + T],
                          preferred_element_type=jnp.float32)
            for k in range(1, K):
                s = base + k * d
                acc = acc + jnp.dot(wd[i * K + k], pad_scr[:, s:s + T],
                                    preferred_element_type=jnp.float32)
            h = jnp.maximum(acc + bd[i], 0.0)           # bias + ReLU (f32, VPU)
            h = jnp.dot(w1[i], h.astype(cdt),
                        preferred_element_type=jnp.float32) + b1[i]
            # TODO(synk): nn.Dropout is identity at inference; training-mode dropout omitted.
            out = (out + h) * mask_f                    # residual + mask (f32)
        return out

    out1 = run_stage(h0[:F], wd1, bd1, w11, b11, pad1_scr, k1, padmax1)
    out2 = run_stage(h0[F:], wd2, bd2, w12, b12, pad2_scr, k2, padmax2)

    # cross-stage fused output conv: fin1 + fin2 == [wo1|wo2] @ [out1; out2] + (bo1+bo2)
    cat = jnp.concatenate([out1, out2], axis=0).astype(cdt)       # (2F, T)
    fin = (jnp.dot(w_out[...], cat, preferred_element_type=jnp.float32)
           + b_out[...]) * m

    # lane-dense epilogue writes (T padded to a multiple of 128 by the wrapper)
    out_ref[...] = (out1 + out2).astype(out_ref.dtype)
    final_ref[...] = fin.astype(final_ref.dtype)


# --------------------------- parameter packing ------------------------------- #

def pack_tower_params(params, mxu_dtype=jnp.float32):
    """Pre-pack / pre-cast weights ONCE (keep this OUT of the per-step jitted path)."""
    F = params["stage1"]["w_in"].shape[0]
    NC = params["stage1"]["w_out"].shape[0]

    def pack_stage(stage):
        # PyTorch Conv1d weight (Cout, Cin, K) -> per-tap (L*K, Cout, Cin) matmul weights
        wd = jnp.concatenate([jnp.transpose(lp["wd"], (2, 0, 1))
                              for lp in stage["layers"]], axis=0).astype(mxu_dtype)
        bd = jnp.stack([lp["bd"].reshape(F, 1)
                        for lp in stage["layers"]]).astype(jnp.float32)
        w1 = jnp.stack([lp["w1"] for lp in stage["layers"]]).astype(mxu_dtype)
        b1 = jnp.stack([lp["b1"].reshape(F, 1)
                        for lp in stage["layers"]]).astype(jnp.float32)
        return wd, bd, w1, b1

    s1 = pack_stage(params["stage1"])
    s2 = pack_stage(params["stage2"])

    # fused input conv (2F, dim) and fused (exact) output conv (NC, 2F)
    w_in = jnp.concatenate([params["stage1"]["w_in"],
                            params["stage2"]["w_in"]], axis=0).astype(mxu_dtype)
    b_in = jnp.concatenate([params["stage1"]["b_in"],
                            params["stage2"]["b_in"]], axis=0).reshape(2 * F, 1)
    b_in = b_in.astype(jnp.float32)
    w_out = jnp.concatenate([params["stage1"]["w_out"],
                             params["stage2"]["w_out"]], axis=1).astype(mxu_dtype)
    b_out = (params["stage1"]["b_out"]
             + params["stage2"]["b_out"]).reshape(NC, 1).astype(jnp.float32)

    return (w_in, b_in, *s1, *s2, w_out, b_out)


def _vmem_bytes_estimate(dim, F, NC, L, k1, k2, T_pad, pm1, pm2, mxu_dtype):
    mb = jnp.dtype(mxu_dtype).itemsize
    weights = mb * (2 * F * dim + L * (k1 + 1) * F * F + L * (k2 + 1) * F * F
                    + NC * 2 * F)
    biases = 4 * (2 * F + 4 * L * F + NC)
    io = 2 * 4 * T_pad * (dim + 1 + F + NC)              # double-buffered IO blocks
    scratch = mb * F * (2 * T_pad + 2 * pm1 + 2 * pm2)   # padded conv scratches
    live = 4 * T_pad * (10 * F)                          # rough f32 live activations
    return weights + biases + io + scratch + live


# ------------------------------- Pallas wrapper ------------------------------ #

def tower_forward(packed, x_nct, mask_nct):
    """packed: output of pack_tower_params. x: (B, dim, T); mask: (B, NC, T). NCT outs."""
    (w_in, b_in, wd1, bd1, w11, b11,
     wd2, bd2, w12, b12, w_out, b_out) = packed

    B, dim, T = x_nct.shape
    L = bd1.shape[0]
    F = bd1.shape[1]
    NC = w_out.shape[0]
    k1 = wd1.shape[0] // L
    k2 = wd2.shape[0] // L
    mxu_dtype = wd1.dtype
    padmax1 = (2 ** (L - 1)) * (k1 - 1) // 2
    padmax2 = (2 ** (L - 1)) * (k2 - 1) // 2

    # lane-dense time axis: pad T to a multiple of 128 (outputs sliced back below)
    T_pad = ((T + 127) // 128) * 128
    mask1 = mask_nct[:, 0:1, :]
    if T_pad != T:
        x_p = jnp.pad(x_nct, ((0, 0), (0, 0), (0, T_pad - T)))
        m_p = jnp.pad(mask1, ((0, 0), (0, 0), (0, T_pad - T)))
    else:
        x_p, m_p = x_nct, mask1

    kern = functools.partial(
        _tower_kernel, num_layers=L, t_pad=T_pad, t_valid=T, feat=F,
        k1=k1, k2=k2, padmax1=padmax1, padmax2=padmax2, mxu_dtype=mxu_dtype)

    def full(shape):                                    # weights: loaded once, resident
        zero = (0,) * len(shape)
        return pl.BlockSpec(shape, lambda b, z=zero: z)

    in_specs = [
        pl.BlockSpec((None, dim, T_pad), lambda b: (b, 0, 0)),   # x (NCT block per batch)
        pl.BlockSpec((None, 1, T_pad), lambda b: (b, 0, 0)),     # mask[:, 0:1, :]
        full(w_in.shape), full(b_in.shape),
        full(wd1.shape), full(bd1.shape), full(w11.shape), full(b11.shape),
        full(wd2.shape), full(bd2.shape), full(w12.shape), full(b12.shape),
        full(w_out.shape), full(b_out.shape),
    ]
    out_specs = (
        pl.BlockSpec((None, F, T_pad), lambda b: (b, 0, 0)),
        pl.BlockSpec((None, NC, T_pad), lambda b: (b, 0, 0)),
    )

    est = _vmem_bytes_estimate(dim, F, NC, L, k1, k2, T_pad,
                               padmax1, padmax2, mxu_dtype)
    # explicit scoped-VMEM budget; cap below v7x's 64 MiB physical VMEM
    vmem_limit = int(min(max(2 * est, 16 * 2 ** 20), 60 * 2 ** 20))

    out_full, fin_full = pl.pallas_call(
        kern,
        out_shape=(jax.ShapeDtypeStruct((B, F, T_pad), x_nct.dtype),
                   jax.ShapeDtypeStruct((B, NC, T_pad), x_nct.dtype)),
        grid=(B,),
        in_specs=in_specs,
        out_specs=out_specs,
        scratch_shapes=[pltpu.VMEM((F, T_pad + 2 * padmax1), mxu_dtype),
                        pltpu.VMEM((F, T_pad + 2 * padmax2), mxu_dtype)],
        compiler_params=pltpu.CompilerParams(
            dimension_semantics=("parallel",),     # batch shards across TensorCores
            vmem_limit_bytes=vmem_limit),
    )(x_p, m_p, w_in, b_in, wd1, bd1, w11, b11, wd2, bd2, w12, b12, w_out, b_out)

    if T_pad != T:
        return out_full[:, :, :T], fin_full[:, :, :T]
    return out_full, fin_full


# ------------------------------ parameters ---------------------------------- #

def init_stage_params(key, num_layers, num_f_maps, dim, num_classes, kernel_size):
    ks = jax.random.split(key, 4 + 4 * num_layers)
    p = {
        "w_in": 0.1 * jax.random.normal(ks[0], (num_f_maps, dim), jnp.float32),
        "b_in": 0.01 * jax.random.normal(ks[1], (num_f_maps,), jnp.float32),
        "w_out": 0.1 * jax.random.normal(ks[2], (num_classes, num_f_maps), jnp.float32),
        "b_out": 0.01 * jax.random.normal(ks[3], (num_classes,), jnp.float32),
        "layers": [],
    }
    for i in range(num_layers):
        ka, kb, kc, kd = ks[4 + 4 * i: 8 + 4 * i]
        p["layers"].append({
            # PyTorch Conv1d layout (Cout, Cin, K)
            "wd": 0.1 * jax.random.normal(ka, (num_f_maps, num_f_maps, kernel_size), jnp.float32),
            "bd": 0.01 * jax.random.normal(kb, (num_f_maps,), jnp.float32),
            "w1": 0.1 * jax.random.normal(kc, (num_f_maps, num_f_maps), jnp.float32),
            "b1": 0.01 * jax.random.normal(kd, (num_f_maps,), jnp.float32),
        })
    return p


# --------------------------- pure-JAX reference ------------------------------ #

def _ref_conv1d(x_nct, w_oik, b, dilation=1, pad=0):
    y = jax.lax.conv_general_dilated(
        x_nct, w_oik, window_strides=(1,), padding=[(pad, pad)],
        rhs_dilation=(dilation,), dimension_numbers=("NCH", "OIH", "NCH"))
    return y + b[None, :, None]


def _ref_stage(params, x_nct, mask_nct, kernel_size):
    out = _ref_conv1d(x_nct, params["w_in"][..., None], params["b_in"])
    for i, lp in enumerate(params["layers"]):
        d = 2 ** i
        pad = d * (kernel_size - 1) // 2
        h = jax.nn.relu(_ref_conv1d(out, lp["wd"], lp["bd"], d, pad))
        h = _ref_conv1d(h, lp["w1"][..., None], lp["b1"])
        out = (out + h) * mask_nct[:, 0:1, :]
    final = _ref_conv1d(out, params["w_out"][..., None], params["b_out"]) * mask_nct[:, 0:1, :]
    return out, final


def _ref_tower(params, x_nct, mask_nct):
    o1, f1 = _ref_stage(params["stage1"], x_nct, mask_nct, 3)
    o2, f2 = _ref_stage(params["stage2"], x_nct, mask_nct, 5)
    return o1 + o2, f1 + f2


# ----------------------------------- main ------------------------------------ #

if __name__ == "__main__":
    num_layers = 4
    num_f_maps = 32
    dim = 16
    num_classes = 8
    B, T = 2, 100        # T not a multiple of 128: exercises the lane-padding path

    root = jax.random.PRNGKey(0)
    k_x, k_s1, k_s2 = jax.random.split(root, 3)

    params = {
        "stage1": init_stage_params(k_s1, num_layers, num_f_maps, dim, num_classes, 3),
        "stage2": init_stage_params(k_s2, num_layers, num_f_maps, dim, num_classes, 5),
    }

    # PyTorch-convention inputs: x (N, dim, T), mask (N, num_classes, T)
    x_nct = jax.random.normal(k_x, (B, dim, T), jnp.float32)
    lengths = jnp.array([T, T - 7])
    t_idx = jnp.arange(T)[None, :]
    mask_row = (t_idx < lengths[:, None]).astype(jnp.float32)          # (B, T)
    mask_nct = jnp.broadcast_to(mask_row[:, None, :], (B, num_classes, T))

    fwd = jax.jit(tower_forward)
    ref_out, ref_final = _ref_tower(params, x_nct, mask_nct)

    # f32 MXU path: tight check against the lax.conv reference
    packed_f32 = pack_tower_params(params, jnp.float32)     # packed/cast once, off the hot path
    out, final = jax.block_until_ready(fwd(packed_f32, x_nct, mask_nct))
    np.testing.assert_allclose(np.asarray(out), np.asarray(ref_out), rtol=1e-3, atol=1e-3)
    np.testing.assert_allclose(np.asarray(final), np.asarray(ref_final), rtol=1e-3, atol=1e-3)

    # bf16 MXU operands with f32 accumulation (v6e/v7x throughput path): loose sanity check
    packed_bf16 = pack_tower_params(params, jnp.bfloat16)
    out_bf, final_bf = jax.block_until_ready(fwd(packed_bf16, x_nct, mask_nct))
    np.testing.assert_allclose(np.asarray(out_bf), np.asarray(ref_out), rtol=5e-2, atol=5e-2)
    np.testing.assert_allclose(np.asarray(final_bf), np.asarray(ref_final), rtol=5e-2, atol=5e-2)

    print("KERNEL_OK")
</pallas_src>

<mosaic_0001>
module attributes {stable_mosaic.version = 11 : i64} {
  func.func @_tower_kernel(%arg0: i32, %arg1: memref<1x16x128xf32, #tpu.memory_space<vmem>>, %arg2: memref<1x1x128xf32, #tpu.memory_space<vmem>>, %arg3: memref<64x16xf32, #tpu.memory_space<vmem>>, %arg4: memref<64x1xf32, #tpu.memory_space<vmem>>, %arg5: memref<12x32x32xf32, #tpu.memory_space<vmem>>, %arg6: memref<4x32x1xf32, #tpu.memory_space<vmem>>, %arg7: memref<4x32x32xf32, #tpu.memory_space<vmem>>, %arg8: memref<4x32x1xf32, #tpu.memory_space<vmem>>, %arg9: memref<20x32x32xf32, #tpu.memory_space<vmem>>, %arg10: memref<4x32x1xf32, #tpu.memory_space<vmem>>, %arg11: memref<4x32x32xf32, #tpu.memory_space<vmem>>, %arg12: memref<4x32x1xf32, #tpu.memory_space<vmem>>, %arg13: memref<8x64xf32, #tpu.memory_space<vmem>>, %arg14: memref<8x1xf32, #tpu.memory_space<vmem>>, %arg15: memref<1x32x128xf32, #tpu.memory_space<vmem>>, %arg16: memref<1x8x128xf32, #tpu.memory_space<vmem>>, %arg17: memref<32x144xf32, #tpu.memory_space<vmem>>, %arg18: memref<32x160xf32, #tpu.memory_space<vmem>>) attributes {dimension_semantics = [#tpu.dimension_semantics<parallel>], iteration_bounds = array<i64: 2>, scalar_prefetch = 0 : i64, scratch_operands = 2 : i64, tpu.core_type = #tpu.core_type<tc>, window_params = [{transform_indices = @transform_0, window_bounds = array<i64: 1, 16, 128>}, {transform_indices = @transform_1, window_bounds = array<i64: 1, 1, 128>}, {pipeline_mode = #tpu.pipeline_mode<synchronous>, transform_indices = @transform_2, window_bounds = array<i64: 64, 16>}, {pipeline_mode = #tpu.pipeline_mode<synchronous>, transform_indices = @transform_3, window_bounds = array<i64: 64, 1>}, {pipeline_mode = #tpu.pipeline_mode<synchronous>, transform_indices = @transform_4, window_bounds = array<i64: 12, 32, 32>}, {pipeline_mode = #tpu.pipeline_mode<synchronous>, transform_indices = @transform_5, window_bounds = array<i64: 4, 32, 1>}, {pipeline_mode = #tpu.pipeline_mode<synchronous>, transform_indices = @transform_6, window_bounds = array<i64: 4, 32, 32>}, {pipeline_mode = #tpu.pipeline_mode<synchronous>, transform_indices = @transform_7, window_bounds = array<i64: 4, 32, 1>}, {pipeline_mode = #tpu.pipeline_mode<synchronous>, transform_indices = @transform_8, window_bounds = array<i64: 20, 32, 32>}, {pipeline_mode = #tpu.pipeline_mode<synchronous>, transform_indices = @transform_9, window_bounds = array<i64: 4, 32, 1>}, {pipeline_mode = #tpu.pipeline_mode<synchronous>, transform_indices = @transform_10, window_bounds = array<i64: 4, 32, 32>}, {pipeline_mode = #tpu.pipeline_mode<synchronous>, transform_indices = @transform_11, window_bounds = array<i64: 4, 32, 1>}, {pipeline_mode = #tpu.pipeline_mode<synchronous>, transform_indices = @transform_12, window_bounds = array<i64: 8, 64>}, {pipeline_mode = #tpu.pipeline_mode<synchronous>, transform_indices = @transform_13, window_bounds = array<i64: 8, 1>}, {transform_indices = @transform_14, window_bounds = array<i64: 1, 32, 128>}, {transform_indices = @transform_15, window_bounds = array<i64: 1, 8, 128>}]} {
    %c0 = arith.constant 0 : index
    %c0_0 = arith.constant 0 : index
    %c0_1 = arith.constant 0 : index
    %0 = vector.load %arg1[%c0, %c0_0, %c0_1] : memref<1x16x128xf32, #tpu.memory_space<vmem>>, vector<1x16x128xf32>
    %1 = vector.shape_cast %0 : vector<1x16x128xf32> to vector<16x128xf32>
    %c0_2 = arith.constant 0 : index
    %c0_3 = arith.constant 0 : index
    %c0_4 = arith.constant 0 : index
    %2 = vector.load %arg2[%c0_2, %c0_3, %c0_4] : memref<1x1x128xf32, #tpu.memory_space<vmem>>, vector<1x1x128xf32>
    %3 = vector.shape_cast %2 : vector<1x1x128xf32> to vector<1x128xf32>
    %4 = vector.shape_cast %3 : vector<1x128xf32> to vector<1x128xf32>
    %5 = vector.broadcast %4 : vector<1x128xf32> to vector<32x128xf32>
    %c0_5 = arith.constant 0 : index
    %c0_6 = arith.constant 0 : index
    %6 = vector.load %arg3[%c0_5, %c0_6] : memref<64x16xf32, #tpu.memory_space<vmem>>, vector<64x16xf32>
    %cst = arith.constant dense<0.000000e+00> : vector<64x128xf32>
    %7 = tpu.matmul %6, %1, %cst {dimension_numbers = #tpu.dot_dimension_numbers<[1], [0], [0], [1], [0, 0, 1, 1], [], []>} : vector<64x16xf32>, vector<16x128xf32>, vector<64x128xf32> -> vector<64x128xf32>
    %c0_7 = arith.constant 0 : index
    %c0_8 = arith.constant 0 : index
    %8 = vector.load %arg4[%c0_7, %c0_8] : memref<64x1xf32, #tpu.memory_space<vmem>>, vector<64x1xf32>
    %9 = vector.broadcast %8 : vector<64x1xf32> to vector<64x128xf32>
    %10 = arith.addf %7, %9 : vector<64x128xf32>
    %11 = tpu.iota {dimensions = array<i32: 1>} : vector<1x128xi32>
    %c100_i32 = arith.constant 100 : i32
    %12 = vector.broadcast %c100_i32 : i32 to vector<1x128xi32>
    %13 = arith.cmpi slt, %11, %12 : vector<1x128xi32>
    %14 = arith.extui %13 : vector<1x128xi1> to vector<1x128xi32>
    %15 = arith.sitofp %14 : vector<1x128xi32> to vector<1x128xf32>
    %16 = vector.broadcast %15 : vector<1x128xf32> to vector<64x128xf32>
    %17 = arith.mulf %10, %16 : vector<64x128xf32>
    %cst_9 = arith.constant 0.000000e+00 : f32
    %18 = vector.broadcast %cst_9 : f32 to vector<32x8xf32>
    %c0_10 = arith.constant 0 : index
    %c0_11 = arith.constant 0 : index
    %19 = vector.load %arg17[%c0_10, %c0_11] : memref<32x144xf32, #tpu.memory_space<vmem>>, vector<32x8xf32>
    tpu.vector_store %arg17[%c0_10, %c0_11], %18 {strides = array<i32>} : memref<32x144xf32, #tpu.memory_space<vmem>>, vector<32x8xf32>,
    %cst_12 = arith.constant 0.000000e+00 : f32
    %20 = vector.broadcast %cst_12 : f32 to vector<32x8xf32>
    %c0_13 = arith.constant 0 : index
    %c136 = arith.constant 136 : index
    %21 = vector.load %arg17[%c0_13, %c136] : memref<32x144xf32, #tpu.memory_space<vmem>>, vector<32x8xf32>
    tpu.vector_store %arg17[%c0_13, %c136], %20 {strides = array<i32>} : memref<32x144xf32, #tpu.memory_space<vmem>>, vector<32x8xf32>,
    %cst_14 = arith.constant 0.000000e+00 : f32
    %22 = vector.broadcast %cst_14 : f32 to vector<32x16xf32>
    %c0_15 = arith.constant 0 : index
    %c0_16 = arith.constant 0 : index
    %23 = vector.load %arg18[%c0_15, %c0_16] : memref<32x160xf32, #tpu.memory_space<vmem>>, vector<32x16xf32>
    tpu.vector_store %arg18[%c0_15, %c0_16], %22 {strides = array<i32>} : memref<32x160xf32, #tpu.memory_space<vmem>>, vector<32x16xf32>,
    %cst_17 = arith.constant 0.000000e+00 : f32
    %24 = vector.broadcast %cst_17 : f32 to vector<32x16xf32>
    %c0_18 = arith.constant 0 : index
    %c144 = arith.constant 144 : index
    %25 = vector.load %arg18[%c0_18, %c144] : memref<32x160xf32, #tpu.memory_space<vmem>>, vector<32x16xf32>
    tpu.vector_store %arg18[%c0_18, %c144], %24 {strides = array<i32>} : memref<32x160xf32, #tpu.memory_space<vmem>>, vector<32x16xf32>,
    %26 = vector.extract_strided_slice %17 {offsets = [0, 0], sizes = [32, 128], strides = [1, 1]} : vector<64x128xf32> to vector<32x128xf32>
    %c0_19 = arith.constant 0 : index
    %c8 = arith.constant 8 : index
    %27 = vector.load %arg17[%c0_19, %c8] : memref<32x144xf32, #tpu.memory_space<vmem>>, vector<32x128xf32>
    tpu.vector_store %arg17[%c0_19, %c8], %26 {strides = array<i32>} : memref<32x144xf32, #tpu.memory_space<vmem>>, vector<32x128xf32>,
    %c0_20 = arith.constant 0 : index
    %c0_21 = arith.constant 0 : index
    %c0_22 = arith.constant 0 : index
    %28 = vector.load %arg5[%c0_20, %c0_21, %c0_22] : memref<12x32x32xf32, #tpu.memory_space<vmem>>, vector<1x32x32xf32>
    %29 = vector.shape_cast %28 : vector<1x32x32xf32> to vector<32x32xf32>
    %c0_23 = arith.constant 0 : index
    %c7 = arith.constant 7 : index
    %30 = vector.load %arg17[%c0_23, %c7] : memref<32x144xf32, #tpu.memory_space<vmem>>, vector<32x128xf32>
    %cst_24 = arith.constant dense<0.000000e+00> : vector<32x128xf32>
    %31 = tpu.matmul %29, %30, %cst_24 {dimension_numbers = #tpu.dot_dimension_numbers<[1], [0], [0], [1], [0, 0, 1, 1], [], []>} : vector<32x32xf32>, vector<32x128xf32>, vector<32x128xf32> -> vector<32x128xf32>
    %c1 = arith.constant 1 : index
    %c0_25 = arith.constant 0 : index
    %c0_26 = arith.constant 0 : index
    %32 = vector.load %arg5[%c1, %c0_25, %c0_26] : memref<12x32x32xf32, #tpu.memory_space<vmem>>, vector<1x32x32xf32>
    %33 = vector.shape_cast %32 : vector<1x32x32xf32> to vector<32x32xf32>
    %c0_27 = arith.constant 0 : index
    %c8_28 = arith.constant 8 : index
    %34 = vector.load %arg17[%c0_27, %c8_28] : memref<32x144xf32, #tpu.memory_space<vmem>>, vector<32x128xf32>
    %cst_29 = arith.constant dense<0.000000e+00> : vector<32x128xf32>
    %35 = tpu.matmul %33, %34, %cst_29 {dimension_numbers = #tpu.dot_dimension_numbers<[1], [0], [0], [1], [0, 0, 1, 1], [], []>} : vector<32x32xf32>, vector<32x128xf32>, vector<32x128xf32> -> vector<32x128xf32>
    %36 = arith.addf %31, %35 : vector<32x128xf32>
    %c2 = arith.constant 2 : index
    %c0_30 = arith.constant 0 : index
    %c0_31 = arith.constant 0 : index
    %37 = vector.load %arg5[%c2, %c0_30, %c0_31] : memref<12x32x32xf32, #tpu.memory_space<vmem>>, vector<1x32x32xf32>
    %38 = vector.shape_cast %37 : vector<1x32x32xf32> to vector<32x32xf32>
    %c0_32 = arith.constant 0 : index
    %c9 = arith.constant 9 : index
    %39 = vector.load %arg17[%c0_32, %c9] : memref<32x144xf32, #tpu.memory_space<vmem>>, vector<32x128xf32>
    %cst_33 = arith.constant dense<0.000000e+00> : vector<32x128xf32>
    %40 = tpu.matmul %38, %39, %cst_33 {dimension_numbers = #tpu.dot_dimension_numbers<[1], [0], [0], [1], [0, 0, 1, 1], [], []>} : vector<32x32xf32>, vector<32x128xf32>, vector<32x128xf32> -> vector<32x128xf32>
    %41 = arith.addf %36, %40 : vector<32x128xf32>
    %c0_34 = arith.constant 0 : index
    %c0_35 = arith.constant 0 : index
    %c0_36 = arith.constant 0 : index
    %42 = vector.load %arg6[%c0_34, %c0_35, %c0_36] : memref<4x32x1xf32, #tpu.memory_space<vmem>>, vector<1x32x1xf32>
    %43 = vector.shape_cast %42 : vector<1x32x1xf32> to vector<32x1xf32>
    %44 = vector.broadcast %43 : vector<32x1xf32> to vector<32x128xf32>
    %45 = arith.addf %41, %44 : vector<32x128xf32>
    %cst_37 = arith.constant 0.000000e+00 : f32
    %46 = vector.broadcast %cst_37 : f32 to vector<32x128xf32>
    %47 = arith.maximumf %45, %46 : vector<32x128xf32>
    %c0_38 = arith.constant 0 : index
    %c0_39 = arith.constant 0 : index
    %c0_40 = arith.constant 0 : index
    %48 = vector.load %arg7[%c0_38, %c0_39, %c0_40] : memref<4x32x32xf32, #tpu.memory_space<vmem>>, vector<1x32x32xf32>
    %49 = vector.shape_cast %48 : vector<1x32x32xf32> to vector<32x32xf32>
    %cst_41 = arith.constant dense<0.000000e+00> : vector<32x128xf32>
    %50 = tpu.matmul %49, %47, %cst_41 {dimension_numbers = #tpu.dot_dimension_numbers<[1], [0], [0], [1], [0, 0, 1, 1], [], []>} : vector<32x32xf32>, vector<32x128xf32>, vector<32x128xf32> -> vector<32x128xf32>
    %c0_42 = arith.constant 0 : index
    %c0_43 = arith.constant 0 : index
    %c0_44 = arith.constant 0 : index
    %51 = vector.load %arg8[%c0_42, %c0_43, %c0_44] : memref<4x32x1xf32, #tpu.memory_space<vmem>>, vector<1x32x1xf32>
    %52 = vector.shape_cast %51 : vector<1x32x1xf32> to vector<32x1xf32>
    %53 = vector.broadcast %52 : vector<32x1xf32> to vector<32x128xf32>
    %54 = arith.addf %50, %53 : vector<32x128xf32>
    %55 = arith.addf %26, %54 : vector<32x128xf32>
    %56 = arith.mulf %55, %5 : vector<32x128xf32>
    %c0_45 = arith.constant 0 : index
    %c8_46 = arith.constant 8 : index
    %57 = vector.load %arg17[%c0_45, %c8_46] : memref<32x144xf32, #tpu.memory_space<vmem>>, vector<32x128xf32>
    tpu.vector_store %arg17[%c0_45, %c8_46], %56 {strides = array<i32>} : memref<32x144xf32, #tpu.memory_space<vmem>>, vector<32x128xf32>,
    %c3 = arith.constant 3 : index
    %c0_47 = arith.constant 0 : index
    %c0_48 = arith.constant 0 : index
    %58 = vector.load %arg5[%c3, %c0_47, %c0_48] : memref<12x32x32xf32, #tpu.memory_space<vmem>>, vector<1x32x32xf32>
    %59 = vector.shape_cast %58 : vector<1x32x32xf32> to vector<32x32xf32>
    %c0_49 = arith.constant 0 : index
    %c6 = arith.constant 6 : index
    %60 = vector.load %arg17[%c0_49, %c6] : memref<32x144xf32, #tpu.memory_space<vmem>>, vector<32x128xf32>
    %cst_50 = arith.constant dense<0.000000e+00> : vector<32x128xf32>
    %61 = tpu.matmul %59, %60, %cst_50 {dimension_numbers = #tpu.dot_dimension_numbers<[1], [0], [0], [1], [0, 0, 1, 1], [], []>} : vector<32x32xf32>, vector<32x128xf32>, vector<32x128xf32> -> vector<32x128xf32>
    %c4 = arith.constant 4 : index
    %c0_51 = arith.constant 0 : index
    %c0_52 = arith.constant 0 : index
    %62 = vector.load %arg5[%c4, %c0_51, %c0_52] : memref<12x32x32xf32, #tpu.memory_space<vmem>>, vector<1x32x32xf32>
    %63 = vector.shape_cast %62 : vector<1x32x32xf32> to vector<32x32xf32>
    %c0_53 = arith.constant 0 : index
    %c8_54 = arith.constant 8 : index
    %64 = vector.load %arg17[%c0_53, %c8_54] : memref<32x144xf32, #tpu.memory_space<vmem>>, vector<32x128xf32>
    %cst_55 = arith.constant dense<0.000000e+00> : vector<32x128xf32>
    %65 = tpu.matmul %63, %64, %cst_55 {dimension_numbers = #tpu.dot_dimension_numbers<[1], [0], [0], [1], [0, 0, 1, 1], [], []>} : vector<32x32xf32>, vector<32x128xf32>, vector<32x128xf32> -> vector<32x128xf32>
    %66 = arith.addf %61, %65 : vector<32x128xf32>
    %c5 = arith.constant 5 : index
    %c0_56 = arith.constant 0 : index
    %c0_57 = arith.constant 0 : index
    %67 = vector.load %arg5[%c5, %c0_56, %c0_57] : memref<12x32x32xf32, #tpu.memory_space<vmem>>, vector<1x32x32xf32>
    %68 = vector.shape_cast %67 : vector<1x32x32xf32> to vector<32x32xf32>
    %c0_58 = arith.constant 0 : index
    %c10 = arith.constant 10 : index
    %69 = vector.load %arg17[%c0_58, %c10] : memref<32x144xf32, #tpu.memory_space<vmem>>, vector<32x128xf32>
    %cst_59 = arith.constant dense<0.000000e+00> : vector<32x128xf32>
    %70 = tpu.matmul %68, %69, %cst_59 {dimension_numbers = #tpu.dot_dimension_numbers<[1], [0], [0], [1], [0, 0, 1, 1], [], []>} : vector<32x32xf32>, vector<32x128xf32>, vector<32x128xf32> -> vector<32x128xf32>
    %71 = arith.addf %66, %70 : vector<32x128xf32>
    %c1_60 = arith.constant 1 : index
    %c0_61 = arith.constant 0 : index
    %c0_62 = arith.constant 0 : index
    %72 = vector.load %arg6[%c1_60, %c0_61, %c0_62] : memref<4x32x1xf32, #tpu.memory_space<vmem>>, vector<1x32x1xf32>
    %73 = vector.shape_cast %72 : vector<1x32x1xf32> to vector<32x1xf32>
    %74 = vector.broadcast %73 : vector<32x1xf32> to vector<32x128xf32>
    %75 = arith.addf %71, %74 : vector<32x128xf32>
    %cst_63 = arith.constant 0.000000e+00 : f32
    %76 = vector.broadcast %cst_63 : f32 to vector<32x128xf32>
    %77 = arith.maximumf %75, %76 : vector<32x128xf32>
    %c1_64 = arith.constant 1 : index
    %c0_65 = arith.constant 0 : index
    %c0_66 = arith.constant 0 : index
    %78 = vector.load %arg7[%c1_64, %c0_65, %c0_66] : memref<4x32x32xf32, #tpu.memory_space<vmem>>, vector<1x32x32xf32>
    %79 = vector.shape_cast %78 : vector<1x32x32xf32> to vector<32x32xf32>
    %cst_67 = arith.constant dense<0.000000e+00> : vector<32x128xf32>
    %80 = tpu.matmul %79, %77, %cst_67 {dimension_numbers = #tpu.dot_dimension_numbers<[1], [0], [0], [1], [0, 0, 1, 1], [], []>} : vector<32x32xf32>, vector<32x128xf32>, vector<32x128xf32> -> vector<32x128xf32>
    %c1_68 = arith.constant 1 : index
    %c0_69 = arith.constant 0 : index
    %c0_70 = arith.constant 0 : index
    %81 = vector.load %arg8[%c1_68, %c0_69, %c0_70] : memref<4x32x1xf32, #tpu.memory_space<vmem>>, vector<1x32x1xf32>
    %82 = vector.shape_cast %81 : vector<1x32x1xf32> to vector<32x1xf32>
    %83 = vector.broadcast %82 : vector<32x1xf32> to vector<32x128xf32>
    %84 = arith.addf %80, %83 : vector<32x128xf32>
    %85 = arith.addf %56, %84 : vector<32x128xf32>
    %86 = arith.mulf %85, %5 : vector<32x128xf32>
    %c0_71 = arith.constant 0 : index
    %c8_72 = arith.constant 8 : index
    %87 = vector.load %arg17[%c0_71, %c8_72] : memref<32x144xf32, #tpu.memory_space<vmem>>, vector<32x128xf32>
    tpu.vector_store %arg17[%c0_71, %c8_72], %86 {strides = array<i32>} : memref<32x144xf32, #tpu.memory_space<vmem>>, vector<32x128xf32>,
    %c6_73 = arith.constant 6 : index
    %c0_74 = arith.constant 0 : index
    %c0_75 = arith.constant 0 : index
    %88 = vector.load %arg5[%c6_73, %c0_74, %c0_75] : memref<12x32x32xf32, #tpu.memory_space<vmem>>, vector<1x32x32xf32>
    %89 = vector.shape_cast %88 : vector<1x32x32xf32> to vector<32x32xf32>
    %c0_76 = arith.constant 0 : index
    %c4_77 = arith.constant 4 : index
    %90 = vector.load %arg17[%c0_76, %c4_77] : memref<32x144xf32, #tpu.memory_space<vmem>>, vector<32x128xf32>
    %cst_78 = arith.constant dense<0.000000e+00> : vector<32x128xf32>
    %91 = tpu.matmul %89, %90, %cst_78 {dimension_numbers = #tpu.dot_dimension_numbers<[1], [0], [0], [1], [0, 0, 1, 1], [], []>} : vector<32x32xf32>, vector<32x128xf32>, vector<32x128xf32> -> vector<32x128xf32>
    %c7_79 = arith.constant 7 : index
    %c0_80 = arith.constant 0 : index
    %c0_81 = arith.constant 0 : index
    %92 = vector.load %arg5[%c7_79, %c0_80, %c0_81] : memref<12x32x32xf32, #tpu.memory_space<vmem>>, vector<1x32x32xf32>
    %93 = vector.shape_cast %92 : vector<1x32x32xf32> to vector<32x32xf32>
    %c0_82 = arith.constant 0 : index
    %c8_83 = arith.constant 8 : index
    %94 = vector.load %arg17[%c0_82, %c8_83] : memref<32x144xf32, #tpu.memory_space<vmem>>, vector<32x128xf32>
    %cst_84 = arith.constant dense<0.000000e+00> : vector<32x128xf32>
    %95 = tpu.matmul %93, %94, %cst_84 {dimension_numbers = #tpu.dot_dimension_numbers<[1], [0], [0], [1], [0, 0, 1, 1], [], []>} : vector<32x32xf32>, vector<32x128xf32>, vector<32x128xf32> -> vector<32x128xf32>
    %96 = arith.addf %91, %95 : vector<32x128xf32>
    %c8_85 = arith.constant 8 : index
    %c0_86 = arith.constant 0 : index
    %c0_87 = arith.constant 0 : index
    %97 = vector.load %arg5[%c8_85, %c0_86, %c0_87] : memref<12x32x32xf32, #tpu.memory_space<vmem>>, vector<1x32x32xf32>
    %98 = vector.shape_cast %97 : vector<1x32x32xf32> to vector<32x32xf32>
    %c0_88 = arith.constant 0 : index
    %c12 = arith.constant 12 : index
    %99 = vector.load %arg17[%c0_88, %c12] : memref<32x144xf32, #tpu.memory_space<vmem>>, vector<32x128xf32>
    %cst_89 = arith.constant dense<0.000000e+00> : vector<32x128xf32>
    %100 = tpu.matmul %98, %99, %cst_89 {dimension_numbers = #tpu.dot_dimension_numbers<[1], [0], [0], [1], [0, 0, 1, 1], [], []>} : vector<32x32xf32>, vector<32x128xf32>, vector<32x128xf32> -> vector<32x128xf32>
    %101 = arith.addf %96, %100 : vector<32x128xf32>
    %c2_90 = arith.constant 2 : index
    %c0_91 = arith.constant 0 : index
    %c0_92 = arith.constant 0 : index
    %102 = vector.load %arg6[%c2_90, %c0_91, %c0_92] : memref<4x32x1xf32, #tpu.memory_space<vmem>>, vector<1x32x1xf32>
    %103 = vector.shape_cast %102 : vector<1x32x1xf32> to vector<32x1xf32>
    %104 = vector.broadcast %103 : vector<32x1xf32> to vector<32x128xf32>
    %105 = arith.addf %101, %104 : vector<32x128xf32>
    %cst_93 = arith.constant 0.000000e+00 : f32
    %106 = vector.broadcast %cst_93 : f32 to vector<32x128xf32>
    %107 = arith.maximumf %105, %106 : vector<32x128xf32>
    %c2_94 = arith.constant 2 : index
    %c0_95 = arith.constant 0 : index
    %c0_96 = arith.constant 0 : index
    %108 = vector.load %arg7[%c2_94, %c0_95, %c0_96] : memref<4x32x32xf32, #tpu.memory_space<vmem>>, vector<1x32x32xf32>
    %109 = vector.shape_cast %108 : vector<1x32x32xf32> to vector<32x32xf32>
    %cst_97 = arith.constant dense<0.000000e+00> : vector<32x128xf32>
    %110 = tpu.matmul %109, %107, %cst_97 {dimension_numbers = #tpu.dot_dimension_numbers<[1], [0], [0], [1], [0, 0, 1, 1], [], []>} : vector<32x32xf32>, vector<32x128xf32>, vector<32x128xf32> -> vector<32x128xf32>
    %c2_98 = arith.constant 2 : index
    %c0_99 = arith.constant 0 : index
    %c0_100 = arith.constant 0 : index
    %111 = vector.load %arg8[%c2_98, %c0_99, %c0_100] : memref<4x32x1xf32, #tpu.memory_space<vmem>>, vector<1x32x1xf32>
    %112 = vector.shape_cast %111 : vector<1x32x1xf32> to vector<32x1xf32>
    %113 = vector.broadcast %112 : vector<32x1xf32> to vector<32x128xf32>
    %114 = arith.addf %110, %113 : vector<32x128xf32>
    %115 = arith.addf %86, %114 : vector<32x128xf32>
    %116 = arith.mulf %115, %5 : vector<32x128xf32>
    %c0_101 = arith.constant 0 : index
    %c8_102 = arith.constant 8 : index
    %117 = vector.load %arg17[%c0_101, %c8_102] : memref<32x144xf32, #tpu.memory_space<vmem>>, vector<32x128xf32>
    tpu.vector_store %arg17[%c0_101, %c8_102], %116 {strides = array<i32>} : memref<32x144xf32, #tpu.memory_space<vmem>>, vector<32x128xf32>,
    %c9_103 = arith.constant 9 : index
    %c0_104 = arith.constant 0 : index
    %c0_105 = arith.constant 0 : index
    %118 = vector.load %arg5[%c9_103, %c0_104, %c0_105] : memref<12x32x32xf32, #tpu.memory_space<vmem>>, vector<1x32x32xf32>
    %119 = vector.shape_cast %118 : vector<1x32x32xf32> to vector<32x32xf32>
    %c0_106 = arith.constant 0 : index
    %c0_107 = arith.constant 0 : index
    %120 = vector.load %arg17[%c0_106, %c0_107] : memref<32x144xf32, #tpu.memory_space<vmem>>, vector<32x128xf32>
    %cst_108 = arith.constant dense<0.000000e+00> : vector<32x128xf32>
    %121 = tpu.matmul %119, %120, %cst_108 {dimension_numbers = #tpu.dot_dimension_numbers<[1], [0], [0], [1], [0, 0, 1, 1], [], []>} : vector<32x32xf32>, vector<32x128xf32>, vector<32x128xf32> -> vector<32x128xf32>
    %c10_109 = arith.constant 10 : index
    %c0_110 = arith.constant 0 : index
    %c0_111 = arith.constant 0 : index
    %122 = vector.load %arg5[%c10_109, %c0_110, %c0_111] : memref<12x32x32xf32, #tpu.memory_space<vmem>>, vector<1x32x32xf32>
    %123 = vector.shape_cast %122 : vector<1x32x32xf32> to vector<32x32xf32>
    %c0_112 = arith.constant 0 : index
    %c8_113 = arith.constant 8 : index
    %124 = vector.load %arg17[%c0_112, %c8_113] : memref<32x144xf32, #tpu.memory_space<vmem>>, vector<32x128xf32>
    %cst_114 = arith.constant dense<0.000000e+00> : vector<32x128xf32>
    %125 = tpu.matmul %123, %124, %cst_114 {dimension_numbers = #tpu.dot_dimension_numbers<[1], [0], [0], [1], [0, 0, 1, 1], [], []>} : vector<32x32xf32>, vector<32x128xf32>, vector<32x128xf32> -> vector<32x128xf32>
    %126 = arith.addf %121, %125 : vector<32x128xf32>
    %c11 = arith.constant 11 : index
    %c0_115 = arith.constant 0 : index
    %c0_116 = arith.constant 0 : index
    %127 = vector.load %arg5[%c11, %c0_115, %c0_116] : memref<12x32x32xf32, #tpu.memory_space<vmem>>, vector<1x32x32xf32>
    %128 = vector.shape_cast %127 : vector<1x32x32xf32> to vector<32x32xf32>
    %c0_117 = arith.constant 0 : index
    %c16 = arith.constant 16 : index
    %129 = vector.load %arg17[%c0_117, %c16] : memref<32x144xf32, #tpu.memory_space<vmem>>, vector<32x128xf32>
    %cst_118 = arith.constant dense<0.000000e+00> : vector<32x128xf32>
    %130 = tpu.matmul %128, %129, %cst_118 {dimension_numbers = #tpu.dot_dimension_numbers<[1], [0], [0], [1], [0, 0, 1, 1], [], []>} : vector<32x32xf32>, vector<32x128xf32>, vector<32x128xf32> -> vector<32x128xf32>
    %131 = arith.addf %126, %130 : vector<32x128xf32>
    %c3_119 = arith.constant 3 : index
    %c0_120 = arith.constant 0 : index
    %c0_121 = arith.constant 0 : index
    %132 = vector.load %arg6[%c3_119, %c0_120, %c0_121] : memref<4x32x1xf32, #tpu.memory_space<vmem>>, vector<1x32x1xf32>
    %133 = vector.shape_cast %132 : vector<1x32x1xf32> to vector<32x1xf32>
    %134 = vector.broadcast %133 : vector<32x1xf32> to vector<32x128xf32>
    %135 = arith.addf %131, %134 : vector<32x128xf32>
    %cst_122 = arith.constant 0.000000e+00 : f32
    %136 = vector.broadcast %cst_122 : f32 to vector<32x128xf32>
    %137 = arith.maximumf %135, %136 : vector<32x128xf32>
    %c3_123 = arith.constant 3 : index
    %c0_124 = arith.constant 0 : index
    %c0_125 = arith.constant 0 : index
    %138 = vector.load %arg7[%c3_123, %c0_124, %c0_125] : memref<4x32x32xf32, #tpu.memory_space<vmem>>, vector<1x32x32xf32>
    %139 = vector.shape_cast %138 : vector<1x32x32xf32> to vector<32x32xf32>
    %cst_126 = arith.constant dense<0.000000e+00> : vector<32x128xf32>
    %140 = tpu.matmul %139, %137, %cst_126 {dimension_numbers = #tpu.dot_dimension_numbers<[1], [0], [0], [1], [0, 0, 1, 1], [], []>} : vector<32x32xf32>, vector<32x128xf32>, vector<32x128xf32> -> vector<32x128xf32>
    %c3_127 = arith.constant 3 : index
    %c0_128 = arith.constant 0 : index
    %c0_129 = arith.constant 0 : index
    %141 = vector.load %arg8[%c3_127, %c0_128, %c0_129] : memref<4x32x1xf32, #tpu.memory_space<vmem>>, vector<1x32x1xf32>
    %142 = vector.shape_cast %141 : vector<1x32x1xf32> to vector<32x1xf32>
    %143 = vector.broadcast %142 : vector<32x1xf32> to vector<32x128xf32>
    %144 = arith.addf %140, %143 : vector<32x128xf32>
    %145 = arith.addf %116, %144 : vector<32x128xf32>
    %146 = arith.mulf %145, %5 : vector<32x128xf32>
    %147 = vector.extract_strided_slice %17 {offsets = [32, 0], sizes = [32, 128], strides = [1, 1]} : vector<64x128xf32> to vector<32x128xf32>
    %c0_130 = arith.constant 0 : index
    %c16_131 = arith.constant 16 : index
    %148 = vector.load %arg18[%c0_130, %c16_131] : memref<32x160xf32, #tpu.memory_space<vmem>>, vector<32x128xf32>
    tpu.vector_store %arg18[%c0_130, %c16_131], %147 {strides = array<i32>} : memref<32x160xf32, #tpu.memory_space<vmem>>, vector<32x128xf32>,
    %c0_132 = arith.constant 0 : index
    %c0_133 = arith.constant 0 : index
    %c0_134 = arith.constant 0 : index
    %149 = vector.load %arg9[%c0_132, %c0_133, %c0_134] : memref<20x32x32xf32, #tpu.memory_space<vmem>>, vector<1x32x32xf32>
    %150 = vector.shape_cast %149 : vector<1x32x32xf32> to vector<32x32xf32>
    %c0_135 = arith.constant 0 : index
    %c14 = arith.constant 14 : index
    %151 = vector.load %arg18[%c0_135, %c14] : memref<32x160xf32, #tpu.memory_space<vmem>>, vector<32x128xf32>
    %cst_136 = arith.constant dense<0.000000e+00> : vector<32x128xf32>
    %152 = tpu.matmul %150, %151, %cst_136 {dimension_numbers = #tpu.dot_dimension_numbers<[1], [0], [0], [1], [0, 0, 1, 1], [], []>} : vector<32x32xf32>, vector<32x128xf32>, vector<32x128xf32> -> vector<32x128xf32>
    %c1_137 = arith.constant 1 : index
    %c0_138 = arith.constant 0 : index
    %c0_139 = arith.constant 0 : index
    %153 = vector.load %arg9[%c1_137, %c0_138, %c0_139] : memref<20x32x32xf32, #tpu.memory_space<vmem>>, vector<1x32x32xf32>
    %154 = vector.shape_cast %153 : vector<1x32x32xf32> to vector<32x32xf32>
    %c0_140 = arith.constant 0 : index
    %c15 = arith.constant 15 : index
    %155 = vector.load %arg18[%c0_140, %c15] : memref<32x160xf32, #tpu.memory_space<vmem>>, vector<32x128xf32>
    %cst_141 = arith.constant dense<0.000000e+00> : vector<32x128xf32>
    %156 = tpu.matmul %154, %155, %cst_141 {dimension_numbers = #tpu.dot_dimension_numbers<[1], [0], [0], [1], [0, 0, 1, 1], [], []>} : vector<32x32xf32>, vector<32x128xf32>, vector<32x128xf32> -> vector<32x128xf32>
    %157 = arith.addf %152, %156 : vector<32x128xf32>
    %c2_142 = arith.constant 2 : index
    %c0_143 = arith.constant 0 : index
    %c0_144 = arith.constant 0 : index
    %158 = vector.load %arg9[%c2_142, %c0_143, %c0_144] : memref<20x32x32xf32, #tpu.memory_space<vmem>>, vector<1x32x32xf32>
    %159 = vector.shape_cast %158 : vector<1x32x32xf32> to vector<32x32xf32>
    %c0_145 = arith.constant 0 : index
    %c16_146 = arith.constant 16 : index
    %160 = vector.load %arg18[%c0_145, %c16_146] : memref<32x160xf32, #tpu.memory_space<vmem>>, vector<32x128xf32>
    %cst_147 = arith.constant dense<0.000000e+00> : vector<32x128xf32>
    %161 = tpu.matmul %159, %160, %cst_147 {dimension_numbers = #tpu.dot_dimension_numbers<[1], [0], [0], [1], [0, 0, 1, 1], [], []>} : vector<32x32xf32>, vector<32x128xf32>, vector<32x128xf32> -> vector<32x128xf32>
    %162 = arith.addf %157, %161 : vector<32x128xf32>
    %c3_148 = arith.constant 3 : index
    %c0_149 = arith.constant 0 : index
    %c0_150 = arith.constant 0 : index
    %163 = vector.load %arg9[%c3_148, %c0_149, %c0_150] : memref<20x32x32xf32, #tpu.memory_space<vmem>>, vector<1x32x32xf32>
    %164 = vector.shape_cast %163 : vector<1x32x32xf32> to vector<32x32xf32>
    %c0_151 = arith.constant 0 : index
    %c17 = arith.constant 17 : index
    %165 = vector.load %arg18[%c0_151, %c17] : memref<32x160xf32, #tpu.memory_space<vmem>>, vector<32x128xf32>
    %cst_152 = arith.constant dense<0.000000e+00> : vector<32x128xf32>
    %166 = tpu.matmul %164, %165, %cst_152 {dimension_numbers = #tpu.dot_dimension_numbers<[1], [0], [0], [1], [0, 0, 1, 1], [], []>} : vector<32x32xf32>, vector<32x128xf32>, vector<32x128xf32> -> vector<32x128xf32>
    %167 = arith.addf %162, %166 : vector<32x128xf32>
    %c4_153 = arith.constant 4 : index
    %c0_154 = arith.constant 0 : index
    %c0_155 = arith.constant 0 : index
    %168 = vector.load %arg9[%c4_153, %c0_154, %c0_155] : memref<20x32x32xf32, #tpu.memory_space<vmem>>, vector<1x32x32xf32>
    %169 = vector.shape_cast %168 : vector<1x32x32xf32> to vector<32x32xf32>
    %c0_156 = arith.constant 0 : index
    %c18 = arith.constant 18 : index
    %170 = vector.load %arg18[%c0_156, %c18] : memref<32x160xf32, #tpu.memory_space<vmem>>, vector<32x128xf32>
    %cst_157 = arith.constant dense<0.000000e+00> : vector<32x128xf32>
    %171 = tpu.matmul %169, %170, %cst_157 {dimension_numbers = #tpu.dot_dimension_numbers<[1], [0], [0], [1], [0, 0, 1, 1], [], []>} : vector<32x32xf32>, vector<32x128xf32>, vector<32x128xf32> -> vector<32x128xf32>
    %172 = arith.addf %167, %171 : vector<32x128xf32>
    %c0_158 = arith.constant 0 : index
    %c0_159 = arith.constant 0 : index
    %c0_160 = arith.constant 0 : index
    %173 = vector.load %arg10[%c0_158, %c0_159, %c0_160] : memref<4x32x1xf32, #tpu.memory_space<vmem>>, vector<1x32x1xf32>
    %174 = vector.shape_cast %173 : vector<1x32x1xf32> to vector<32x1xf32>
    %175 = vector.broadcast %174 : vector<32x1xf32> to vector<32x128xf32>
    %176 = arith.addf %172, %175 : vector<32x128xf32>
    %cst_161 = arith.constant 0.000000e+00 : f32
    %177 = vector.broadcast %cst_161 : f32 to vector<32x128xf32>
    %178 = arith.maximumf %176, %177 : vector<32x128xf32>
    %c0_162 = arith.constant 0 : index
    %c0_163 = arith.constant 0 : index
    %c0_164 = arith.constant 0 : index
    %179 = vector.load %arg11[%c0_162, %c0_163, %c0_164] : memref<4x32x32xf32, #tpu.memory_space<vmem>>, vector<1x32x32xf32>
    %180 = vector.shape_cast %179 : vector<1x32x32xf32> to vector<32x32xf32>
    %cst_165 = arith.constant dense<0.000000e+00> : vector<32x128xf32>
    %181 = tpu.matmul %180, %178, %cst_165 {dimension_numbers = #tpu.dot_dimension_numbers<[1], [0], [0], [1], [0, 0, 1, 1], [], []>} : vector<32x32xf32>, vector<32x128xf32>, vector<32x128xf32> -> vector<32x128xf32>
    %c0_166 = arith.constant 0 : index
    %c0_167 = arith.constant 0 : index
    %c0_168 = arith.constant 0 : index
    %182 = vector.load %arg12[%c0_166, %c0_167, %c0_168] : memref<4x32x1xf32, #tpu.memory_space<vmem>>, vector<1x32x1xf32>
    %183 = vector.shape_cast %182 : vector<1x32x1xf32> to vector<32x1xf32>
    %184 = vector.broadcast %183 : vector<32x1xf32> to vector<32x128xf32>
    %185 = arith.addf %181, %184 : vector<32x128xf32>
    %186 = arith.addf %147, %185 : vector<32x128xf32>
    %187 = arith.mulf %186, %5 : vector<32x128xf32>
    %c0_169 = arith.constant 0 : index
    %c16_170 = arith.constant 16 : index
    %188 = vector.load %arg18[%c0_169, %c16_170] : memref<32x160xf32, #tpu.memory_space<vmem>>, vector<32x128xf32>
    tpu.vector_store %arg18[%c0_169, %c16_170], %187 {strides = array<i32>} : memref<32x160xf32, #tpu.memory_space<vmem>>, vector<32x128xf32>,
    %c5_171 = arith.constant 5 : index
    %c0_172 = arith.constant 0 : index
    %c0_173 = arith.constant 0 : index
    %189 = vector.load %arg9[%c5_171, %c0_172, %c0_173] : memref<20x32x32xf32, #tpu.memory_space<vmem>>, vector<1x32x32xf32>
    %190 = vector.shape_cast %189 : vector<1x32x32xf32> to vector<32x32xf32>
    %c0_174 = arith.constant 0 : index
    %c12_175 = arith.constant 12 : index
    %191 = vector.load %arg18[%c0_174, %c12_175] : memref<32x160xf32, #tpu.memory_space<vmem>>, vector<32x128xf32>
    %cst_176 = arith.constant dense<0.000000e+00> : vector<32x128xf32>
    %192 = tpu.matmul %190, %191, %cst_176 {dimension_numbers = #tpu.dot_dimension_numbers<[1], [0], [0], [1], [0, 0, 1, 1], [], []>} : vector<32x32xf32>, vector<32x128xf32>, vector<32x128xf32> -> vector<32x128xf32>
    %c6_177 = arith.constant 6 : index
    %c0_178 = arith.constant 0 : index
    %c0_179 = arith.constant 0 : index
    %193 = vector.load %arg9[%c6_177, %c0_178, %c0_179] : memref<20x32x32xf32, #tpu.memory_space<vmem>>, vector<1x32x32xf32>
    %194 = vector.shape_cast %193 : vector<1x32x32xf32> to vector<32x32xf32>
    %c0_180 = arith.constant 0 : index
    %c14_181 = arith.constant 14 : index
    %195 = vector.load %arg18[%c0_180, %c14_181] : memref<32x160xf32, #tpu.memory_space<vmem>>, vector<32x128xf32>
    %cst_182 = arith.constant dense<0.000000e+00> : vector<32x128xf32>
    %196 = tpu.matmul %194, %195, %cst_182 {dimension_numbers = #tpu.dot_dimension_numbers<[1], [0], [0], [1], [0, 0, 1, 1], [], []>} : vector<32x32xf32>, vector<32x128xf32>, vector<32x128xf32> -> vector<32x128xf32>
    %197 = arith.addf %192, %196 : vector<32x128xf32>
    %c7_183 = arith.constant 7 : index
    %c0_184 = arith.constant 0 : index
    %c0_185 = arith.constant 0 : index
    %198 = vector.load %arg9[%c7_183, %c0_184, %c0_185] : memref<20x32x32xf32, #tpu.memory_space<vmem>>, vector<1x32x32xf32>
    %199 = vector.shape_cast %198 : vector<1x32x32xf32> to vector<32x32xf32>
    %c0_186 = arith.constant 0 : index
    %c16_187 = arith.constant 16 : index
    %200 = vector.load %arg18[%c0_186, %c16_187] : memref<32x160xf32, #tpu.memory_space<vmem>>, vector<32x128xf32>
    %cst_188 = arith.constant dense<0.000000e+00> : vector<32x128xf32>
    %201 = tpu.matmul %199, %200, %cst_188 {dimension_numbers = #tpu.dot_dimension_numbers<[1], [0], [0], [1], [0, 0, 1, 1], [], []>} : vector<32x32xf32>, vector<32x128xf32>, vector<32x128xf32> -> vector<32x128xf32>
    %202 = arith.addf %197, %201 : vector<32x128xf32>
    %c8_189 = arith.constant 8 : index
    %c0_190 = arith.constant 0 : index
    %c0_191 = arith.constant 0 : index
    %203 = vector.load %arg9[%c8_189, %c0_190, %c0_191] : memref<20x32x32xf32, #tpu.memory_space<vmem>>, vector<1x32x32xf32>
    %204 = vector.shape_cast %203 : vector<1x32x32xf32> to vector<32x32xf32>
    %c0_192 = arith.constant 0 : index
    %c18_193 = arith.constant 18 : index
    %205 = vector.load %arg18[%c0_192, %c18_193] : memref<32x160xf32, #tpu.memory_space<vmem>>, vector<32x128xf32>
    %cst_194 = arith.constant dense<0.000000e+00> : vector<32x128xf32>
    %206 = tpu.matmul %204, %205, %cst_194 {dimension_numbers = #tpu.dot_dimension_numbers<[1], [0], [0], [1], [0, 0, 1, 1], [], []>} : vector<32x32xf32>, vector<32x128xf32>, vector<32x128xf32> -> vector<32x128xf32>
    %207 = arith.addf %202, %206 : vector<32x128xf32>
    %c9_195 = arith.constant 9 : index
    %c0_196 = arith.constant 0 : index
    %c0_197 = arith.constant 0 : index
    %208 = vector.load %arg9[%c9_195, %c0_196, %c0_197] : memref<20x32x32xf32, #tpu.memory_space<vmem>>, vector<1x32x32xf32>
    %209 = vector.shape_cast %208 : vector<1x32x32xf32> to vector<32x32xf32>
    %c0_198 = arith.constant 0 : index
    %c20 = arith.constant 20 : index
    %210 = vector.load %arg18[%c0_198, %c20] : memref<32x160xf32, #tpu.memory_space<vmem>>, vector<32x128xf32>
    %cst_199 = arith.constant dense<0.000000e+00> : vector<32x128xf32>
    %211 = tpu.matmul %209, %210, %cst_199 {dimension_numbers = #tpu.dot_dimension_numbers<[1], [0], [0], [1], [0, 0, 1, 1], [], []>} : vector<32x32xf32>, vector<32x128xf32>, vector<32x128xf32> -> vector<32x128xf32>
    %212 = arith.addf %207, %211 : vector<32x128xf32>
    %c1_200 = arith.constant 1 : index
    %c0_201 = arith.constant 0 : index
    %c0_202 = arith.constant 0 : index
    %213 = vector.load %arg10[%c1_200, %c0_201, %c0_202] : memref<4x32x1xf32, #tpu.memory_space<vmem>>, vector<1x32x1xf32>
    %214 = vector.shape_cast %213 : vector<1x32x1xf32> to vector<32x1xf32>
    %215 = vector.broadcast %214 : vector<32x1xf32> to vector<32x128xf32>
    %216 = arith.addf %212, %215 : vector<32x128xf32>
    %cst_203 = arith.constant 0.000000e+00 : f32
    %217 = vector.broadcast %cst_203 : f32 to vector<32x128xf32>
    %218 = arith.maximumf %216, %217 : vector<32x128xf32>
    %c1_204 = arith.constant 1 : index
    %c0_205 = arith.constant 0 : index
    %c0_206 = arith.constant 0 : index
    %219 = vector.load %arg11[%c1_204, %c0_205, %c0_206] : memref<4x32x32xf32, #tpu.memory_space<vmem>>, vector<1x32x32xf32>
    %220 = vector.shape_cast %219 : vector<1x32x32xf32> to vector<32x32xf32>
    %cst_207 = arith.constant dense<0.000000e+00> : vector<32x128xf32>
    %221 = tpu.matmul %220, %218, %cst_207 {dimension_numbers = #tpu.dot_dimension_numbers<[1], [0], [0], [1], [0, 0, 1, 1], [], []>} : vector<32x32xf32>, vector<32x128xf32>, vector<32x128xf32> -> vector<32x128xf32>
    %c1_208 = arith.constant 1 : index
    %c0_209 = arith.constant 0 : index
    %c0_210 = arith.constant 0 : index
    %222 = vector.load %arg12[%c1_208, %c0_209, %c0_210] : memref<4x32x1xf32, #tpu.memory_space<vmem>>, vector<1x32x1xf32>
    %223 = vector.shape_cast %222 : vector<1x32x1xf32> to vector<32x1xf32>
    %224 = vector.broadcast %223 : vector<32x1xf32> to vector<32x128xf32>
    %225 = arith.addf %221, %224 : vector<32x128xf32>
    %226 = arith.addf %187, %225 : vector<32x128xf32>
    %227 = arith.mulf %226, %5 : vector<32x128xf32>
    %c0_211 = arith.constant 0 : index
    %c16_212 = arith.constant 16 : index
    %228 = vector.load %arg18[%c0_211, %c16_212] : memref<32x160xf32, #tpu.memory_space<vmem>>, vector<32x128xf32>
    tpu.vector_store %arg18[%c0_211, %c16_212], %227 {strides = array<i32>} : memref<32x160xf32, #tpu.memory_space<vmem>>, vector<32x128xf32>,
    %c10_213 = arith.constant 10 : index
    %c0_214 = arith.constant 0 : index
    %c0_215 = arith.constant 0 : index
    %229 = vector.load %arg9[%c10_213, %c0_214, %c0_215] : memref<20x32x32xf32, #tpu.memory_space<vmem>>, vector<1x32x32xf32>
    %230 = vector.shape_cast %229 : vector<1x32x32xf32> to vector<32x32xf32>
    %c0_216 = arith.constant 0 : index
    %c8_217 = arith.constant 8 : index
    %231 = vector.load %arg18[%c0_216, %c8_217] : memref<32x160xf32, #tpu.memory_space<vmem>>, vector<32x128xf32>
    %cst_218 = arith.constant dense<0.000000e+00> : vector<32x128xf32>
    %232 = tpu.matmul %230, %231, %cst_218 {dimension_numbers = #tpu.dot_dimension_numbers<[1], [0], [0], [1], [0, 0, 1, 1], [], []>} : vector<32x32xf32>, vector<32x128xf32>, vector<32x128xf32> -> vector<32x128xf32>
    %c11_219 = arith.constant 11 : index
    %c0_220 = arith.constant 0 : index
    %c0_221 = arith.constant 0 : index
    %233 = vector.load %arg9[%c11_219, %c0_220, %c0_221] : memref<20x32x32xf32, #tpu.memory_space<vmem>>, vector<1x32x32xf32>
    %234 = vector.shape_cast %233 : vector<1x32x32xf32> to vector<32x32xf32>
    %c0_222 = arith.constant 0 : index
    %c12_223 = arith.constant 12 : index
    %235 = vector.load %arg18[%c0_222, %c12_223] : memref<32x160xf32, #tpu.memory_space<vmem>>, vector<32x128xf32>
    %cst_224 = arith.constant dense<0.000000e+00> : vector<32x128xf32>
    %236 = tpu.matmul %234, %235, %cst_224 {dimension_numbers = #tpu.dot_dimension_numbers<[1], [0], [0], [1], [0, 0, 1, 1], [], []>} : vector<32x32xf32>, vector<32x128xf32>, vector<32x128xf32> -> vector<32x128xf32>
    %237 = arith.addf %232, %236 : vector<32x128xf32>
    %c12_225 = arith.constant 12 : index
    %c0_226 = arith.constant 0 : index
    %c0_227 = arith.constant 0 : index
    %238 = vector.load %arg9[%c12_225, %c0_226, %c0_227] : memref<20x32x32xf32, #tpu.memory_space<vmem>>, vector<1x32x32xf32>
    %239 = vector.shape_cast %238 : vector<1x32x32xf32> to vector<32x32xf32>
    %c0_228 = arith.constant 0 : index
    %c16_229 = arith.constant 16 : index
    %240 = vector.load %arg18[%c0_228, %c16_229] : memref<32x160xf32, #tpu.memory_space<vmem>>, vector<32x128xf32>
    %cst_230 = arith.constant dense<0.000000e+00> : vector<32x128xf32>
    %241 = tpu.matmul %239, %240, %cst_230 {dimension_numbers = #tpu.dot_dimension_numbers<[1], [0], [0], [1], [0, 0, 1, 1], [], []>} : vector<32x32xf32>, vector<32x128xf32>, vector<32x128xf32> -> vector<32x128xf32>
    %242 = arith.addf %237, %241 : vector<32x128xf32>
    %c13 = arith.constant 13 : index
    %c0_231 = arith.constant 0 : index
    %c0_232 = arith.constant 0 : index
    %243 = vector.load %arg9[%c13, %c0_231, %c0_232] : memref<20x32x32xf32, #tpu.memory_space<vmem>>, vector<1x32x32xf32>
    %244 = vector.shape_cast %243 : vector<1x32x32xf32> to vector<32x32xf32>
    %c0_233 = arith.constant 0 : index
    %c20_234 = arith.constant 20 : index
    %245 = vector.load %arg18[%c0_233, %c20_234] : memref<32x160xf32, #tpu.memory_space<vmem>>, vector<32x128xf32>
    %cst_235 = arith.constant dense<0.000000e+00> : vector<32x128xf32>
    %246 = tpu.matmul %244, %245, %cst_235 {dimension_numbers = #tpu.dot_dimension_numbers<[1], [0], [0], [1], [0, 0, 1, 1], [], []>} : vector<32x32xf32>, vector<32x128xf32>, vector<32x128xf32> -> vector<32x128xf32>
    %247 = arith.addf %242, %246 : vector<32x128xf32>
    %c14_236 = arith.constant 14 : index
    %c0_237 = arith.constant 0 : index
    %c0_238 = arith.constant 0 : index
    %248 = vector.load %arg9[%c14_236, %c0_237, %c0_238] : memref<20x32x32xf32, #tpu.memory_space<vmem>>, vector<1x32x32xf32>
    %249 = vector.shape_cast %248 : vector<1x32x32xf32> to vector<32x32xf32>
    %c0_239 = arith.constant 0 : index
    %c24 = arith.constant 24 : index
    %250 = vector.load %arg18[%c0_239, %c24] : memref<32x160xf32, #tpu.memory_space<vmem>>, vector<32x128xf32>
    %cst_240 = arith.constant dense<0.000000e+00> : vector<32x128xf32>
    %251 = tpu.matmul %249, %250, %cst_240 {dimension_numbers = #tpu.dot_dimension_numbers<[1], [0], [0], [1], [0, 0, 1, 1], [], []>} : vector<32x32xf32>, vector<32x128xf32>, vector<32x128xf32> -> vector<32x128xf32>
    %252 = arith.addf %247, %251 : vector<32x128xf32>
    %c2_241 = arith.constant 2 : index
    %c0_242 = arith.constant 0 : index
    %c0_243 = arith.constant 0 : index
    %253 = vector.load %arg10[%c2_241, %c0_242, %c0_243] : memref<4x32x1xf32, #tpu.memory_space<vmem>>, vector<1x32x1xf32>
    %254 = vector.shape_cast %253 : vector<1x32x1xf32> to vector<32x1xf32>
    %255 = vector.broadcast %254 : vector<32x1xf32> to vector<32x128xf32>
    %256 = arith.addf %252, %255 : vector<32x128xf32>
    %cst_244 = arith.constant 0.000000e+00 : f32
    %257 = vector.broadcast %cst_244 : f32 to vector<32x128xf32>
    %258 = arith.maximumf %256, %257 : vector<32x128xf32>
    %c2_245 = arith.constant 2 : index
    %c0_246 = arith.constant 0 : index
    %c0_247 = arith.constant 0 : index
    %259 = vector.load %arg11[%c2_245, %c0_246, %c0_247] : memref<4x32x32xf32, #tpu.memory_space<vmem>>, vector<1x32x32xf32>
    %260 = vector.shape_cast %259 : vector<1x32x32xf32> to vector<32x32xf32>
    %cst_248 = arith.constant dense<0.000000e+00> : vector<32x128xf32>
    %261 = tpu.matmul %260, %258, %cst_248 {dimension_numbers = #tpu.dot_dimension_numbers<[1], [0], [0], [1], [0, 0, 1, 1], [], []>} : vector<32x32xf32>, vector<32x128xf32>, vector<32x128xf32> -> vector<32x128xf32>
    %c2_249 = arith.constant 2 : index
    %c0_250 = arith.constant 0 : index
    %c0_251 = arith.constant 0 : index
    %262 = vector.load %arg12[%c2_249, %c0_250, %c0_251] : memref<4x32x1xf32, #tpu.memory_space<vmem>>, vector<1x32x1xf32>
    %263 = vector.shape_cast %262 : vector<1x32x1xf32> to vector<32x1xf32>
    %264 = vector.broadcast %263 : vector<32x1xf32> to vector<32x128xf32>
    %265 = arith.addf %261, %264 : vector<32x128xf32>
    %266 = arith.addf %227, %265 : vector<32x128xf32>
    %267 = arith.mulf %266, %5 : vector<32x128xf32>
    %c0_252 = arith.constant 0 : index
    %c16_253 = arith.constant 16 : index
    %268 = vector.load %arg18[%c0_252, %c16_253] : memref<32x160xf32, #tpu.memory_space<vmem>>, vector<32x128xf32>
    tpu.vector_store %arg18[%c0_252, %c16_253], %267 {strides = array<i32>} : memref<32x160xf32, #tpu.memory_space<vmem>>, vector<32x128xf32>,
    %c15_254 = arith.constant 15 : index
    %c0_255 = arith.constant 0 : index
    %c0_256 = arith.constant 0 : index
    %269 = vector.load %arg9[%c15_254, %c0_255, %c0_256] : memref<20x32x32xf32, #tpu.memory_space<vmem>>, vector<1x32x32xf32>
    %270 = vector.shape_cast %269 : vector<1x32x32xf32> to vector<32x32xf32>
    %c0_257 = arith.constant 0 : index
    %c0_258 = arith.constant 0 : index
    %271 = vector.load %arg18[%c0_257, %c0_258] : memref<32x160xf32, #tpu.memory_space<vmem>>, vector<32x128xf32>
    %cst_259 = arith.constant dense<0.000000e+00> : vector<32x128xf32>
    %272 = tpu.matmul %270, %271, %cst_259 {dimension_numbers = #tpu.dot_dimension_numbers<[1], [0], [0], [1], [0, 0, 1, 1], [], []>} : vector<32x32xf32>, vector<32x128xf32>, vector<32x128xf32> -> vector<32x128xf32>
    %c16_260 = arith.constant 16 : index
    %c0_261 = arith.constant 0 : index
    %c0_262 = arith.constant 0 : index
    %273 = vector.load %arg9[%c16_260, %c0_261, %c0_262] : memref<20x32x32xf32, #tpu.memory_space<vmem>>, vector<1x32x32xf32>
    %274 = vector.shape_cast %273 : vector<1x32x32xf32> to vector<32x32xf32>
    %c0_263 = arith.constant 0 : index
    %c8_264 = arith.constant 8 : index
    %275 = vector.load %arg18[%c0_263, %c8_264] : memref<32x160xf32, #tpu.memory_space<vmem>>, vector<32x128xf32>
    %cst_265 = arith.constant dense<0.000000e+00> : vector<32x128xf32>
    %276 = tpu.matmul %274, %275, %cst_265 {dimension_numbers = #tpu.dot_dimension_numbers<[1], [0], [0], [1], [0, 0, 1, 1], [], []>} : vector<32x32xf32>, vector<32x128xf32>, vector<32x128xf32> -> vector<32x128xf32>
    %277 = arith.addf %272, %276 : vector<32x128xf32>
    %c17_266 = arith.constant 17 : index
    %c0_267 = arith.constant 0 : index
    %c0_268 = arith.constant 0 : index
    %278 = vector.load %arg9[%c17_266, %c0_267, %c0_268] : memref<20x32x32xf32, #tpu.memory_space<vmem>>, vector<1x32x32xf32>
    %279 = vector.shape_cast %278 : vector<1x32x32xf32> to vector<32x32xf32>
    %c0_269 = arith.constant 0 : index
    %c16_270 = arith.constant 16 : index
    %280 = vector.load %arg18[%c0_269, %c16_270] : memref<32x160xf32, #tpu.memory_space<vmem>>, vector<32x128xf32>
    %cst_271 = arith.constant dense<0.000000e+00> : vector<32x128xf32>
    %281 = tpu.matmul %279, %280, %cst_271 {dimension_numbers = #tpu.dot_dimension_numbers<[1], [0], [0], [1], [0, 0, 1, 1], [], []>} : vector<32x32xf32>, vector<32x128xf32>, vector<32x128xf32> -> vector<32x128xf32>
    %282 = arith.addf %277, %281 : vector<32x128xf32>
    %c18_272 = arith.constant 18 : index
    %c0_273 = arith.constant 0 : index
    %c0_274 = arith.constant 0 : index
    %283 = vector.load %arg9[%c18_272, %c0_273, %c0_274] : memref<20x32x32xf32, #tpu.memory_space<vmem>>, vector<1x32x32xf32>
    %284 = vector.shape_cast %283 : vector<1x32x32xf32> to vector<32x32xf32>
    %c0_275 = arith.constant 0 : index
    %c24_276 = arith.constant 24 : index
    %285 = vector.load %arg18[%c0_275, %c24_276] : memref<32x160xf32, #tpu.memory_space<vmem>>, vector<32x128xf32>
    %cst_277 = arith.constant dense<0.000000e+00> : vector<32x128xf32>
    %286 = tpu.matmul %284, %285, %cst_277 {dimension_numbers = #tpu.dot_dimension_numbers<[1], [0], [0], [1], [0, 0, 1, 1], [], []>} : vector<32x32xf32>, vector<32x128xf32>, vector<32x128xf32> -> vector<32x128xf32>
    %287 = arith.addf %282, %286 : vector<32x128xf32>
    %c19 = arith.constant 19 : index
    %c0_278 = arith.constant 0 : index
    %c0_279 = arith.constant 0 : index
    %288 = vector.load %arg9[%c19, %c0_278, %c0_279] : memref<20x32x32xf32, #tpu.memory_space<vmem>>, vector<1x32x32xf32>
    %289 = vector.shape_cast %288 : vector<1x32x32xf32> to vector<32x32xf32>
    %c0_280 = arith.constant 0 : index
    %c32 = arith.constant 32 : index
    %290 = vector.load %arg18[%c0_280, %c32] : memref<32x160xf32, #tpu.memory_space<vmem>>, vector<32x128xf32>
    %cst_281 = arith.constant dense<0.000000e+00> : vector<32x128xf32>
    %291 = tpu.matmul %289, %290, %cst_281 {dimension_numbers = #tpu.dot_dimension_numbers<[1], [0], [0], [1], [0, 0, 1, 1], [], []>} : vector<32x32xf32>, vector<32x128xf32>, vector<32x128xf32> -> vector<32x128xf32>
    %292 = arith.addf %287, %291 : vector<32x128xf32>
    %c3_282 = arith.constant 3 : index
    %c0_283 = arith.constant 0 : index
    %c0_284 = arith.constant 0 : index
    %293 = vector.load %arg10[%c3_282, %c0_283, %c0_284] : memref<4x32x1xf32, #tpu.memory_space<vmem>>, vector<1x32x1xf32>
    %294 = vector.shape_cast %293 : vector<1x32x1xf32> to vector<32x1xf32>
    %295 = vector.broadcast %294 : vector<32x1xf32> to vector<32x128xf32>
    %296 = arith.addf %292, %295 : vector<32x128xf32>
    %cst_285 = arith.constant 0.000000e+00 : f32
    %297 = vector.broadcast %cst_285 : f32 to vector<32x128xf32>
    %298 = arith.maximumf %296, %297 : vector<32x128xf32>
    %c3_286 = arith.constant 3 : index
    %c0_287 = arith.constant 0 : index
    %c0_288 = arith.constant 0 : index
    %299 = vector.load %arg11[%c3_286, %c0_287, %c0_288] : memref<4x32x32xf32, #tpu.memory_space<vmem>>, vector<1x32x32xf32>
    %300 = vector.shape_cast %299 : vector<1x32x32xf32> to vector<32x32xf32>
    %cst_289 = arith.constant dense<0.000000e+00> : vector<32x128xf32>
    %301 = tpu.matmul %300, %298, %cst_289 {dimension_numbers = #tpu.dot_dimension_numbers<[1], [0], [0], [1], [0, 0, 1, 1], [], []>} : vector<32x32xf32>, vector<32x128xf32>, vector<32x128xf32> -> vector<32x128xf32>
    %c3_290 = arith.constant 3 : index
    %c0_291 = arith.constant 0 : index
    %c0_292 = arith.constant 0 : index
    %302 = vector.load %arg12[%c3_290, %c0_291, %c0_292] : memref<4x32x1xf32, #tpu.memory_space<vmem>>, vector<1x32x1xf32>
    %303 = vector.shape_cast %302 : vector<1x32x1xf32> to vector<32x1xf32>
    %304 = vector.broadcast %303 : vector<32x1xf32> to vector<32x128xf32>
    %305 = arith.addf %301, %304 : vector<32x128xf32>
    %306 = arith.addf %267, %305 : vector<32x128xf32>
    %307 = arith.mulf %306, %5 : vector<32x128xf32>
    %308 = tpu.concatenate %146, %307 in 0 : vector<32x128xf32>, vector<32x128xf32> -> vector<64x128xf32>
    %c0_293 = arith.constant 0 : index
    %c0_294 = arith.constant 0 : index
    %309 = vector.load %arg13[%c0_293, %c0_294] : memref<8x64xf32, #tpu.memory_space<vmem>>, vector<8x64xf32>
    %cst_295 = arith.constant dense<0.000000e+00> : vector<8x128xf32>
    %310 = tpu.matmul %309, %308, %cst_295 {dimension_numbers = #tpu.dot_dimension_numbers<[1], [0], [0], [1], [0, 0, 1, 1], [], []>} : vector<8x64xf32>, vector<64x128xf32>, vector<8x128xf32> -> vector<8x128xf32>
    %c0_296 = arith.constant 0 : index
    %c0_297 = arith.constant 0 : index
    %311 = vector.load %arg14[%c0_296, %c0_297] : memref<8x1xf32, #tpu.memory_space<vmem>>, vector<8x1xf32>
    %312 = vector.broadcast %311 : vector<8x1xf32> to vector<8x128xf32>
    %313 = arith.addf %310, %312 : vector<8x128xf32>
    %314 = vector.broadcast %3 : vector<1x128xf32> to vector<8x128xf32>
    %315 = arith.mulf %313, %314 : vector<8x128xf32>
    %316 = arith.addf %146, %307 : vector<32x128xf32>
    %c0_298 = arith.constant 0 : index
    %c0_299 = arith.constant 0 : index
    %c0_300 = arith.constant 0 : index
    %317 = vector.load %arg15[%c0_298, %c0_299, %c0_300] : memref<1x32x128xf32, #tpu.memory_space<vmem>>, vector<1x32x128xf32>
    %318 = vector.shape_cast %317 : vector<1x32x128xf32> to vector<32x128xf32>
    %319 = vector.shape_cast %316 : vector<32x128xf32> to vector<1x32x128xf32>
    tpu.vector_store %arg15[%c0_298, %c0_299, %c0_300], %319 {strides = array<i32>} : memref<1x32x128xf32, #tpu.memory_space<vmem>>, vector<1x32x128xf32>,
    %c0_301 = arith.constant 0 : index
    %c0_302 = arith.constant 0 : index
    %c0_303 = arith.constant 0 : index
    %320 = vector.load %arg16[%c0_301, %c0_302, %c0_303] : memref<1x8x128xf32, #tpu.memory_space<vmem>>, vector<1x8x128xf32>
    %321 = vector.shape_cast %320 : vector<1x8x128xf32> to vector<8x128xf32>
    %322 = vector.shape_cast %315 : vector<8x128xf32> to vector<1x8x128xf32>
    tpu.vector_store %arg16[%c0_301, %c0_302, %c0_303], %322 {strides = array<i32>} : memref<1x8x128xf32, #tpu.memory_space<vmem>>, vector<1x8x128xf32>,
    return
  }
  func.func @transform_0(%arg0: i32) -> (i32, i32, i32) {
    %c0_i32 = arith.constant 0 : i32
    %c0_i32_0 = arith.constant 0 : i32
    %c0_i32_1 = arith.constant 0 : i32
    return %arg0, %c0_i32, %c0_i32_0 : i32, i32, i32
  }
  func.func @transform_1(%arg0: i32) -> (i32, i32, i32) {
    %c0_i32 = arith.constant 0 : i32
    %c0_i32_0 = arith.constant 0 : i32
    %c0_i32_1 = arith.constant 0 : i32
    return %arg0, %c0_i32, %c0_i32_0 : i32, i32, i32
  }
  func.func @transform_2(%arg0: i32) -> (i32, i32) {
    %c0_i32 = arith.constant 0 : i32
    %c0_i32_0 = arith.constant 0 : i32
    %c0_i32_1 = arith.constant 0 : i32
    return %c0_i32, %c0_i32_0 : i32, i32
  }
  func.func @transform_3(%arg0: i32) -> (i32, i32) {
    %c0_i32 = arith.constant 0 : i32
    %c0_i32_0 = arith.constant 0 : i32
    %c0_i32_1 = arith.constant 0 : i32
    return %c0_i32, %c0_i32_0 : i32, i32
  }
  func.func @transform_4(%arg0: i32) -> (i32, i32, i32) {
    %c0_i32 = arith.constant 0 : i32
    %c0_i32_0 = arith.constant 0 : i32
    %c0_i32_1 = arith.constant 0 : i32
    %c0_i32_2 = arith.constant 0 : i32
    return %c0_i32, %c0_i32_0, %c0_i32_1 : i32, i32, i32
  }
  func.func @transform_5(%arg0: i32) -> (i32, i32, i32) {
    %c0_i32 = arith.constant 0 : i32
    %c0_i32_0 = arith.constant 0 : i32
    %c0_i32_1 = arith.constant 0 : i32
    %c0_i32_2 = arith.constant 0 : i32
    return %c0_i32, %c0_i32_0, %c0_i32_1 : i32, i32, i32
  }
  func.func @transform_6(%arg0: i32) -> (i32, i32, i32) {
    %c0_i32 = arith.constant 0 : i32
    %c0_i32_0 = arith.constant 0 : i32
    %c0_i32_1 = arith.constant 0 : i32
    %c0_i32_2 = arith.constant 0 : i32
    return %c0_i32, %c0_i32_0, %c0_i32_1 : i32, i32, i32
  }
  func.func @transform_7(%arg0: i32) -> (i32, i32, i32) {
    %c0_i32 = arith.constant 0 : i32
    %c0_i32_0 = arith.constant 0 : i32
    %c0_i32_1 = arith.constant 0 : i32
    %c0_i32_2 = arith.constant 0 : i32
    return %c0_i32, %c0_i32_0, %c0_i32_1 : i32, i32, i32
  }
  func.func @transform_8(%arg0: i32) -> (i32, i32, i32) {
    %c0_i32 = arith.constant 0 : i32
    %c0_i32_0 = arith.constant 0 : i32
    %c0_i32_1 = arith.constant 0 : i32
    %c0_i32_2 = arith.constant 0 : i32
    return %c0_i32, %c0_i32_0, %c0_i32_1 : i32, i32, i32
  }
  func.func @transform_9(%arg0: i32) -> (i32, i32, i32) {
    %c0_i32 = arith.constant 0 : i32
    %c0_i32_0 = arith.constant 0 : i32
    %c0_i32_1 = arith.constant 0 : i32
    %c0_i32_2 = arith.constant 0 : i32
    return %c0_i32, %c0_i32_0, %c0_i32_1 : i32, i32, i32
  }
  func.func @transform_10(%arg0: i32) -> (i32, i32, i32) {
    %c0_i32 = arith.constant 0 : i32
    %c0_i32_0 = arith.constant 0 : i32
    %c0_i32_1 = arith.constant 0 : i32
    %c0_i32_2 = arith.constant 0 : i32
    return %c0_i32, %c0_i32_0, %c0_i32_1 : i32, i32, i32
  }
  func.func @transform_11(%arg0: i32) -> (i32, i32, i32) {
    %c0_i32 = arith.constant 0 : i32
    %c0_i32_0 = arith.constant 0 : i32
    %c0_i32_1 = arith.constant 0 : i32
    %c0_i32_2 = arith.constant 0 : i32
    return %c0_i32, %c0_i32_0, %c0_i32_1 : i32, i32, i32
  }
  func.func @transform_12(%arg0: i32) -> (i32, i32) {
    %c0_i32 = arith.constant 0 : i32
    %c0_i32_0 = arith.constant 0 : i32
    %c0_i32_1 = arith.constant 0 : i32
    return %c0_i32, %c0_i32_0 : i32, i32
  }
  func.func @transform_13(%arg0: i32) -> (i32, i32) {
    %c0_i32 = arith.constant 0 : i32
    %c0_i32_0 = arith.constant 0 : i32
    %c0_i32_1 = arith.constant 0 : i32
    return %c0_i32, %c0_i32_0 : i32, i32
  }
  func.func @transform_14(%arg0: i32) -> (i32, i32, i32) {
    %c0_i32 = arith.constant 0 : i32
    %c0_i32_0 = arith.constant 0 : i32
    %c0_i32_1 = arith.constant 0 : i32
    return %arg0, %c0_i32, %c0_i32_0 : i32, i32, i32
  }
  func.func @transform_15(%arg0: i32) -> (i32, i32, i32) {
    %c0_i32 = arith.constant 0 : i32
    %c0_i32_0 = arith.constant 0 : i32
    %c0_i32_1 = arith.constant 0 : i32
    return %arg0, %c0_i32, %c0_i32_0 : i32, i32, i32
  }
}

</mosaic_0001>

<llo_original>
// kernel: tower_forward.1
$region0: #{tower_forward.1}
  #allocation0 [shape = 'u32[]', space=smem, size = 0x4, offset = 0x4, fixed_abs, tag = 'smem constant byte address 0x4 - core index']
  #allocation1 [shape = 'u32[72,128]{1,0:T(1,128)}', space=vmem, size = 0x9000, scoped, tag = 'internal scratch']
  #allocation2 [shape = 'f32[32,144]{1,0:T(8,128)}', space=vmem, size = 0x8000, scoped, tag = 'scratch operand']
  #allocation3 [shape = 'f32[32,160]{1,0:T(8,128)}', space=vmem, size = 0x8000, scoped, tag = 'scratch operand']
  %s0 = inlined_call_operand.vmem [shape: f32[2,16,128], index: 0, kind: input, shape index: {}]
  %s1 = inlined_call_operand.vmem [shape: f32[2,1,128], index: 1, kind: input, shape index: {}]
  %s2 = inlined_call_operand.vmem [shape: f32[64,16], index: 2, kind: input, shape index: {}]
  %s3 = inlined_call_operand.vmem [shape: f32[64,1], index: 3, kind: input, shape index: {}]
  %s4 = inlined_call_operand.hbm [shape: f32[12,32,32], index: 4, kind: input, shape index: {}]
  %s5 = inlined_call_operand.vmem [shape: f32[4,32,1], index: 5, kind: input, shape index: {}]
  %s6 = inlined_call_operand.vmem [shape: f32[4,32,32], index: 6, kind: input, shape index: {}]
  %s7 = inlined_call_operand.vmem [shape: f32[4,32,1], index: 7, kind: input, shape index: {}]
  %s8 = inlined_call_operand.hbm [shape: f32[20,32,32], index: 8, kind: input, shape index: {}]
  %s9 = inlined_call_operand.vmem [shape: f32[4,32,1], index: 9, kind: input, shape index: {}]
  %s10 = inlined_call_operand.vmem [shape: f32[4,32,32], index: 10, kind: input, shape index: {}]
  %s11 = inlined_call_operand.vmem [shape: f32[4,32,1], index: 11, kind: input, shape index: {}]
  %s12 = inlined_call_operand.vmem [shape: f32[8,64], index: 12, kind: input, shape index: {}]
  %s13 = inlined_call_operand.vmem [shape: f32[8,1], index: 13, kind: input, shape index: {}]
  %s14 = inlined_call_operand.hbm [shape: f32[2,32,128], index: 14, kind: output, shape index: {0}]
  %s15 = inlined_call_operand.hbm [shape: f32[2,8,128], index: 15, kind: output, shape index: {1}]
  %16 = xla_tuple %s14, %s15
  %s17 = sld [smem:[#allocation0]]
  $region105: #{tower_forward.1} parent=0
    _
  %s19 = ssub.s32 1, %s17
  %s20 = scalar_select 0, %s19, %s17
  $region1: #{tower_forward.1} parent=0
    #allocation4 [shape = 'u8[196608]{0}', space=vmem, size = 0x30000, scoped, tag = 'input window, operand 4, single buffered']
    #allocation5 [shape = 's32[2]{0}', space=sflag, size = 0x8, scoped, tag = 'scoped memory for tower_forward.1']
    #allocation6 [shape = 's32[2]{0}', space=sflag, size = 0x8, scoped, tag = 'scoped memory for tower_forward.1']
    #allocation7 [shape = 'u8[327680]{0}', space=vmem, size = 0x50000, scoped, tag = 'input window, operand 8, single buffered']
    #allocation8 [shape = 's32[1]{0}', space=sflag, size = 0x4, scoped, tag = 'scoped memory for tower_forward.1']
    #allocation9 [shape = 'u8[32768]{0}', space=vmem, size = 0x8000, scoped, tag = 'output window, operand 0']
    #allocation10 [shape = 'u8[8192]{0}', space=vmem, size = 0x2000, scoped, tag = 'output window, operand 1']
    #allocation11 [shape = 's32[2]{0}', space=sflag, size = 0x8, scoped, tag = 'scoped memory for tower_forward.1']
    %21 = vsyncpa [#allocation5], 0
    %22 = vsyncpa [#allocation8], 0
    %23 = vsyncpa [#allocation6], 0
    %s24 = scalar_lea.sflag [#allocation6], 1
    %25 = vsyncpa %s24, 0
    %26 = vsyncpa [#allocation11], 0
    %s27 = scalar_lea.sflag [#allocation11], 1
    %28 = vsyncpa %s27, 0
    loop: start=0, step=1, limit=4
    $region2: #{tower_forward.1} parent=1 // loop_pre_header
      _
    $region3: #{tower_forward.1} parent=1 // loop_header
      %s30 = sphi 0, %s34
      %p31 = scmp.ge.s32.totalorder %s30, 4
      %s40 = sphi 0, %s42
      %s43 = sphi 0, %s40
      %s44 = sphi 0, %s43
      %s60 = sphi 0, %s44
      %s66 = sphi 0, %s68
      %s69 = sphi 0, %s66
      %s70 = sphi 0, %s69
      %s86 = sphi 0, %s70
      %s90 = sphi 0, %s90
      %s92 = sphi 0, %s90
      %s93 = sphi 0, %s92
      %s107 = sphi 0, %s93
      %s111 = sphi 0, %s111
      %s113 = sphi 0, %s111
      %s114 = sphi 0, %s113
      %s128 = sphi 0, %s114
      %s132 = sphi 0, %s132
      %s134 = sphi 0, %s132
      %s135 = sphi 0, %s134
      %s149 = sphi 0, %s135
      %s153 = sphi 0, %s153
      %s155 = sphi 0, %s153
      %s156 = sphi 0, %s155
      %s170 = sphi 0, %s156
      %s174 = sphi 0, %s174
      %s176 = sphi 0, %s174
      %s177 = sphi 0, %s176
      %s191 = sphi 0, %s177
      %s195 = sphi 0, %s195
      %s197 = sphi 0, %s195
      %s198 = sphi 0, %s197
      %s212 = sphi 0, %s198
      %s216 = sphi 0, %s216
      %s218 = sphi 0, %s216
      %s219 = sphi 0, %s218
      %s233 = sphi 0, %s219
      %s237 = sphi 0, %s237
      %s239 = sphi 0, %s237
      %s240 = sphi 0, %s239
      %s254 = sphi 0, %s240
      %s258 = sphi 0, %s258
      %s260 = sphi 0, %s258
      %s261 = sphi 0, %s260
      %s275 = sphi 0, %s261
      %s279 = sphi 0, %s279
      %s281 = sphi 0, %s279
      %s282 = sphi 0, %s281
      %s296 = sphi 0, %s282
      %s300 = sphi 0, %s300
      %s302 = sphi 0, %s300
      %s303 = sphi 0, %s302
      %s317 = sphi 0, %s303
      %s321 = sphi 0, %s321
      %s323 = sphi 0, %s321
      %s324 = sphi 0, %s323
      %s338 = sphi 0, %s324
      %s344 = sphi 0, %s346
      %s347 = sphi 0, %s344
      %s348 = sphi 0, %s347
      %s364 = sphi 0, %s348
      %s370 = sphi 0, %s372
      %s373 = sphi 0, %s370
      %s374 = sphi 0, %s373
      %s390 = sphi 0, %s374
    $region4: #{tower_forward.1} parent=1 // loop_header_branch
      %33 = sbr.rel (%p31) target = $region8
    $region5: #{tower_forward.1} parent=1 // loop_body
      %s35 = ssub.s32 %s30, 1
      %s36 = ssub.s32 %s30, 2
      %s37 = sadd.s32 %s30, 1
      %s38 = ssub.s32 %s30, %s37
      %p39 = scmp.eq.s32.totalorder %s38, 0
      %s41 = sadd.s32 %s40, 1
      %s42 = scalar_select %p39, %s40, %s41
      %p45 = pneg %p39
      %p46 = scmp.eq.s32.totalorder %s30, 1
      %p47 = por %p45, %p46
      %p48 = scmp.ne.s32.totalorder %s40, %s43
      %p49 = scmp.eq.s32.totalorder %s30, 0
      %p50 = por %p48, %p49
      %p51 = scmp.ne.s32.totalorder %s40, %s43
      %p52 = scmp.eq.s32.totalorder %s35, 1
      %p53 = por %p51, %p52
      %p54 = scmp.ne.s32.totalorder %s43, %s44
      %p55 = scmp.eq.s32.totalorder %s35, 0
      %p56 = por %p54, %p55
      %p57 = scmp.ne.s32.totalorder %s43, %s44
      %p58 = scmp.eq.s32.totalorder %s36, 1
      %p59 = por %p57, %p58
      %p61 = scmp.ne.s32.totalorder %s44, %s60
      %p62 = scmp.eq.s32.totalorder %s36, 0
      %p63 = por %p61, %p62
      %s64 = ssub.s32 %s30, %s37
      %p65 = scmp.eq.s32.totalorder %s64, 0
      %s67 = sadd.s32 %s66, 1
      %s68 = scalar_select %p65, %s66, %s67
      %p71 = pneg %p65
      %p72 = scmp.eq.s32.totalorder %s30, 1
      %p73 = por %p71, %p72
      %p74 = scmp.ne.s32.totalorder %s66, %s69
      %p75 = scmp.eq.s32.totalorder %s30, 0
      %p76 = por %p74, %p75
      %p77 = scmp.ne.s32.totalorder %s66, %s69
      %p78 = scmp.eq.s32.totalorder %s35, 1
      %p79 = por %p77, %p78
      %p80 = scmp.ne.s32.totalorder %s69, %s70
      %p81 = scmp.eq.s32.totalorder %s35, 0
      %p82 = por %p80, %p81
      %p83 = scmp.ne.s32.totalorder %s69, %s70
      %p84 = scmp.eq.s32.totalorder %s36, 1
      %p85 = por %p83, %p84
      %p87 = scmp.ne.s32.totalorder %s70, %s86
      %p88 = scmp.eq.s32.totalorder %s36, 0
      %p89 = por %p87, %p88
      %s91 = sadd.s32 %s90, 1
      %p94 = scmp.eq.s32.totalorder %s30, 1
      %p95 = scmp.ne.s32.totalorder %s90, %s92
      %p96 = scmp.eq.s32.totalorder %s30, 0
      %p97 = por %p95, %p96
      %p98 = scmp.ne.s32.totalorder %s90, %s92
      %p99 = scmp.eq.s32.totalorder %s35, 1
      %p100 = por %p98, %p99
      %p101 = scmp.ne.s32.totalorder %s92, %s93
      %p102 = scmp.eq.s32.totalorder %s35, 0
      %p103 = por %p101, %p102
      %p104 = scmp.ne.s32.totalorder %s92, %s93
      %p105 = scmp.eq.s32.totalorder %s36, 1
      %p106 = por %p104, %p105
      %p108 = scmp.ne.s32.totalorder %s93, %s107
      %p109 = scmp.eq.s32.totalorder %s36, 0
      %p110 = por %p108, %p109
      %s112 = sadd.s32 %s111, 1
      %p115 = scmp.eq.s32.totalorder %s30, 1
      %p116 = scmp.ne.s32.totalorder %s111, %s113
      %p117 = scmp.eq.s32.totalorder %s30, 0
      %p118 = por %p116, %p117
      %p119 = scmp.ne.s32.totalorder %s111, %s113
      %p120 = scmp.eq.s32.totalorder %s35, 1
      %p121 = por %p119, %p120
      %p122 = scmp.ne.s32.totalorder %s113, %s114
      %p123 = scmp.eq.s32.totalorder %s35, 0
      %p124 = por %p122, %p123
      %p125 = scmp.ne.s32.totalorder %s113, %s114
      %p126 = scmp.eq.s32.totalorder %s36, 1
      %p127 = por %p125, %p126
      %p129 = scmp.ne.s32.totalorder %s114, %s128
      %p130 = scmp.eq.s32.totalorder %s36, 0
      %p131 = por %p129, %p130
      %s133 = sadd.s32 %s132, 1
      %p136 = scmp.eq.s32.totalorder %s30, 1
      %p137 = scmp.ne.s32.totalorder %s132, %s134
      %p138 = scmp.eq.s32.totalorder %s30, 0
      %p139 = por %p137, %p138
      %p140 = scmp.ne.s32.totalorder %s132, %s134
      %p141 = scmp.eq.s32.totalorder %s35, 1
      %p142 = por %p140, %p141
      %p143 = scmp.ne.s32.totalorder %s134, %s135
      %p144 = scmp.eq.s32.totalorder %s35, 0
      %p145 = por %p143, %p144
      %p146 = scmp.ne.s32.totalorder %s134, %s135
      %p147 = scmp.eq.s32.totalorder %s36, 1
      %p148 = por %p146, %p147
      %p150 = scmp.ne.s32.totalorder %s135, %s149
      %p151 = scmp.eq.s32.totalorder %s36, 0
      %p152 = por %p150, %p151
      %s154 = sadd.s32 %s153, 1
      %p157 = scmp.eq.s32.totalorder %s30, 1
      %p158 = scmp.ne.s32.totalorder %s153, %s155
      %p159 = scmp.eq.s32.totalorder %s30, 0
      %p160 = por %p158, %p159
      %p161 = scmp.ne.s32.totalorder %s153, %s155
      %p162 = scmp.eq.s32.totalorder %s35, 1
      %p163 = por %p161, %p162
      %p164 = scmp.ne.s32.totalorder %s155, %s156
      %p165 = scmp.eq.s32.totalorder %s35, 0
      %p166 = por %p164, %p165
      %p167 = scmp.ne.s32.totalorder %s155, %s156
      %p168 = scmp.eq.s32.totalorder %s36, 1
      %p169 = por %p167, %p168
      %p171 = scmp.ne.s32.totalorder %s156, %s170
      %p172 = scmp.eq.s32.totalorder %s36, 0
      %p173 = por %p171, %p172
      %s175 = sadd.s32 %s174, 1
      %p178 = scmp.eq.s32.totalorder %s30, 1
      %p179 = scmp.ne.s32.totalorder %s174, %s176
      %p180 = scmp.eq.s32.totalorder %s30, 0
      %p181 = por %p179, %p180
      %p182 = scmp.ne.s32.totalorder %s174, %s176
      %p183 = scmp.eq.s32.totalorder %s35, 1
      %p184 = por %p182, %p183
      %p185 = scmp.ne.s32.totalorder %s176, %s177
      %p186 = scmp.eq.s32.totalorder %s35, 0
      %p187 = por %p185, %p186
      %p188 = scmp.ne.s32.totalorder %s176, %s177
      %p189 = scmp.eq.s32.totalorder %s36, 1
      %p190 = por %p188, %p189
      %p192 = scmp.ne.s32.totalorder %s177, %s191
      %p193 = scmp.eq.s32.totalorder %s36, 0
      %p194 = por %p192, %p193
      %s196 = sadd.s32 %s195, 1
      %p199 = scmp.eq.s32.totalorder %s30, 1
      %p200 = scmp.ne.s32.totalorder %s195, %s197
      %p201 = scmp.eq.s32.totalorder %s30, 0
      %p202 = por %p200, %p201
      %p203 = scmp.ne.s32.totalorder %s195, %s197
      %p204 = scmp.eq.s32.totalorder %s35, 1
      %p205 = por %p203, %p204
      %p206 = scmp.ne.s32.totalorder %s197, %s198
      %p207 = scmp.eq.s32.totalorder %s35, 0
      %p208 = por %p206, %p207
      %p209 = scmp.ne.s32.totalorder %s197, %s198
      %p210 = scmp.eq.s32.totalorder %s36, 1
      %p211 = por %p209, %p210
      %p213 = scmp.ne.s32.totalorder %s198, %s212
      %p214 = scmp.eq.s32.totalorder %s36, 0
      %p215 = por %p213, %p214
      %s217 = sadd.s32 %s216, 1
      %p220 = scmp.eq.s32.totalorder %s30, 1
      %p221 = scmp.ne.s32.totalorder %s216, %s218
      %p222 = scmp.eq.s32.totalorder %s30, 0
      %p223 = por %p221, %p222
      %p224 = scmp.ne.s32.totalorder %s216, %s218
      %p225 = scmp.eq.s32.totalorder %s35, 1
      %p226 = por %p224, %p225
      %p227 = scmp.ne.s32.totalorder %s218, %s219
      %p228 = scmp.eq.s32.totalorder %s35, 0
      %p229 = por %p227, %p228
      %p230 = scmp.ne.s32.totalorder %s218, %s219
      %p231 = scmp.eq.s32.totalorder %s36, 1
      %p232 = por %p230, %p231
      %p234 = scmp.ne.s32.totalorder %s219, %s233
      %p235 = scmp.eq.s32.totalorder %s36, 0
      %p236 = por %p234, %p235
      %s238 = sadd.s32 %s237, 1
      %p241 = scmp.eq.s32.totalorder %s30, 1
      %p242 = scmp.ne.s32.totalorder %s237, %s239
      %p243 = scmp.eq.s32.totalorder %s30, 0
      %p244 = por %p242, %p243
      %p245 = scmp.ne.s32.totalorder %s237, %s239
      %p246 = scmp.eq.s32.totalorder %s35, 1
      %p247 = por %p245, %p246
      %p248 = scmp.ne.s32.totalorder %s239, %s240
      %p249 = scmp.eq.s32.totalorder %s35, 0
      %p250 = por %p248, %p249
      %p251 = scmp.ne.s32.totalorder %s239, %s240
      %p252 = scmp.eq.s32.totalorder %s36, 1
      %p253 = por %p251, %p252
      %p255 = scmp.ne.s32.totalorder %s240, %s254
      %p256 = scmp.eq.s32.totalorder %s36, 0
      %p257 = por %p255, %p256
      %s259 = sadd.s32 %s258, 1
      %p262 = scmp.eq.s32.totalorder %s30, 1
      %p263 = scmp.ne.s32.totalorder %s258, %s260
      %p264 = scmp.eq.s32.totalorder %s30, 0
      %p265 = por %p263, %p264
      %p266 = scmp.ne.s32.totalorder %s258, %s260
      %p267 = scmp.eq.s32.totalorder %s35, 1
      %p268 = por %p266, %p267
      %p269 = scmp.ne.s32.totalorder %s260, %s261
      %p270 = scmp.eq.s32.totalorder %s35, 0
      %p271 = por %p269, %p270
      %p272 = scmp.ne.s32.totalorder %s260, %s261
      %p273 = scmp.eq.s32.totalorder %s36, 1
      %p274 = por %p272, %p273
      %p276 = scmp.ne.s32.totalorder %s261, %s275
      %p277 = scmp.eq.s32.totalorder %s36, 0
      %p278 = por %p276, %p277
      %s280 = sadd.s32 %s279, 1
      %p283 = scmp.eq.s32.totalorder %s30, 1
      %p284 = scmp.ne.s32.totalorder %s279, %s281
      %p285 = scmp.eq.s32.totalorder %s30, 0
      %p286 = por %p284, %p285
      %p287 = scmp.ne.s32.totalorder %s279, %s281
      %p288 = scmp.eq.s32.totalorder %s35, 1
      %p289 = por %p287, %p288
      %p290 = scmp.ne.s32.totalorder %s281, %s282
      %p291 = scmp.eq.s32.totalorder %s35, 0
      %p292 = por %p290, %p291
      %p293 = scmp.ne.s32.totalorder %s281, %s282
      %p294 = scmp.eq.s32.totalorder %s36, 1
      %p295 = por %p293, %p294
      %p297 = scmp.ne.s32.totalorder %s282, %s296
      %p298 = scmp.eq.s32.totalorder %s36, 0
      %p299 = por %p297, %p298
      %s301 = sadd.s32 %s300, 1
      %p304 = scmp.eq.s32.totalorder %s30, 1
      %p305 = scmp.ne.s32.totalorder %s300, %s302
      %p306 = scmp.eq.s32.totalorder %s30, 0
      %p307 = por %p305, %p306
      %p308 = scmp.ne.s32.totalorder %s300, %s302
      %p309 = scmp.eq.s32.totalorder %s35, 1
      %p310 = por %p308, %p309
      %p311 = scmp.ne.s32.totalorder %s302, %s303
      %p312 = scmp.eq.s32.totalorder %s35, 0
      %p313 = por %p311, %p312
      %p314 = scmp.ne.s32.totalorder %s302, %s303
      %p315 = scmp.eq.s32.totalorder %s36, 1
      %p316 = por %p314, %p315
      %p318 = scmp.ne.s32.totalorder %s303, %s317
      %p319 = scmp.eq.s32.totalorder %s36, 0
      %p320 = por %p318, %p319
      %s322 = sadd.s32 %s321, 1
      %p325 = scmp.eq.s32.totalorder %s30, 1
      %p326 = scmp.ne.s32.totalorder %s321, %s323
      %p327 = scmp.eq.s32.totalorder %s30, 0
      %p328 = por %p326, %p327
      %p329 = scmp.ne.s32.totalorder %s321, %s323
      %p330 = scmp.eq.s32.totalorder %s35, 1
      %p331 = por %p329, %p330
      %p332 = scmp.ne.s32.totalorder %s323, %s324
      %p333 = scmp.eq.s32.totalorder %s35, 0
      %p334 = por %p332, %p333
      %p335 = scmp.ne.s32.totalorder %s323, %s324
      %p336 = scmp.eq.s32.totalorder %s36, 1
      %p337 = por %p335, %p336
      %p339 = scmp.ne.s32.totalorder %s324, %s338
      %p340 = scmp.eq.s32.totalorder %s36, 0
      %p341 = por %p339, %p340
      %s342 = ssub.s32 %s30, %s37
      %p343 = scmp.eq.s32.totalorder %s342, 0
      %s345 = sadd.s32 %s344, 1
      %s346 = scalar_select %p343, %s344, %s345
      %p349 = pneg %p343
      %p350 = scmp.eq.s32.totalorder %s30, 1
      %p351 = por %p349, %p350
      %p352 = scmp.ne.s32.totalorder %s344, %s347
      %p353 = scmp.eq.s32.totalorder %s30, 0
      %p354 = por %p352, %p353
      %p355 = scmp.ne.s32.totalorder %s344, %s347
      %p356 = scmp.eq.s32.totalorder %s35, 1
      %p357 = por %p355, %p356
      %p358 = scmp.ne.s32.totalorder %s347, %s348
      %p359 = scmp.eq.s32.totalorder %s35, 0
      %p360 = por %p358, %p359
      %p361 = scmp.ne.s32.totalorder %s347, %s348
      %p362 = scmp.eq.s32.totalorder %s36, 1
      %p363 = por %p361, %p362
      %p365 = scmp.ne.s32.totalorder %s348, %s364
      %p366 = scmp.eq.s32.totalorder %s36, 0
      %p367 = por %p365, %p366
      %s368 = ssub.s32 %s30, %s37
      %p369 = scmp.eq.s32.totalorder %s368, 0
      %s371 = sadd.s32 %s370, 1
      %s372 = scalar_select %p369, %s370, %s371
      %p375 = pneg %p369
      %p376 = scmp.eq.s32.totalorder %s30, 1
      %p377 = por %p375, %p376
      %p378 = scmp.ne.s32.totalorder %s370, %s373
      %p379 = scmp.eq.s32.totalorder %s30, 0
      %p380 = por %p378, %p379
      %p381 = scmp.ne.s32.totalorder %s370, %s373
      %p382 = scmp.eq.s32.totalorder %s35, 1
      %p383 = por %p381, %p382
      %p384 = scmp.ne.s32.totalorder %s373, %s374
      %p385 = scmp.eq.s32.totalorder %s35, 0
      %p386 = por %p384, %p385
      %p387 = scmp.ne.s32.totalorder %s373, %s374
      %p388 = scmp.eq.s32.totalorder %s36, 1
      %p389 = por %p387, %p388
      %p391 = scmp.ne.s32.totalorder %s374, %s390
      %p392 = scmp.eq.s32.totalorder %s36, 0
      %p393 = por %p391, %p392
      %p394 = scmp.le.s32.totalorder 1, %s30
      %p395 = scmp.lt.s32.totalorder %s30, 3
      %p396 = pnand %p394, %p395
      %p397 = pneg %p396
      // Predicated region
      $region9: #{tower_forward.1} parent=5 // pred_check
        _
      $region10: #{tower_forward.1} parent=5 // pred_check_branch
        %399 = sbr.rel (%p396) target = $region12
      $region11: #{tower_forward.1} parent=5 // pred_region
        %s400 = ssub.s32 %s30, 1
        // Predicated region
        $region13: #{tower_forward.1} parent=11 // pred_check
          %p401 = pneg %p103
        $region14: #{tower_forward.1} parent=11 // pred_check_branch
          %403 = sbr.rel (%p401) target = $region16
        $region15: #{tower_forward.1} parent=11 // pred_region
          _
        $region16: #{tower_forward.1} parent=11 // pred_fallthru
          _
        // Predicated region
        $region17: #{tower_forward.1} parent=11 // pred_check
          %p404 = pneg %p124
        $region18: #{tower_forward.1} parent=11 // pred_check_branch
          %406 = sbr.rel (%p404) target = $region20
        $region19: #{tower_forward.1} parent=11 // pred_region
          _
        $region20: #{tower_forward.1} parent=11 // pred_fallthru
          _
        // Predicated region
        $region21: #{tower_forward.1} parent=11 // pred_check
          %p407 = pneg %p145
        $region22: #{tower_forward.1} parent=11 // pred_check_branch
          %409 = sbr.rel (%p407) target = $region24
        $region23: #{tower_forward.1} parent=11 // pred_region
          %411 = vsyncadd [#allocation5], 0
          %s412 = sshll.u32 %s4, 4
          %s413 = int_to_ptr.hbm [resolvable:$true] %s412
          %s414 = sshll.u32 [#allocation4], 4
          %s415 = int_to_ptr.vmem [resolvable:$true] %s414
          %420 = dma.hbm_to_vmem [thread:$0]  %s413, 6144, %s415, [#allocation5], 128, 128, 8
        $region24: #{tower_forward.1} parent=11 // pred_fallthru
          _
        // Predicated region
        $region25: #{tower_forward.1} parent=11 // pred_check
          %p421 = pneg %p166
        $region26: #{tower_forward.1} parent=11 // pred_check_branch
          %423 = sbr.rel (%p421) target = $region28
        $region27: #{tower_forward.1} parent=11 // pred_region
          _
        $region28: #{tower_forward.1} parent=11 // pred_fallthru
          _
        // Predicated region
        $region29: #{tower_forward.1} parent=11 // pred_check
          %p424 = pneg %p187
        $region30: #{tower_forward.1} parent=11 // pred_check_branch
          %426 = sbr.rel (%p424) target = $region32
        $region31: #{tower_forward.1} parent=11 // pred_region
          _
        $region32: #{tower_forward.1} parent=11 // pred_fallthru
          _
        // Predicated region
        $region33: #{tower_forward.1} parent=11 // pred_check
          %p427 = pneg %p208
        $region34: #{tower_forward.1} parent=11 // pred_check_branch
          %429 = sbr.rel (%p427) target = $region36
        $region35: #{tower_forward.1} parent=11 // pred_region
          _
        $region36: #{tower_forward.1} parent=11 // pred_fallthru
          _
        // Predicated region
        $region37: #{tower_forward.1} parent=11 // pred_check
          %p430 = pneg %p229
        $region38: #{tower_forward.1} parent=11 // pred_check_branch
          %432 = sbr.rel (%p430) target = $region40
        $region39: #{tower_forward.1} parent=11 // pred_region
          %434 = vsyncadd [#allocation8], 0
          %s435 = sshll.u32 %s8, 4
          %s436 = int_to_ptr.hbm [resolvable:$true] %s435
          %s437 = sshll.u32 [#allocation7], 4
          %s438 = int_to_ptr.vmem [resolvable:$true] %s437
          %443 = dma.hbm_to_vmem [thread:$0]  %s436, 10240, %s438, [#allocation8], 128, 128, 8
        $region40: #{tower_forward.1} parent=11 // pred_fallthru
          _
        // Predicated region
        $region41: #{tower_forward.1} parent=11 // pred_check
          %p444 = pneg %p250
        $region42: #{tower_forward.1} parent=11 // pred_check_branch
          %446 = sbr.rel (%p444) target = $region44
        $region43: #{tower_forward.1} parent=11 // pred_region
          _
        $region44: #{tower_forward.1} parent=11 // pred_fallthru
          _
        // Predicated region
        $region45: #{tower_forward.1} parent=11 // pred_check
          %p447 = pneg %p271
        $region46: #{tower_forward.1} parent=11 // pred_check_branch
          %449 = sbr.rel (%p447) target = $region48
        $region47: #{tower_forward.1} parent=11 // pred_region
          _
        $region48: #{tower_forward.1} parent=11 // pred_fallthru
          _
        // Predicated region
        $region49: #{tower_forward.1} parent=11 // pred_check
          %p450 = pneg %p292
        $region50: #{tower_forward.1} parent=11 // pred_check_branch
          %452 = sbr.rel (%p450) target = $region52
        $region51: #{tower_forward.1} parent=11 // pred_region
          _
        $region52: #{tower_forward.1} parent=11 // pred_fallthru
          _
        // Predicated region
        $region53: #{tower_forward.1} parent=11 // pred_check
          %p453 = pneg %p313
        $region54: #{tower_forward.1} parent=11 // pred_check_branch
          %455 = sbr.rel (%p453) target = $region56
        $region55: #{tower_forward.1} parent=11 // pred_region
          _
        $region56: #{tower_forward.1} parent=11 // pred_fallthru
          _
        // Predicated region
        $region57: #{tower_forward.1} parent=11 // pred_check
          %p456 = pneg %p334
        $region58: #{tower_forward.1} parent=11 // pred_check_branch
          %458 = sbr.rel (%p456) target = $region60
        $region59: #{tower_forward.1} parent=11 // pred_region
          _
        $region60: #{tower_forward.1} parent=11 // pred_fallthru
          _
      $region12: #{tower_forward.1} parent=5 // pred_fallthru
        _
      %p459 = scmp.lt.s32.totalorder %s30, 2
      // Predicated region
      $region61: #{tower_forward.1} parent=5 // pred_check
        %p460 = pneg %p459
      $region62: #{tower_forward.1} parent=5 // pred_check_branch
        %462 = sbr.rel (%p460) target = $region64
      $region63: #{tower_forward.1} parent=5 // pred_region
        // Predicated region
        $region65: #{tower_forward.1} parent=63 // pred_check
          %p463 = pneg %p50
        $region66: #{tower_forward.1} parent=63 // pred_check_branch
          %465 = sbr.rel (%p463) target = $region68
        $region67: #{tower_forward.1} parent=63 // pred_region
          %p466 = scmp.lt.s32.totalorder %s30, 1
          %s467 = scalar_select %p466, %s30, 1
          %s468 = smul.addr %s467, 2
          %s469 = smul.addr %s468, 8
          %s470 = scalar_lea.vmem %s0, %s469
        $region68: #{tower_forward.1} parent=63 // pred_fallthru
          _
        // Predicated region
        $region69: #{tower_forward.1} parent=63 // pred_check
          %p471 = pneg %p76
        $region70: #{tower_forward.1} parent=63 // pred_check_branch
          %473 = sbr.rel (%p471) target = $region72
        $region71: #{tower_forward.1} parent=63 // pred_region
          %p474 = scmp.lt.s32.totalorder %s30, 1
          %s475 = scalar_select %p474, %s30, 1
          %s476 = scalar_lea.vmem %s1, %s475
        $region72: #{tower_forward.1} parent=63 // pred_fallthru
          _
      $region64: #{tower_forward.1} parent=5 // pred_fallthru
        _
      %p477 = scmp.le.s32.totalorder 1, %s30
      %p478 = scmp.lt.s32.totalorder %s30, 3
      %p479 = pnand %p477, %p478
      %p480 = pneg %p479
      // Predicated region
      $region73: #{tower_forward.1} parent=5 // pred_check
        _
      $region74: #{tower_forward.1} parent=5 // pred_check_branch
        %482 = sbr.rel (%p479) target = $region76
      $region75: #{tower_forward.1} parent=5 // pred_region
        %s483 = ssub.s32 %s30, 1
        // Predicated region
        $region77: #{tower_forward.1} parent=75 // pred_check
          %p484 = pneg %p145
        $region78: #{tower_forward.1} parent=75 // pred_check_branch
          %486 = sbr.rel (%p484) target = $region80
        $region79: #{tower_forward.1} parent=75 // pred_region
          %488 = dma.done [#allocation5], 6144
        $region80: #{tower_forward.1} parent=75 // pred_fallthru
          _
        // Predicated region
        $region81: #{tower_forward.1} parent=75 // pred_check
          %p489 = pneg %p229
        $region82: #{tower_forward.1} parent=75 // pred_check_branch
          %491 = sbr.rel (%p489) target = $region84
        $region83: #{tower_forward.1} parent=75 // pred_region
          %493 = dma.done [#allocation8], 10240
        $region84: #{tower_forward.1} parent=75 // pred_fallthru
          _
        %p494 = scmp.lt.s32.totalorder %s35, 1
        %s495 = scalar_select %p494, %s35, 1
        %s496 = smul.addr %s495, 2
        %s497 = smul.addr %s496, 8
        %s498 = scalar_lea.vmem %s0, %s497
        %p499 = pneg %p56
        %p500 = pneg %p53
        %p501 = scmp.lt.s32.totalorder %s35, 1
        %s502 = scalar_select %p501, %s35, 1
        %s503 = scalar_lea.vmem %s1, %s502
        %p504 = pneg %p82
        %p505 = pneg %p79
        %p506 = pneg %p103
        %p507 = pneg %p100
        %p508 = pneg %p124
        %p509 = pneg %p121
        %p510 = pneg %p145
        %p511 = pneg %p142
        %p512 = pneg %p166
        %p513 = pneg %p163
        %p514 = pneg %p187
        %p515 = pneg %p184
        %p516 = pneg %p208
        %p517 = pneg %p205
        %p518 = pneg %p229
        %p519 = pneg %p226
        %p520 = pneg %p250
        %p521 = pneg %p247
        %p522 = pneg %p271
        %p523 = pneg %p268
        %p524 = pneg %p292
        %p525 = pneg %p289
        %p526 = pneg %p313
        %p527 = pneg %p310
        %p528 = pneg %p334
        %p529 = pneg %p331
        %p530 = pneg %p360
        %p531 = pneg %p357
        %s532 = sand.u32 %s347, 1
        %s533 = scalar_lea.sflag [#allocation6], %s532
        %s534 = sand.u32 %s347, 1
        %s535 = smul.addr %s534, 32
        %s536 = scalar_lea.vmem [#allocation9], %s535
        %p537 = pneg %p386
        %p538 = pneg %p383
        %s539 = sand.u32 %s373, 1
        %s540 = scalar_lea.sflag [#allocation11], %s539
        %s541 = sand.u32 %s373, 1
        %s542 = smul.addr %s541, 8
        %s543 = scalar_lea.vmem [#allocation10], %s542
        %p544 = scmp.lt.s32.totalorder %s35, 1
        %s545 = scalar_select %p544, %s35, 1
        %s546 = smul.addr %s545, 2
        %s547 = smul.addr %s546, 8
        %s548 = scalar_lea.vmem %s0, %s547
        %p549 = scmp.lt.s32.totalorder %s35, 1
        %s550 = scalar_select %p549, %s35, 1
        %s551 = scalar_lea.vmem %s1, %s550
        %v552 = vld [vmem:[%s548] sm:$0xff]
        %v553 = vld [vmem:[%s548 + $0x8] sm:$0xff]
        %v554 = vld [vmem:[%s551] sm:$0x1]
        %v556 = vperm.slane %v554, 0
        %v558 = vld [vmem:[%s2] sm:$0xff]
        %v559 = vld [vmem:[%s2 + $0x8] sm:$0xff]
        %v560 = vld [vmem:[%s2 + $0x10] sm:$0xff]
        %v561 = vld [vmem:[%s2 + $0x18] sm:$0xff]
        %v562 = vld [vmem:[%s2 + $0x20] sm:$0xff]
        %v563 = vld [vmem:[%s2 + $0x28] sm:$0xff]
        %v564 = vld [vmem:[%s2 + $0x30] sm:$0xff]
        %v565 = vld [vmem:[%s2 + $0x38] sm:$0xff]
        %v566 = vld [vmem:[%s3] sm:$0xff]
        %v567 = vld [vmem:[%s3 + $0x8] sm:$0xff]
        %v568 = vld [vmem:[%s3 + $0x10] sm:$0xff]
        %v569 = vld [vmem:[%s3 + $0x18] sm:$0xff]
        %v570 = vld [vmem:[%s3 + $0x20] sm:$0xff]
        %v571 = vld [vmem:[%s3 + $0x28] sm:$0xff]
        %v572 = vld [vmem:[%s3 + $0x30] sm:$0xff]
        %v573 = vld [vmem:[%s3 + $0x38] sm:$0xff]
        %575 = vset.pattern.permute.xlu0 0
        %576 = vperm.xlu0 %575, %v566
        %v577 = vpop.permute.xlu0 %576
        %580 = vset.pattern.permute.xlu0 0
        %581 = vperm.xlu0 %580, %v567
        %v582 = vpop.permute.xlu0 %581
        %585 = vset.pattern.permute.xlu0 0
        %586 = vperm.xlu0 %585, %v568
        %v587 = vpop.permute.xlu0 %586
        %590 = vset.pattern.permute.xlu0 0
        %591 = vperm.xlu0 %590, %v569
        %v592 = vpop.permute.xlu0 %591
        %595 = vset.pattern.permute.xlu0 0
        %596 = vperm.xlu0 %595, %v570
        %v597 = vpop.permute.xlu0 %596
        %600 = vset.pattern.permute.xlu0 0
        %601 = vperm.xlu0 %600, %v571
        %v602 = vpop.permute.xlu0 %601
        %605 = vset.pattern.permute.xlu0 0
        %606 = vperm.xlu0 %605, %v572
        %v607 = vpop.permute.xlu0 %606
        %610 = vset.pattern.permute.xlu0 0
        %611 = vperm.xlu0 %610, %v573
        %v612 = vpop.permute.xlu0 %611
        %vm614 = vcmask 130048
        %v616 = vsel %vm614, %v558, 0
        %v619 = vsel %vm614, %v559, 0
        %v622 = vsel %vm614, %v560, 0
        %v625 = vsel %vm614, %v561, 0
        %v628 = vsel %vm614, %v562, 0
        %v631 = vsel %vm614, %v563, 0
        %v634 = vsel %vm614, %v564, 0
        %v637 = vsel %vm614, %v565, 0
        %639 = vmatpush.msra.mxu0 0.0
        %640 = vmatpush.msra.mxu0 0.0
        %641 = vmatpush.msra.mxu0 0.0
        %642 = vmatpush.msra.mxu0 0.0
        %643 = vmatpush.msra.mxu0 0.0
        %644 = vmatpush.msra.mxu0 0.0
        %645 = vmatpush.msra.mxu0 0.0
        %646 = vmatpush.msra.mxu0 0.0
        %647 = vmatpush.msra.mxu0 0.0
        %648 = vmatpush.msra.mxu0 0.0
        %649 = vmatpush.msra.mxu0 0.0
        %650 = vmatpush.msra.mxu0 0.0
        %651 = vmatpush.msra.mxu0 0.0
        %652 = vmatpush.msra.mxu0 0.0
        %653 = vmatpush.msra.mxu0 %v553
        %654 = vmatpush.msra.mxu0 %v552
        %655 = vmatmul.f32.gmra.mxu0 %v616
        %v656 = vpop.f32.mrf.mxu0
        %v657 = vadd.f32 %v577, %v656
        %658 = vmatmul.f32.gmra.mxu0 %v619
        %v659 = vpop.f32.mrf.mxu0
        %v660 = vadd.f32 %v582, %v659
        %661 = vmatmul.f32.gmra.mxu0 %v622
        %v662 = vpop.f32.mrf.mxu0
        %v663 = vadd.f32 %v587, %v662
        %664 = vmatmul.f32.gmra.mxu0 %v625
        %v665 = vpop.f32.mrf.mxu0
        %v666 = vadd.f32 %v592, %v665
        %667 = vmatmul.f32.gmra.mxu0 %v628
        %v668 = vpop.f32.mrf.mxu0
        %v669 = vadd.f32 %v597, %v668
        %670 = vmatmul.f32.gmra.mxu0 %v631
        %v671 = vpop.f32.mrf.mxu0
        %v672 = vadd.f32 %v602, %v671
        %673 = vmatmul.f32.gmra.mxu0 %v634
        %v674 = vpop.f32.mrf.mxu0
        %v675 = vadd.f32 %v607, %v674
        %676 = vmatmul.f32.gmra.mxu0 %v637
        %v677 = vpop.f32.mrf.mxu0
        %v678 = vadd.f32 %v612, %v677
        %679 = vdwg.mxu0
        %v680 = vlaneseq
        %v681 = vand.u32 %v680, 127
        %vm682 = vcmp.lt.s32.totalorder %v681, 100
        %v683 = vsel %vm682, 1, 0
        %v684 = vcvt.s32.f32 %v683
        %v685 = vmul.f32 %v657, %v684
        %v686 = vmul.f32 %v660, %v684
        %v687 = vmul.f32 %v663, %v684
        %v688 = vmul.f32 %v666, %v684
        %v689 = vmul.f32 %v669, %v684
        %v690 = vmul.f32 %v672, %v684
        %v691 = vmul.f32 %v675, %v684
        %v692 = vmul.f32 %v678, %v684
        %vm693 = vcmask 64512
        %694 = vst.msk [vmem:[#allocation2] sm:$0xff] %vm693, 0.0
        %695 = vst.msk [vmem:[#allocation2 + $0x10] sm:$0xff] %vm693, 0.0
        %696 = vst.msk [vmem:[#allocation2 + $0x20] sm:$0xff] %vm693, 0.0
        %697 = vst.msk [vmem:[#allocation2 + $0x30] sm:$0xff] %vm693, 0.0
        %vm698 = vcmask 130112
        %699 = vst.msk [vmem:[#allocation2 + $0x8] sm:$0xff] %vm698, 0.0
        %700 = vst.msk [vmem:[#allocation2 + $0x18] sm:$0xff] %vm698, 0.0
        %701 = vst.msk [vmem:[#allocation2 + $0x28] sm:$0xff] %vm698, 0.0
        %702 = vst.msk [vmem:[#allocation2 + $0x38] sm:$0xff] %vm698, 0.0
        %703 = vst.msk [vmem:[#allocation3] sm:$0xff] %vm614, 0.0
        %704 = vst.msk [vmem:[#allocation3 + $0x10] sm:$0xff] %vm614, 0.0
        %705 = vst.msk [vmem:[#allocation3 + $0x20] sm:$0xff] %vm614, 0.0
        %706 = vst.msk [vmem:[#allocation3 + $0x30] sm:$0xff] %vm614, 0.0
        %vm707 = vcmask 261248
        %708 = vst.msk [vmem:[#allocation3 + $0x8] sm:$0xff] %vm707, 0.0
        %709 = vst.msk [vmem:[#allocation3 + $0x18] sm:$0xff] %vm707, 0.0
        %710 = vst.msk [vmem:[#allocation3 + $0x28] sm:$0xff] %vm707, 0.0
        %711 = vst.msk [vmem:[#allocation3 + $0x38] sm:$0xff] %vm707, 0.0
        %716 = vrot.lane.b32.xlu0 %v685, 8
        %v717 = vpop.permute.xlu0 %716
        %718 = vrot.lane.b32.xlu0 %v686, 8
        %v719 = vpop.permute.xlu0 %718
        %720 = vrot.lane.b32.xlu0 %v687, 8
        %v721 = vpop.permute.xlu0 %720
        %722 = vrot.lane.b32.xlu0 %v688, 8
        %v723 = vpop.permute.xlu0 %722
        %vm728 = vcmask 1047616
        %729 = vst.msk [vmem:[#allocation2] sm:$0xff] %vm728, %v717
        %730 = vst.msk [vmem:[#allocation2 + $0x8] sm:$0xff] %vm693, %v717
        %731 = vst.msk [vmem:[#allocation2 + $0x10] sm:$0xff] %vm728, %v719
        %732 = vst.msk [vmem:[#allocation2 + $0x18] sm:$0xff] %vm693, %v719
        %733 = vst.msk [vmem:[#allocation2 + $0x20] sm:$0xff] %vm728, %v721
        %734 = vst.msk [vmem:[#allocation2 + $0x28] sm:$0xff] %vm693, %v721
        %735 = vst.msk [vmem:[#allocation2 + $0x30] sm:$0xff] %vm728, %v723
        %736 = vst.msk [vmem:[#allocation2 + $0x38] sm:$0xff] %vm693, %v723
        %v737 = vld [vmem:[#allocation4] sm:$0xff]
        %v738 = vld [vmem:[#allocation4 + $0x8] sm:$0xff]
        %v739 = vld [vmem:[#allocation4 + $0x10] sm:$0xff]
        %v740 = vld [vmem:[#allocation4 + $0x18] sm:$0xff]
        %v741 = vld [vmem:[#allocation2] sm:$0xff]
        %v742 = vld [vmem:[#allocation2 + $0x8] sm:$0xff]
        %v743 = vld [vmem:[#allocation2 + $0x10] sm:$0xff]
        %v744 = vld [vmem:[#allocation2 + $0x18] sm:$0xff]
        %v745 = vld [vmem:[#allocation2 + $0x20] sm:$0xff]
        %v746 = vld [vmem:[#allocation2 + $0x28] sm:$0xff]
        %v747 = vld [vmem:[#allocation2 + $0x30] sm:$0xff]
        %v748 = vld [vmem:[#allocation2 + $0x38] sm:$0xff]
        %s749 = scalar_lea.vmem [#allocation4], 32
        %v750 = vld [vmem:[%s749] sm:$0xff]
        %v751 = vld [vmem:[%s749 + $0x8] sm:$0xff]
        %v752 = vld [vmem:[%s749 + $0x10] sm:$0xff]
        %v753 = vld [vmem:[%s749 + $0x18] sm:$0xff]
        %762 = vrot.lane.b32.xlu0 %v741, 120
        %v763 = vpop.permute.xlu0 %762
        %764 = vrot.lane.b32.xlu0 %v742, 120
        %v765 = vpop.permute.xlu0 %764
        %766 = vrot.lane.b32.xlu0 %v743, 120
        %v767 = vpop.permute.xlu0 %766
        %768 = vrot.lane.b32.xlu0 %v744, 120
        %v769 = vpop.permute.xlu0 %768
        %770 = vrot.lane.b32.xlu0 %v745, 120
        %v771 = vpop.permute.xlu0 %770
        %772 = vrot.lane.b32.xlu0 %v746, 120
        %v773 = vpop.permute.xlu0 %772
        %774 = vrot.lane.b32.xlu0 %v747, 120
        %v775 = vpop.permute.xlu0 %774
        %776 = vrot.lane.b32.xlu0 %v748, 120
        %v777 = vpop.permute.xlu0 %776
        %vm778 = vcmask 982016
        %v779 = vsel %vm778, %v763, %v765
        %v780 = vsel %vm778, %v767, %v769
        %v781 = vsel %vm778, %v771, %v773
        %v782 = vsel %vm778, %v775, %v777
        %vm787 = vcmask 261120
        %v789 = vsel %vm787, %v750, 0
        %v792 = vsel %vm787, %v751, 0
        %v795 = vsel %vm787, %v752, 0
        %v798 = vsel %vm787, %v753, 0
        %800 = vmatpush.msra.mxu0 0.0
        %801 = vmatpush.msra.mxu0 0.0
        %802 = vmatpush.msra.mxu0 0.0
        %803 = vmatpush.msra.mxu0 0.0
        %804 = vmatpush.msra.mxu0 0.0
        %805 = vmatpush.msra.mxu0 0.0
        %806 = vmatpush.msra.mxu0 0.0
        %807 = vmatpush.msra.mxu0 0.0
        %808 = vmatpush.msra.mxu0 0.0
        %809 = vmatpush.msra.mxu0 0.0
        %810 = vmatpush.msra.mxu0 0.0
        %811 = vmatpush.msra.mxu0 0.0
        %812 = vmatpush.msra.mxu0 %v782
        %813 = vmatpush.msra.mxu0 %v781
        %814 = vmatpush.msra.mxu0 %v780
        %815 = vmatpush.msra.mxu0 %v779
        %816 = vmatmul.f32.gmra.mxu0 %v789
        %v817 = vpop.f32.mrf.mxu0
        %v818 = vadd.f32 0.0, %v817
        %819 = vmatmul.f32.gmra.mxu0 %v792
        %v820 = vpop.f32.mrf.mxu0
        %v821 = vadd.f32 0.0, %v820
        %822 = vmatmul.f32.gmra.mxu0 %v795
        %v823 = vpop.f32.mrf.mxu0
        %v824 = vadd.f32 0.0, %v823
        %825 = vmatmul.f32.gmra.mxu0 %v798
        %v826 = vpop.f32.mrf.mxu0
        %v827 = vadd.f32 0.0, %v826
        %828 = vdwg.mxu0
        %829 = vrot.lane.b32.xlu0 %v741, 121
        %v830 = vpop.permute.xlu0 %829
        %831 = vrot.lane.b32.xlu0 %v742, 121
        %v832 = vpop.permute.xlu0 %831
        %833 = vrot.lane.b32.xlu0 %v743, 121
        %v834 = vpop.permute.xlu0 %833
        %835 = vrot.lane.b32.xlu0 %v744, 121
        %v836 = vpop.permute.xlu0 %835
        %837 = vrot.lane.b32.xlu0 %v745, 121
        %v838 = vpop.permute.xlu0 %837
        %839 = vrot.lane.b32.xlu0 %v746, 121
        %v840 = vpop.permute.xlu0 %839
        %841 = vrot.lane.b32.xlu0 %v747, 121
        %v842 = vpop.permute.xlu0 %841
        %843 = vrot.lane.b32.xlu0 %v748, 121
        %v844 = vpop.permute.xlu0 %843
        %vm845 = vcmask 990208
        %v846 = vsel %vm845, %v830, %v832
        %v847 = vsel %vm845, %v834, %v836
        %v848 = vsel %vm845, %v838, %v840
        %v849 = vsel %vm845, %v842, %v844
        %v855 = vsel %vm787, %v737, 0
        %v858 = vsel %vm787, %v738, 0
        %v861 = vsel %vm787, %v739, 0
        %v864 = vsel %vm787, %v740, 0
        %866 = vmatpush.msra.mxu0 0.0
        %867 = vmatpush.msra.mxu0 0.0
        %868 = vmatpush.msra.mxu0 0.0
        %869 = vmatpush.msra.mxu0 0.0
        %870 = vmatpush.msra.mxu0 0.0
        %871 = vmatpush.msra.mxu0 0.0
        %872 = vmatpush.msra.mxu0 0.0
        %873 = vmatpush.msra.mxu0 0.0
        %874 = vmatpush.msra.mxu0 0.0
        %875 = vmatpush.msra.mxu0 0.0
        %876 = vmatpush.msra.mxu0 0.0
        %877 = vmatpush.msra.mxu0 0.0
        %878 = vmatpush.msra.mxu0 %v849
        %879 = vmatpush.msra.mxu0 %v848
        %880 = vmatpush.msra.mxu0 %v847
        %881 = vmatpush.msra.mxu0 %v846
        %882 = vmatmul.f32.gmra.mxu0 %v855
        %v883 = vpop.f32.mrf.mxu0
        %v884 = vadd.f32 %v818, %v883
        %885 = vmatmul.f32.gmra.mxu0 %v858
        %v886 = vpop.f32.mrf.mxu0
        %v887 = vadd.f32 %v821, %v886
        %888 = vmatmul.f32.gmra.mxu0 %v861
        %v889 = vpop.f32.mrf.mxu0
        %v890 = vadd.f32 %v824, %v889
        %891 = vmatmul.f32.gmra.mxu0 %v864
        %v892 = vpop.f32.mrf.mxu0
        %v893 = vadd.f32 %v827, %v892
        %894 = vdwg.mxu0
        %s895 = scalar_lea.vmem [#allocation4], 64
        %v896 = vld [vmem:[%s895] sm:$0xff]
        %v897 = vld [vmem:[%s895 + $0x8] sm:$0xff]
        %v898 = vld [vmem:[%s895 + $0x10] sm:$0xff]
        %v899 = vld [vmem:[%s895 + $0x18] sm:$0xff]
        %900 = vrot.lane.b32.xlu0 %v741, 119
        %v901 = vpop.permute.xlu0 %900
        %902 = vrot.lane.b32.xlu0 %v742, 119
        %v903 = vpop.permute.xlu0 %902
        %904 = vrot.lane.b32.xlu0 %v743, 119
        %v905 = vpop.permute.xlu0 %904
        %906 = vrot.lane.b32.xlu0 %v744, 119
        %v907 = vpop.permute.xlu0 %906
        %908 = vrot.lane.b32.xlu0 %v745, 119
        %v909 = vpop.permute.xlu0 %908
        %910 = vrot.lane.b32.xlu0 %v746, 119
        %v911 = vpop.permute.xlu0 %910
        %912 = vrot.lane.b32.xlu0 %v747, 119
        %v913 = vpop.permute.xlu0 %912
        %914 = vrot.lane.b32.xlu0 %v748, 119
        %v915 = vpop.permute.xlu0 %914
        %vm916 = vcmask 973824
        %v917 = vsel %vm916, %v901, %v903
        %v918 = vsel %vm916, %v905, %v907
        %v919 = vsel %vm916, %v909, %v911
        %v920 = vsel %vm916, %v913, %v915
        %v926 = vsel %vm787, %v896, 0
        %v929 = vsel %vm787, %v897, 0
        %v932 = vsel %vm787, %v898, 0
        %v935 = vsel %vm787, %v899, 0
        %937 = vmatpush.msra.mxu0 0.0
        %938 = vmatpush.msra.mxu0 0.0
        %939 = vmatpush.msra.mxu0 0.0
        %940 = vmatpush.msra.mxu0 0.0
        %941 = vmatpush.msra.mxu0 0.0
        %942 = vmatpush.msra.mxu0 0.0
        %943 = vmatpush.msra.mxu0 0.0
        %944 = vmatpush.msra.mxu0 0.0
        %945 = vmatpush.msra.mxu0 0.0
        %946 = vmatpush.msra.mxu0 0.0
        %947 = vmatpush.msra.mxu0 0.0
        %948 = vmatpush.msra.mxu0 0.0
        %949 = vmatpush.msra.mxu0 %v920
        %950 = vmatpush.msra.mxu0 %v919
        %951 = vmatpush.msra.mxu0 %v918
        %952 = vmatpush.msra.mxu0 %v917
        %953 = vmatmul.f32.gmra.mxu0 %v926
        %v954 = vpop.f32.mrf.mxu0
        %v955 = vadd.f32 0.0, %v954
        %956 = vmatmul.f32.gmra.mxu0 %v929
        %v957 = vpop.f32.mrf.mxu0
        %v958 = vadd.f32 0.0, %v957
        %959 = vmatmul.f32.gmra.mxu0 %v932
        %v960 = vpop.f32.mrf.mxu0
        %v961 = vadd.f32 0.0, %v960
        %962 = vmatmul.f32.gmra.mxu0 %v935
        %v963 = vpop.f32.mrf.mxu0
        %v964 = vadd.f32 0.0, %v963
        %965 = vdwg.mxu0
        %v966 = vadd.f32 %v884, %v955
        %v967 = vadd.f32 %v887, %v958
        %v968 = vadd.f32 %v890, %v961
        %v969 = vadd.f32 %v893, %v964
        %v970 = vld [vmem:[%s5] sm:$0xff]
        %v971 = vld [vmem:[%s5 + $0x8] sm:$0xff]
        %v972 = vld [vmem:[%s5 + $0x10] sm:$0xff]
        %v973 = vld [vmem:[%s5 + $0x18] sm:$0xff]
        %975 = vset.pattern.permute.xlu0 0
        %976 = vperm.xlu0 %975, %v970
        %v977 = vpop.permute.xlu0 %976
        %980 = vset.pattern.permute.xlu0 0
        %981 = vperm.xlu0 %980, %v971
        %v982 = vpop.permute.xlu0 %981
        %985 = vset.pattern.permute.xlu0 0
        %986 = vperm.xlu0 %985, %v972
        %v987 = vpop.permute.xlu0 %986
        %990 = vset.pattern.permute.xlu0 0
        %991 = vperm.xlu0 %990, %v973
        %v992 = vpop.permute.xlu0 %991
        %v994 = vadd.f32 %v966, %v977
        %v995 = vadd.f32 %v967, %v982
        %v996 = vadd.f32 %v968, %v987
        %v997 = vadd.f32 %v969, %v992
        %v998 = vmax.f32 %v994, 0.0
        %v999 = vmax.f32 %v995, 0.0
        %v1000 = vmax.f32 %v996, 0.0
        %v1001 = vmax.f32 %v997, 0.0
        %v1002 = vld [vmem:[%s6] sm:$0xff]
        %v1003 = vld [vmem:[%s6 + $0x8] sm:$0xff]
        %v1004 = vld [vmem:[%s6 + $0x10] sm:$0xff]
        %v1005 = vld [vmem:[%s6 + $0x18] sm:$0xff]
        %v1006 = vld [vmem:[%s7] sm:$0xff]
        %v1007 = vld [vmem:[%s7 + $0x8] sm:$0xff]
        %v1008 = vld [vmem:[%s7 + $0x10] sm:$0xff]
        %v1009 = vld [vmem:[%s7 + $0x18] sm:$0xff]
        %1011 = vset.pattern.permute.xlu0 0
        %1012 = vperm.xlu0 %1011, %v1006
        %v1013 = vpop.permute.xlu0 %1012
        %1016 = vset.pattern.permute.xlu0 0
        %1017 = vperm.xlu0 %1016, %v1007
        %v1018 = vpop.permute.xlu0 %1017
        %1021 = vset.pattern.permute.xlu0 0
        %1022 = vperm.xlu0 %1021, %v1008
        %v1023 = vpop.permute.xlu0 %1022
        %1026 = vset.pattern.permute.xlu0 0
        %1027 = vperm.xlu0 %1026, %v1009
        %v1028 = vpop.permute.xlu0 %1027
        %v1031 = vsel %vm787, %v1002, 0
        %v1034 = vsel %vm787, %v1003, 0
        %v1037 = vsel %vm787, %v1004, 0
        %v1040 = vsel %vm787, %v1005, 0
        %1042 = vmatpush.msra.mxu0 0.0
        %1043 = vmatpush.msra.mxu0 0.0
        %1044 = vmatpush.msra.mxu0 0.0
        %1045 = vmatpush.msra.mxu0 0.0
        %1046 = vmatpush.msra.mxu0 0.0
        %1047 = vmatpush.msra.mxu0 0.0
        %1048 = vmatpush.msra.mxu0 0.0
        %1049 = vmatpush.msra.mxu0 0.0
        %1050 = vmatpush.msra.mxu0 0.0
        %1051 = vmatpush.msra.mxu0 0.0
        %1052 = vmatpush.msra.mxu0 0.0
        %1053 = vmatpush.msra.mxu0 0.0
        %1054 = vmatpush.msra.mxu0 %v1001
        %1055 = vmatpush.msra.mxu0 %v1000
        %1056 = vmatpush.msra.mxu0 %v999
        %1057 = vmatpush.msra.mxu0 %v998
        %1058 = vmatmul.f32.gmra.mxu0 %v1031
        %v1059 = vpop.f32.mrf.mxu0
        %v1060 = vadd.f32 %v1013, %v1059
        %1061 = vmatmul.f32.gmra.mxu0 %v1034
        %v1062 = vpop.f32.mrf.mxu0
        %v1063 = vadd.f32 %v1018, %v1062
        %1064 = vmatmul.f32.gmra.mxu0 %v1037
        %v1065 = vpop.f32.mrf.mxu0
        %v1066 = vadd.f32 %v1023, %v1065
        %1067 = vmatmul.f32.gmra.mxu0 %v1040
        %v1068 = vpop.f32.mrf.mxu0
        %v1069 = vadd.f32 %v1028, %v1068
        %1070 = vdwg.mxu0
        %v1071 = vadd.f32 %v685, %v1060
        %v1072 = vadd.f32 %v686, %v1063
        %v1073 = vadd.f32 %v687, %v1066
        %v1074 = vadd.f32 %v688, %v1069
        %v1075 = vmul.f32 %v1071, %v556
        %v1076 = vmul.f32 %v1072, %v556
        %v1077 = vmul.f32 %v1073, %v556
        %v1078 = vmul.f32 %v1074, %v556
        %1083 = vrot.lane.b32.xlu0 %v1075, 8
        %v1084 = vpop.permute.xlu0 %1083
        %1085 = vrot.lane.b32.xlu0 %v1076, 8
        %v1086 = vpop.permute.xlu0 %1085
        %1087 = vrot.lane.b32.xlu0 %v1077, 8
        %v1088 = vpop.permute.xlu0 %1087
        %1089 = vrot.lane.b32.xlu0 %v1078, 8
        %v1090 = vpop.permute.xlu0 %1089
        %1095 = vst.msk [vmem:[#allocation2] sm:$0xff] %vm728, %v1084
        %1096 = vst.msk [vmem:[#allocation2 + $0x8] sm:$0xff] %vm693, %v1084
        %1097 = vst.msk [vmem:[#allocation2 + $0x10] sm:$0xff] %vm728, %v1086
        %1098 = vst.msk [vmem:[#allocation2 + $0x18] sm:$0xff] %vm693, %v1086
        %1099 = vst.msk [vmem:[#allocation2 + $0x20] sm:$0xff] %vm728, %v1088
        %1100 = vst.msk [vmem:[#allocation2 + $0x28] sm:$0xff] %vm693, %v1088
        %1101 = vst.msk [vmem:[#allocation2 + $0x30] sm:$0xff] %vm728, %v1090
        %1102 = vst.msk [vmem:[#allocation2 + $0x38] sm:$0xff] %vm693, %v1090
        %s1103 = scalar_lea.vmem [#allocation4], 96
        %v1104 = vld [vmem:[%s1103] sm:$0xff]
        %v1105 = vld [vmem:[%s1103 + $0x8] sm:$0xff]
        %v1106 = vld [vmem:[%s1103 + $0x10] sm:$0xff]
        %v1107 = vld [vmem:[%s1103 + $0x18] sm:$0xff]
        %v1108 = vld [vmem:[#allocation2] sm:$0xff]
        %v1109 = vld [vmem:[#allocation2 + $0x8] sm:$0xff]
        %v1110 = vld [vmem:[#allocation2 + $0x10] sm:$0xff]
        %v1111 = vld [vmem:[#allocation2 + $0x18] sm:$0xff]
        %v1112 = vld [vmem:[#allocation2 + $0x20] sm:$0xff]
        %v1113 = vld [vmem:[#allocation2 + $0x28] sm:$0xff]
        %v1114 = vld [vmem:[#allocation2 + $0x30] sm:$0xff]
        %v1115 = vld [vmem:[#allocation2 + $0x38] sm:$0xff]
        %s1116 = scalar_lea.vmem [#allocation4], 128
        %v1117 = vld [vmem:[%s1116] sm:$0xff]
        %v1118 = vld [vmem:[%s1116 + $0x8] sm:$0xff]
        %v1119 = vld [vmem:[%s1116 + $0x10] sm:$0xff]
        %v1120 = vld [vmem:[%s1116 + $0x18] sm:$0xff]
        %1129 = vrot.lane.b32.xlu0 %v1108, 120
        %v1130 = vpop.permute.xlu0 %1129
        %1131 = vrot.lane.b32.xlu0 %v1109, 120
        %v1132 = vpop.permute.xlu0 %1131
        %1133 = vrot.lane.b32.xlu0 %v1110, 120
        %v1134 = vpop.permute.xlu0 %1133
        %1135 = vrot.lane.b32.xlu0 %v1111, 120
        %v1136 = vpop.permute.xlu0 %1135
        %1137 = vrot.lane.b32.xlu0 %v1112, 120
        %v1138 = vpop.permute.xlu0 %1137
        %1139 = vrot.lane.b32.xlu0 %v1113, 120
        %v1140 = vpop.permute.xlu0 %1139
        %1141 = vrot.lane.b32.xlu0 %v1114, 120
        %v1142 = vpop.permute.xlu0 %1141
        %1143 = vrot.lane.b32.xlu0 %v1115, 120
        %v1144 = vpop.permute.xlu0 %1143
        %v1145 = vsel %vm778, %v1130, %v1132
        %v1146 = vsel %vm778, %v1134, %v1136
        %v1147 = vsel %vm778, %v1138, %v1140
        %v1148 = vsel %vm778, %v1142, %v1144
        %v1154 = vsel %vm787, %v1117, 0
        %v1157 = vsel %vm787, %v1118, 0
        %v1160 = vsel %vm787, %v1119, 0
        %v1163 = vsel %vm787, %v1120, 0
        %1165 = vmatpush.msra.mxu0 0.0
        %1166 = vmatpush.msra.mxu0 0.0
        %1167 = vmatpush.msra.mxu0 0.0
        %1168 = vmatpush.msra.mxu0 0.0
        %1169 = vmatpush.msra.mxu0 0.0
        %1170 = vmatpush.msra.mxu0 0.0
        %1171 = vmatpush.msra.mxu0 0.0
        %1172 = vmatpush.msra.mxu0 0.0
        %1173 = vmatpush.msra.mxu0 0.0
        %1174 = vmatpush.msra.mxu0 0.0
        %1175 = vmatpush.msra.mxu0 0.0
        %1176 = vmatpush.msra.mxu0 0.0
        %1177 = vmatpush.msra.mxu0 %v1148
        %1178 = vmatpush.msra.mxu0 %v1147
        %1179 = vmatpush.msra.mxu0 %v1146
        %1180 = vmatpush.msra.mxu0 %v1145
        %1181 = vmatmul.f32.gmra.mxu0 %v1154
        %v1182 = vpop.f32.mrf.mxu0
        %v1183 = vadd.f32 0.0, %v1182
        %1184 = vmatmul.f32.gmra.mxu0 %v1157
        %v1185 = vpop.f32.mrf.mxu0
        %v1186 = vadd.f32 0.0, %v1185
        %1187 = vmatmul.f32.gmra.mxu0 %v1160
        %v1188 = vpop.f32.mrf.mxu0
        %v1189 = vadd.f32 0.0, %v1188
        %1190 = vmatmul.f32.gmra.mxu0 %v1163
        %v1191 = vpop.f32.mrf.mxu0
        %v1192 = vadd.f32 0.0, %v1191
        %1193 = vdwg.mxu0
        %1194 = vrot.lane.b32.xlu0 %v1108, 122
        %v1195 = vpop.permute.xlu0 %1194
        %1196 = vrot.lane.b32.xlu0 %v1109, 122
        %v1197 = vpop.permute.xlu0 %1196
        %1198 = vrot.lane.b32.xlu0 %v1110, 122
        %v1199 = vpop.permute.xlu0 %1198
        %1200 = vrot.lane.b32.xlu0 %v1111, 122
        %v1201 = vpop.permute.xlu0 %1200
        %1202 = vrot.lane.b32.xlu0 %v1112, 122
        %v1203 = vpop.permute.xlu0 %1202
        %1204 = vrot.lane.b32.xlu0 %v1113, 122
        %v1205 = vpop.permute.xlu0 %1204
        %1206 = vrot.lane.b32.xlu0 %v1114, 122
        %v1207 = vpop.permute.xlu0 %1206
        %1208 = vrot.lane.b32.xlu0 %v1115, 122
        %v1209 = vpop.permute.xlu0 %1208
        %vm1210 = vcmask 998400
        %v1211 = vsel %vm1210, %v1195, %v1197
        %v1212 = vsel %vm1210, %v1199, %v1201
        %v1213 = vsel %vm1210, %v1203, %v1205
        %v1214 = vsel %vm1210, %v1207, %v1209
        %v1220 = vsel %vm787, %v1104, 0
        %v1223 = vsel %vm787, %v1105, 0
        %v1226 = vsel %vm787, %v1106, 0
        %v1229 = vsel %vm787, %v1107, 0
        %1231 = vmatpush.msra.mxu0 0.0
        %1232 = vmatpush.msra.mxu0 0.0
        %1233 = vmatpush.msra.mxu0 0.0
        %1234 = vmatpush.msra.mxu0 0.0
        %1235 = vmatpush.msra.mxu0 0.0
        %1236 = vmatpush.msra.mxu0 0.0
        %1237 = vmatpush.msra.mxu0 0.0
        %1238 = vmatpush.msra.mxu0 0.0
        %1239 = vmatpush.msra.mxu0 0.0
        %1240 = vmatpush.msra.mxu0 0.0
        %1241 = vmatpush.msra.mxu0 0.0
        %1242 = vmatpush.msra.mxu0 0.0
        %1243 = vmatpush.msra.mxu0 %v1214
        %1244 = vmatpush.msra.mxu0 %v1213
        %1245 = vmatpush.msra.mxu0 %v1212
        %1246 = vmatpush.msra.mxu0 %v1211
        %1247 = vmatmul.f32.gmra.mxu0 %v1220
        %v1248 = vpop.f32.mrf.mxu0
        %v1249 = vadd.f32 %v1183, %v1248
        %1250 = vmatmul.f32.gmra.mxu0 %v1223
        %v1251 = vpop.f32.mrf.mxu0
        %v1252 = vadd.f32 %v1186, %v1251
        %1253 = vmatmul.f32.gmra.mxu0 %v1226
        %v1254 = vpop.f32.mrf.mxu0
        %v1255 = vadd.f32 %v1189, %v1254
        %1256 = vmatmul.f32.gmra.mxu0 %v1229
        %v1257 = vpop.f32.mrf.mxu0
        %v1258 = vadd.f32 %v1192, %v1257
        %1259 = vdwg.mxu0
        %s1260 = scalar_lea.vmem [#allocation4], 160
        %v1261 = vld [vmem:[%s1260] sm:$0xff]
        %v1262 = vld [vmem:[%s1260 + $0x8] sm:$0xff]
        %v1263 = vld [vmem:[%s1260 + $0x10] sm:$0xff]
        %v1264 = vld [vmem:[%s1260 + $0x18] sm:$0xff]
        %1265 = vrot.lane.b32.xlu0 %v1108, 118
        %v1266 = vpop.permute.xlu0 %1265
        %1267 = vrot.lane.b32.xlu0 %v1109, 118
        %v1268 = vpop.permute.xlu0 %1267
        %1269 = vrot.lane.b32.xlu0 %v1110, 118
        %v1270 = vpop.permute.xlu0 %1269
        %1271 = vrot.lane.b32.xlu0 %v1111, 118
        %v1272 = vpop.permute.xlu0 %1271
        %1273 = vrot.lane.b32.xlu0 %v1112, 118
        %v1274 = vpop.permute.xlu0 %1273
        %1275 = vrot.lane.b32.xlu0 %v1113, 118
        %v1276 = vpop.permute.xlu0 %1275
        %1277 = vrot.lane.b32.xlu0 %v1114, 118
        %v1278 = vpop.permute.xlu0 %1277
        %1279 = vrot.lane.b32.xlu0 %v1115, 118
        %v1280 = vpop.permute.xlu0 %1279
        %vm1281 = vcmask 965632
        %v1282 = vsel %vm1281, %v1266, %v1268
        %v1283 = vsel %vm1281, %v1270, %v1272
        %v1284 = vsel %vm1281, %v1274, %v1276
        %v1285 = vsel %vm1281, %v1278, %v1280
        %v1291 = vsel %vm787, %v1261, 0
        %v1294 = vsel %vm787, %v1262, 0
        %v1297 = vsel %vm787, %v1263, 0
        %v1300 = vsel %vm787, %v1264, 0
        %1302 = vmatpush.msra.mxu0 0.0
        %1303 = vmatpush.msra.mxu0 0.0
        %1304 = vmatpush.msra.mxu0 0.0
        %1305 = vmatpush.msra.mxu0 0.0
        %1306 = vmatpush.msra.mxu0 0.0
        %1307 = vmatpush.msra.mxu0 0.0
        %1308 = vmatpush.msra.mxu0 0.0
        %1309 = vmatpush.msra.mxu0 0.0
        %1310 = vmatpush.msra.mxu0 0.0
        %1311 = vmatpush.msra.mxu0 0.0
        %1312 = vmatpush.msra.mxu0 0.0
        %1313 = vmatpush.msra.mxu0 0.0
        %1314 = vmatpush.msra.mxu0 %v1285
        %1315 = vmatpush.msra.mxu0 %v1284
        %1316 = vmatpush.msra.mxu0 %v1283
        %1317 = vmatpush.msra.mxu0 %v1282
        %1318 = vmatmul.f32.gmra.mxu0 %v1291
        %v1319 = vpop.f32.mrf.mxu0
        %v1320 = vadd.f32 0.0, %v1319
        %1321 = vmatmul.f32.gmra.mxu0 %v1294
        %v1322 = vpop.f32.mrf.mxu0
        %v1323 = vadd.f32 0.0, %v1322
        %1324 = vmatmul.f32.gmra.mxu0 %v1297
        %v1325 = vpop.f32.mrf.mxu0
        %v1326 = vadd.f32 0.0, %v1325
        %1327 = vmatmul.f32.gmra.mxu0 %v1300
        %v1328 = vpop.f32.mrf.mxu0
        %v1329 = vadd.f32 0.0, %v1328
        %1330 = vdwg.mxu0
        %v1331 = vadd.f32 %v1249, %v1320
        %v1332 = vadd.f32 %v1252, %v1323
        %v1333 = vadd.f32 %v1255, %v1326
        %v1334 = vadd.f32 %v1258, %v1329
        %s1335 = scalar_lea.vmem %s5, 32
        %v1336 = vld [vmem:[%s1335] sm:$0xff]
        %v1337 = vld [vmem:[%s1335 + $0x8] sm:$0xff]
        %v1338 = vld [vmem:[%s1335 + $0x10] sm:$0xff]
        %v1339 = vld [vmem:[%s1335 + $0x18] sm:$0xff]
        %1341 = vset.pattern.permute.xlu0 0
        %1342 = vperm.xlu0 %1341, %v1336
        %v1343 = vpop.permute.xlu0 %1342
        %1346 = vset.pattern.permute.xlu0 0
        %1347 = vperm.xlu0 %1346, %v1337
        %v1348 = vpop.permute.xlu0 %1347
        %1351 = vset.pattern.permute.xlu0 0
        %1352 = vperm.xlu0 %1351, %v1338
        %v1353 = vpop.permute.xlu0 %1352
        %1356 = vset.pattern.permute.xlu0 0
        %1357 = vperm.xlu0 %1356, %v1339
        %v1358 = vpop.permute.xlu0 %1357
        %v1360 = vadd.f32 %v1331, %v1343
        %v1361 = vadd.f32 %v1332, %v1348
        %v1362 = vadd.f32 %v1333, %v1353
        %v1363 = vadd.f32 %v1334, %v1358
        %v1364 = vmax.f32 %v1360, 0.0
        %v1365 = vmax.f32 %v1361, 0.0
        %v1366 = vmax.f32 %v1362, 0.0
        %v1367 = vmax.f32 %v1363, 0.0
        %s1368 = scalar_lea.vmem %s6, 32
        %v1369 = vld [vmem:[%s1368] sm:$0xff]
        %v1370 = vld [vmem:[%s1368 + $0x8] sm:$0xff]
        %v1371 = vld [vmem:[%s1368 + $0x10] sm:$0xff]
        %v1372 = vld [vmem:[%s1368 + $0x18] sm:$0xff]
        %s1373 = scalar_lea.vmem %s7, 32
        %v1374 = vld [vmem:[%s1373] sm:$0xff]
        %v1375 = vld [vmem:[%s1373 + $0x8] sm:$0xff]
        %v1376 = vld [vmem:[%s1373 + $0x10] sm:$0xff]
        %v1377 = vld [vmem:[%s1373 + $0x18] sm:$0xff]
        %1379 = vset.pattern.permute.xlu0 0
        %1380 = vperm.xlu0 %1379, %v1374
        %v1381 = vpop.permute.xlu0 %1380
        %1384 = vset.pattern.permute.xlu0 0
        %1385 = vperm.xlu0 %1384, %v1375
        %v1386 = vpop.permute.xlu0 %1385
        %1389 = vset.pattern.permute.xlu0 0
        %1390 = vperm.xlu0 %1389, %v1376
        %v1391 = vpop.permute.xlu0 %1390
        %1394 = vset.pattern.permute.xlu0 0
        %1395 = vperm.xlu0 %1394, %v1377
        %v1396 = vpop.permute.xlu0 %1395
        %v1399 = vsel %vm787, %v1369, 0
        %v1402 = vsel %vm787, %v1370, 0
        %v1405 = vsel %vm787, %v1371, 0
        %v1408 = vsel %vm787, %v1372, 0
        %1410 = vmatpush.msra.mxu0 0.0
        %1411 = vmatpush.msra.mxu0 0.0
        %1412 = vmatpush.msra.mxu0 0.0
        %1413 = vmatpush.msra.mxu0 0.0
        %1414 = vmatpush.msra.mxu0 0.0
        %1415 = vmatpush.msra.mxu0 0.0
        %1416 = vmatpush.msra.mxu0 0.0
        %1417 = vmatpush.msra.mxu0 0.0
        %1418 = vmatpush.msra.mxu0 0.0
        %1419 = vmatpush.msra.mxu0 0.0
        %1420 = vmatpush.msra.mxu0 0.0
        %1421 = vmatpush.msra.mxu0 0.0
        %1422 = vmatpush.msra.mxu0 %v1367
        %1423 = vmatpush.msra.mxu0 %v1366
        %1424 = vmatpush.msra.mxu0 %v1365
        %1425 = vmatpush.msra.mxu0 %v1364
        %1426 = vmatmul.f32.gmra.mxu0 %v1399
        %v1427 = vpop.f32.mrf.mxu0
        %v1428 = vadd.f32 %v1381, %v1427
        %1429 = vmatmul.f32.gmra.mxu0 %v1402
        %v1430 = vpop.f32.mrf.mxu0
        %v1431 = vadd.f32 %v1386, %v1430
        %1432 = vmatmul.f32.gmra.mxu0 %v1405
        %v1433 = vpop.f32.mrf.mxu0
        %v1434 = vadd.f32 %v1391, %v1433
        %1435 = vmatmul.f32.gmra.mxu0 %v1408
        %v1436 = vpop.f32.mrf.mxu0
        %v1437 = vadd.f32 %v1396, %v1436
        %1438 = vdwg.mxu0
        %v1439 = vadd.f32 %v1075, %v1428
        %v1440 = vadd.f32 %v1076, %v1431
        %v1441 = vadd.f32 %v1077, %v1434
        %v1442 = vadd.f32 %v1078, %v1437
        %v1443 = vmul.f32 %v1439, %v556
        %v1444 = vmul.f32 %v1440, %v556
        %v1445 = vmul.f32 %v1441, %v556
        %v1446 = vmul.f32 %v1442, %v556
        %1451 = vrot.lane.b32.xlu0 %v1443, 8
        %v1452 = vpop.permute.xlu0 %1451
        %1453 = vrot.lane.b32.xlu0 %v1444, 8
        %v1454 = vpop.permute.xlu0 %1453
        %1455 = vrot.lane.b32.xlu0 %v1445, 8
        %v1456 = vpop.permute.xlu0 %1455
        %1457 = vrot.lane.b32.xlu0 %v1446, 8
        %v1458 = vpop.permute.xlu0 %1457
        %1463 = vst.msk [vmem:[#allocation2] sm:$0xff] %vm728, %v1452
        %1464 = vst.msk [vmem:[#allocation2 + $0x8] sm:$0xff] %vm693, %v1452
        %1465 = vst.msk [vmem:[#allocation2 + $0x10] sm:$0xff] %vm728, %v1454
        %1466 = vst.msk [vmem:[#allocation2 + $0x18] sm:$0xff] %vm693, %v1454
        %1467 = vst.msk [vmem:[#allocation2 + $0x20] sm:$0xff] %vm728, %v1456
        %1468 = vst.msk [vmem:[#allocation2 + $0x28] sm:$0xff] %vm693, %v1456
        %1469 = vst.msk [vmem:[#allocation2 + $0x30] sm:$0xff] %vm728, %v1458
        %1470 = vst.msk [vmem:[#allocation2 + $0x38] sm:$0xff] %vm693, %v1458
        %s1471 = scalar_lea.vmem [#allocation4], 192
        %v1472 = vld [vmem:[%s1471] sm:$0xff]
        %v1473 = vld [vmem:[%s1471 + $0x8] sm:$0xff]
        %v1474 = vld [vmem:[%s1471 + $0x10] sm:$0xff]
        %v1475 = vld [vmem:[%s1471 + $0x18] sm:$0xff]
        %v1476 = vld [vmem:[#allocation2] sm:$0xff]
        %v1477 = vld [vmem:[#allocation2 + $0x8] sm:$0xff]
        %v1478 = vld [vmem:[#allocation2 + $0x10] sm:$0xff]
        %v1479 = vld [vmem:[#allocation2 + $0x18] sm:$0xff]
        %v1480 = vld [vmem:[#allocation2 + $0x20] sm:$0xff]
        %v1481 = vld [vmem:[#allocation2 + $0x28] sm:$0xff]
        %v1482 = vld [vmem:[#allocation2 + $0x30] sm:$0xff]
        %v1483 = vld [vmem:[#allocation2 + $0x38] sm:$0xff]
        %s1484 = scalar_lea.vmem [#allocation4], 224
        %v1485 = vld [vmem:[%s1484] sm:$0xff]
        %v1486 = vld [vmem:[%s1484 + $0x8] sm:$0xff]
        %v1487 = vld [vmem:[%s1484 + $0x10] sm:$0xff]
        %v1488 = vld [vmem:[%s1484 + $0x18] sm:$0xff]
        %1497 = vrot.lane.b32.xlu0 %v1476, 120
        %v1498 = vpop.permute.xlu0 %1497
        %1499 = vrot.lane.b32.xlu0 %v1477, 120
        %v1500 = vpop.permute.xlu0 %1499
        %1501 = vrot.lane.b32.xlu0 %v1478, 120
        %v1502 = vpop.permute.xlu0 %1501
        %1503 = vrot.lane.b32.xlu0 %v1479, 120
        %v1504 = vpop.permute.xlu0 %1503
        %1505 = vrot.lane.b32.xlu0 %v1480, 120
        %v1506 = vpop.permute.xlu0 %1505
        %1507 = vrot.lane.b32.xlu0 %v1481, 120
        %v1508 = vpop.permute.xlu0 %1507
        %1509 = vrot.lane.b32.xlu0 %v1482, 120
        %v1510 = vpop.permute.xlu0 %1509
        %1511 = vrot.lane.b32.xlu0 %v1483, 120
        %v1512 = vpop.permute.xlu0 %1511
        %v1513 = vsel %vm778, %v1498, %v1500
        %v1514 = vsel %vm778, %v1502, %v1504
        %v1515 = vsel %vm778, %v1506, %v1508
        %v1516 = vsel %vm778, %v1510, %v1512
        %v1522 = vsel %vm787, %v1485, 0
        %v1525 = vsel %vm787, %v1486, 0
        %v1528 = vsel %vm787, %v1487, 0
        %v1531 = vsel %vm787, %v1488, 0
        %1533 = vmatpush.msra.mxu0 0.0
        %1534 = vmatpush.msra.mxu0 0.0
        %1535 = vmatpush.msra.mxu0 0.0
        %1536 = vmatpush.msra.mxu0 0.0
        %1537 = vmatpush.msra.mxu0 0.0
        %1538 = vmatpush.msra.mxu0 0.0
        %1539 = vmatpush.msra.mxu0 0.0
        %1540 = vmatpush.msra.mxu0 0.0
        %1541 = vmatpush.msra.mxu0 0.0
        %1542 = vmatpush.msra.mxu0 0.0
        %1543 = vmatpush.msra.mxu0 0.0
        %1544 = vmatpush.msra.mxu0 0.0
        %1545 = vmatpush.msra.mxu0 %v1516
        %1546 = vmatpush.msra.mxu0 %v1515
        %1547 = vmatpush.msra.mxu0 %v1514
        %1548 = vmatpush.msra.mxu0 %v1513
        %1549 = vmatmul.f32.gmra.mxu0 %v1522
        %v1550 = vpop.f32.mrf.mxu0
        %v1551 = vadd.f32 0.0, %v1550
        %1552 = vmatmul.f32.gmra.mxu0 %v1525
        %v1553 = vpop.f32.mrf.mxu0
        %v1554 = vadd.f32 0.0, %v1553
        %1555 = vmatmul.f32.gmra.mxu0 %v1528
        %v1556 = vpop.f32.mrf.mxu0
        %v1557 = vadd.f32 0.0, %v1556
        %1558 = vmatmul.f32.gmra.mxu0 %v1531
        %v1559 = vpop.f32.mrf.mxu0
        %v1560 = vadd.f32 0.0, %v1559
        %1561 = vdwg.mxu0
        %1562 = vrot.lane.b32.xlu0 %v1476, 124
        %v1563 = vpop.permute.xlu0 %1562
        %1564 = vrot.lane.b32.xlu0 %v1477, 124
        %v1565 = vpop.permute.xlu0 %1564
        %1566 = vrot.lane.b32.xlu0 %v1478, 124
        %v1567 = vpop.permute.xlu0 %1566
        %1568 = vrot.lane.b32.xlu0 %v1479, 124
        %v1569 = vpop.permute.xlu0 %1568
        %1570 = vrot.lane.b32.xlu0 %v1480, 124
        %v1571 = vpop.permute.xlu0 %1570
        %1572 = vrot.lane.b32.xlu0 %v1481, 124
        %v1573 = vpop.permute.xlu0 %1572
        %1574 = vrot.lane.b32.xlu0 %v1482, 124
        %v1575 = vpop.permute.xlu0 %1574
        %1576 = vrot.lane.b32.xlu0 %v1483, 124
        %v1577 = vpop.permute.xlu0 %1576
        %vm1578 = vcmask 1014784
        %v1579 = vsel %vm1578, %v1563, %v1565
        %v1580 = vsel %vm1578, %v1567, %v1569
        %v1581 = vsel %vm1578, %v1571, %v1573
        %v1582 = vsel %vm1578, %v1575, %v1577
        %v1588 = vsel %vm787, %v1472, 0
        %v1591 = vsel %vm787, %v1473, 0
        %v1594 = vsel %vm787, %v1474, 0
        %v1597 = vsel %vm787, %v1475, 0
        %1599 = vmatpush.msra.mxu0 0.0
        %1600 = vmatpush.msra.mxu0 0.0
        %1601 = vmatpush.msra.mxu0 0.0
        %1602 = vmatpush.msra.mxu0 0.0
        %1603 = vmatpush.msra.mxu0 0.0
        %1604 = vmatpush.msra.mxu0 0.0
        %1605 = vmatpush.msra.mxu0 0.0
        %1606 = vmatpush.msra.mxu0 0.0
        %1607 = vmatpush.msra.mxu0 0.0
        %1608 = vmatpush.msra.mxu0 0.0
        %1609 = vmatpush.msra.mxu0 0.0
        %1610 = vmatpush.msra.mxu0 0.0
        %1611 = vmatpush.msra.mxu0 %v1582
        %1612 = vmatpush.msra.mxu0 %v1581
        %1613 = vmatpush.msra.mxu0 %v1580
        %1614 = vmatpush.msra.mxu0 %v1579
        %1615 = vmatmul.f32.gmra.mxu0 %v1588
        %v1616 = vpop.f32.mrf.mxu0
        %v1617 = vadd.f32 %v1551, %v1616
        %1618 = vmatmul.f32.gmra.mxu0 %v1591
        %v1619 = vpop.f32.mrf.mxu0
        %v1620 = vadd.f32 %v1554, %v1619
        %1621 = vmatmul.f32.gmra.mxu0 %v1594
        %v1622 = vpop.f32.mrf.mxu0
        %v1623 = vadd.f32 %v1557, %v1622
        %1624 = vmatmul.f32.gmra.mxu0 %v1597
        %v1625 = vpop.f32.mrf.mxu0
        %v1626 = vadd.f32 %v1560, %v1625
        %1627 = vdwg.mxu0
        %s1628 = scalar_lea.vmem [#allocation4], 256
        %v1629 = vld [vmem:[%s1628] sm:$0xff]
        %v1630 = vld [vmem:[%s1628 + $0x8] sm:$0xff]
        %v1631 = vld [vmem:[%s1628 + $0x10] sm:$0xff]
        %v1632 = vld [vmem:[%s1628 + $0x18] sm:$0xff]
        %1633 = vrot.lane.b32.xlu0 %v1476, 116
        %v1634 = vpop.permute.xlu0 %1633
        %1635 = vrot.lane.b32.xlu0 %v1477, 116
        %v1636 = vpop.permute.xlu0 %1635
        %1637 = vrot.lane.b32.xlu0 %v1478, 116
        %v1638 = vpop.permute.xlu0 %1637
        %1639 = vrot.lane.b32.xlu0 %v1479, 116
        %v1640 = vpop.permute.xlu0 %1639
        %1641 = vrot.lane.b32.xlu0 %v1480, 116
        %v1642 = vpop.permute.xlu0 %1641
        %1643 = vrot.lane.b32.xlu0 %v1481, 116
        %v1644 = vpop.permute.xlu0 %1643
        %1645 = vrot.lane.b32.xlu0 %v1482, 116
        %v1646 = vpop.permute.xlu0 %1645
        %1647 = vrot.lane.b32.xlu0 %v1483, 116
        %v1648 = vpop.permute.xlu0 %1647
        %vm1649 = vcmask 949248
        %v1650 = vsel %vm1649, %v1634, %v1636
        %v1651 = vsel %vm1649, %v1638, %v1640
        %v1652 = vsel %vm1649, %v1642, %v1644
        %v1653 = vsel %vm1649, %v1646, %v1648
        %v1659 = vsel %vm787, %v1629, 0
        %v1662 = vsel %vm787, %v1630, 0
        %v1665 = vsel %vm787, %v1631, 0
        %v1668 = vsel %vm787, %v1632, 0
        %1670 = vmatpush.msra.mxu0 0.0
        %1671 = vmatpush.msra.mxu0 0.0
        %1672 = vmatpush.msra.mxu0 0.0
        %1673 = vmatpush.msra.mxu0 0.0
        %1674 = vmatpush.msra.mxu0 0.0
        %1675 = vmatpush.msra.mxu0 0.0
        %1676 = vmatpush.msra.mxu0 0.0
        %1677 = vmatpush.msra.mxu0 0.0
        %1678 = vmatpush.msra.mxu0 0.0
        %1679 = vmatpush.msra.mxu0 0.0
        %1680 = vmatpush.msra.mxu0 0.0
        %1681 = vmatpush.msra.mxu0 0.0
        %1682 = vmatpush.msra.mxu0 %v1653
        %1683 = vmatpush.msra.mxu0 %v1652
        %1684 = vmatpush.msra.mxu0 %v1651
        %1685 = vmatpush.msra.mxu0 %v1650
        %1686 = vmatmul.f32.gmra.mxu0 %v1659
        %v1687 = vpop.f32.mrf.mxu0
        %v1688 = vadd.f32 0.0, %v1687
        %1689 = vmatmul.f32.gmra.mxu0 %v1662
        %v1690 = vpop.f32.mrf.mxu0
        %v1691 = vadd.f32 0.0, %v1690
        %1692 = vmatmul.f32.gmra.mxu0 %v1665
        %v1693 = vpop.f32.mrf.mxu0
        %v1694 = vadd.f32 0.0, %v1693
        %1695 = vmatmul.f32.gmra.mxu0 %v1668
        %v1696 = vpop.f32.mrf.mxu0
        %v1697 = vadd.f32 0.0, %v1696
        %1698 = vdwg.mxu0
        %v1699 = vadd.f32 %v1617, %v1688
        %v1700 = vadd.f32 %v1620, %v1691
        %v1701 = vadd.f32 %v1623, %v1694
        %v1702 = vadd.f32 %v1626, %v1697
        %s1703 = scalar_lea.vmem %s5, 64
        %v1704 = vld [vmem:[%s1703] sm:$0xff]
        %v1705 = vld [vmem:[%s1703 + $0x8] sm:$0xff]
        %v1706 = vld [vmem:[%s1703 + $0x10] sm:$0xff]
        %v1707 = vld [vmem:[%s1703 + $0x18] sm:$0xff]
        %1709 = vset.pattern.permute.xlu0 0
        %1710 = vperm.xlu0 %1709, %v1704
        %v1711 = vpop.permute.xlu0 %1710
        %1714 = vset.pattern.permute.xlu0 0
        %1715 = vperm.xlu0 %1714, %v1705
        %v1716 = vpop.permute.xlu0 %1715
        %1719 = vset.pattern.permute.xlu0 0
        %1720 = vperm.xlu0 %1719, %v1706
        %v1721 = vpop.permute.xlu0 %1720
        %1724 = vset.pattern.permute.xlu0 0
        %1725 = vperm.xlu0 %1724, %v1707
        %v1726 = vpop.permute.xlu0 %1725
        %v1728 = vadd.f32 %v1699, %v1711
        %v1729 = vadd.f32 %v1700, %v1716
        %v1730 = vadd.f32 %v1701, %v1721
        %v1731 = vadd.f32 %v1702, %v1726
        %v1732 = vmax.f32 %v1728, 0.0
        %v1733 = vmax.f32 %v1729, 0.0
        %v1734 = vmax.f32 %v1730, 0.0
        %v1735 = vmax.f32 %v1731, 0.0
        %s1736 = scalar_lea.vmem %s6, 64
        %v1737 = vld [vmem:[%s1736] sm:$0xff]
        %v1738 = vld [vmem:[%s1736 + $0x8] sm:$0xff]
        %v1739 = vld [vmem:[%s1736 + $0x10] sm:$0xff]
        %v1740 = vld [vmem:[%s1736 + $0x18] sm:$0xff]
        %s1741 = scalar_lea.vmem %s7, 64
        %v1742 = vld [vmem:[%s1741] sm:$0xff]
        %v1743 = vld [vmem:[%s1741 + $0x8] sm:$0xff]
        %v1744 = vld [vmem:[%s1741 + $0x10] sm:$0xff]
        %v1745 = vld [vmem:[%s1741 + $0x18] sm:$0xff]
        %1747 = vset.pattern.permute.xlu0 0
        %1748 = vperm.xlu0 %1747, %v1742
        %v1749 = vpop.permute.xlu0 %1748
        %1752 = vset.pattern.permute.xlu0 0
        %1753 = vperm.xlu0 %1752, %v1743
        %v1754 = vpop.permute.xlu0 %1753
        %1757 = vset.pattern.permute.xlu0 0
        %1758 = vperm.xlu0 %1757, %v1744
        %v1759 = vpop.permute.xlu0 %1758
        %1762 = vset.pattern.permute.xlu0 0
        %1763 = vperm.xlu0 %1762, %v1745
        %v1764 = vpop.permute.xlu0 %1763
        %v1767 = vsel %vm787, %v1737, 0
        %v1770 = vsel %vm787, %v1738, 0
        %v1773 = vsel %vm787, %v1739, 0
        %v1776 = vsel %vm787, %v1740, 0
        %1778 = vmatpush.msra.mxu0 0.0
        %1779 = vmatpush.msra.mxu0 0.0
        %1780 = vmatpush.msra.mxu0 0.0
        %1781 = vmatpush.msra.mxu0 0.0
        %1782 = vmatpush.msra.mxu0 0.0
        %1783 = vmatpush.msra.mxu0 0.0
        %1784 = vmatpush.msra.mxu0 0.0
        %1785 = vmatpush.msra.mxu0 0.0
        %1786 = vmatpush.msra.mxu0 0.0
        %1787 = vmatpush.msra.mxu0 0.0
        %1788 = vmatpush.msra.mxu0 0.0
        %1789 = vmatpush.msra.mxu0 0.0
        %1790 = vmatpush.msra.mxu0 %v1735
        %1791 = vmatpush.msra.mxu0 %v1734
        %1792 = vmatpush.msra.mxu0 %v1733
        %1793 = vmatpush.msra.mxu0 %v1732
        %1794 = vmatmul.f32.gmra.mxu0 %v1767
        %v1795 = vpop.f32.mrf.mxu0
        %v1796 = vadd.f32 %v1749, %v1795
        %1797 = vmatmul.f32.gmra.mxu0 %v1770
        %v1798 = vpop.f32.mrf.mxu0
        %v1799 = vadd.f32 %v1754, %v1798
        %1800 = vmatmul.f32.gmra.mxu0 %v1773
        %v1801 = vpop.f32.mrf.mxu0
        %v1802 = vadd.f32 %v1759, %v1801
        %1803 = vmatmul.f32.gmra.mxu0 %v1776
        %v1804 = vpop.f32.mrf.mxu0
        %v1805 = vadd.f32 %v1764, %v1804
        %1806 = vdwg.mxu0
        %v1807 = vadd.f32 %v1443, %v1796
        %v1808 = vadd.f32 %v1444, %v1799
        %v1809 = vadd.f32 %v1445, %v1802
        %v1810 = vadd.f32 %v1446, %v1805
        %v1811 = vmul.f32 %v1807, %v556
        %v1812 = vmul.f32 %v1808, %v556
        %v1813 = vmul.f32 %v1809, %v556
        %v1814 = vmul.f32 %v1810, %v556
        %1819 = vrot.lane.b32.xlu0 %v1811, 8
        %v1820 = vpop.permute.xlu0 %1819
        %1821 = vrot.lane.b32.xlu0 %v1812, 8
        %v1822 = vpop.permute.xlu0 %1821
        %1823 = vrot.lane.b32.xlu0 %v1813, 8
        %v1824 = vpop.permute.xlu0 %1823
        %1825 = vrot.lane.b32.xlu0 %v1814, 8
        %v1826 = vpop.permute.xlu0 %1825
        %1831 = vst.msk [vmem:[#allocation2] sm:$0xff] %vm728, %v1820
        %1832 = vst.msk [vmem:[#allocation2 + $0x8] sm:$0xff] %vm693, %v1820
        %1833 = vst.msk [vmem:[#allocation2 + $0x10] sm:$0xff] %vm728, %v1822
        %1834 = vst.msk [vmem:[#allocation2 + $0x18] sm:$0xff] %vm693, %v1822
        %1835 = vst.msk [vmem:[#allocation2 + $0x20] sm:$0xff] %vm728, %v1824
        %1836 = vst.msk [vmem:[#allocation2 + $0x28] sm:$0xff] %vm693, %v1824
        %1837 = vst.msk [vmem:[#allocation2 + $0x30] sm:$0xff] %vm728, %v1826
        %1838 = vst.msk [vmem:[#allocation2 + $0x38] sm:$0xff] %vm693, %v1826
        %s1839 = scalar_lea.vmem [#allocation4], 288
        %v1840 = vld [vmem:[%s1839] sm:$0xff]
        %v1841 = vld [vmem:[%s1839 + $0x8] sm:$0xff]
        %v1842 = vld [vmem:[%s1839 + $0x10] sm:$0xff]
        %v1843 = vld [vmem:[%s1839 + $0x18] sm:$0xff]
        %v1844 = vld [vmem:[#allocation2] sm:$0xff]
        %v1845 = vld [vmem:[#allocation2 + $0x10] sm:$0xff]
        %v1846 = vld [vmem:[#allocation2 + $0x20] sm:$0xff]
        %v1847 = vld [vmem:[#allocation2 + $0x30] sm:$0xff]
        %s1848 = scalar_lea.vmem [#allocation4], 320
        %v1849 = vld [vmem:[%s1848] sm:$0xff]
        %v1850 = vld [vmem:[%s1848 + $0x8] sm:$0xff]
        %v1851 = vld [vmem:[%s1848 + $0x10] sm:$0xff]
        %v1852 = vld [vmem:[%s1848 + $0x18] sm:$0xff]
        %v1853 = vld [vmem:[#allocation2 + $0x8] sm:$0xff]
        %v1854 = vld [vmem:[#allocation2 + $0x18] sm:$0xff]
        %v1855 = vld [vmem:[#allocation2 + $0x28] sm:$0xff]
        %v1856 = vld [vmem:[#allocation2 + $0x38] sm:$0xff]
        %1865 = vrot.lane.b32.xlu0 %v1844, 120
        %v1866 = vpop.permute.xlu0 %1865
        %1867 = vrot.lane.b32.xlu0 %v1853, 120
        %v1868 = vpop.permute.xlu0 %1867
        %1869 = vrot.lane.b32.xlu0 %v1845, 120
        %v1870 = vpop.permute.xlu0 %1869
        %1871 = vrot.lane.b32.xlu0 %v1854, 120
        %v1872 = vpop.permute.xlu0 %1871
        %1873 = vrot.lane.b32.xlu0 %v1846, 120
        %v1874 = vpop.permute.xlu0 %1873
        %1875 = vrot.lane.b32.xlu0 %v1855, 120
        %v1876 = vpop.permute.xlu0 %1875
        %1877 = vrot.lane.b32.xlu0 %v1847, 120
        %v1878 = vpop.permute.xlu0 %1877
        %1879 = vrot.lane.b32.xlu0 %v1856, 120
        %v1880 = vpop.permute.xlu0 %1879
        %v1881 = vsel %vm778, %v1866, %v1868
        %v1882 = vsel %vm778, %v1870, %v1872
        %v1883 = vsel %vm778, %v1874, %v1876
        %v1884 = vsel %vm778, %v1878, %v1880
        %v1890 = vsel %vm787, %v1849, 0
        %v1893 = vsel %vm787, %v1850, 0
        %v1896 = vsel %vm787, %v1851, 0
        %v1899 = vsel %vm787, %v1852, 0
        %1901 = vmatpush.msra.mxu0 0.0
        %1902 = vmatpush.msra.mxu0 0.0
        %1903 = vmatpush.msra.mxu0 0.0
        %1904 = vmatpush.msra.mxu0 0.0
        %1905 = vmatpush.msra.mxu0 0.0
        %1906 = vmatpush.msra.mxu0 0.0
        %1907 = vmatpush.msra.mxu0 0.0
        %1908 = vmatpush.msra.mxu0 0.0
        %1909 = vmatpush.msra.mxu0 0.0
        %1910 = vmatpush.msra.mxu0 0.0
        %1911 = vmatpush.msra.mxu0 0.0
        %1912 = vmatpush.msra.mxu0 0.0
        %1913 = vmatpush.msra.mxu0 %v1884
        %1914 = vmatpush.msra.mxu0 %v1883
        %1915 = vmatpush.msra.mxu0 %v1882
        %1916 = vmatpush.msra.mxu0 %v1881
        %1917 = vmatmul.f32.gmra.mxu0 %v1890
        %v1918 = vpop.f32.mrf.mxu0
        %v1919 = vadd.f32 0.0, %v1918
        %1920 = vmatmul.f32.gmra.mxu0 %v1893
        %v1921 = vpop.f32.mrf.mxu0
        %v1922 = vadd.f32 0.0, %v1921
        %1923 = vmatmul.f32.gmra.mxu0 %v1896
        %v1924 = vpop.f32.mrf.mxu0
        %v1925 = vadd.f32 0.0, %v1924
        %1926 = vmatmul.f32.gmra.mxu0 %v1899
        %v1927 = vpop.f32.mrf.mxu0
        %v1928 = vadd.f32 0.0, %v1927
        %1929 = vdwg.mxu0
        %v1931 = vsel %vm787, %v1840, 0
        %v1934 = vsel %vm787, %v1841, 0
        %v1937 = vsel %vm787, %v1842, 0
        %v1940 = vsel %vm787, %v1843, 0
        %1942 = vmatpush.msra.mxu0 0.0
        %1943 = vmatpush.msra.mxu0 0.0
        %1944 = vmatpush.msra.mxu0 0.0
        %1945 = vmatpush.msra.mxu0 0.0
        %1946 = vmatpush.msra.mxu0 0.0
        %1947 = vmatpush.msra.mxu0 0.0
        %1948 = vmatpush.msra.mxu0 0.0
        %1949 = vmatpush.msra.mxu0 0.0
        %1950 = vmatpush.msra.mxu0 0.0
        %1951 = vmatpush.msra.mxu0 0.0
        %1952 = vmatpush.msra.mxu0 0.0
        %1953 = vmatpush.msra.mxu0 0.0
        %1954 = vmatpush.msra.mxu0 %v1847
        %1955 = vmatpush.msra.mxu0 %v1846
        %1956 = vmatpush.msra.mxu0 %v1845
        %1957 = vmatpush.msra.mxu0 %v1844
        %1958 = vmatmul.f32.gmra.mxu0 %v1931
        %v1959 = vpop.f32.mrf.mxu0
        %v1960 = vadd.f32 %v1919, %v1959
        %1961 = vmatmul.f32.gmra.mxu0 %v1934
        %v1962 = vpop.f32.mrf.mxu0
        %v1963 = vadd.f32 %v1922, %v1962
        %1964 = vmatmul.f32.gmra.mxu0 %v1937
        %v1965 = vpop.f32.mrf.mxu0
        %v1966 = vadd.f32 %v1925, %v1965
        %1967 = vmatmul.f32.gmra.mxu0 %v1940
        %v1968 = vpop.f32.mrf.mxu0
        %v1969 = vadd.f32 %v1928, %v1968
        %1970 = vdwg.mxu0
        %s1971 = scalar_lea.vmem [#allocation4], 352
        %v1972 = vld [vmem:[%s1971] sm:$0xff]
        %v1973 = vld [vmem:[%s1971 + $0x8] sm:$0xff]
        %v1974 = vld [vmem:[%s1971 + $0x10] sm:$0xff]
        %v1975 = vld [vmem:[%s1971 + $0x18] sm:$0xff]
        %1976 = vrot.lane.b32.xlu0 %v1844, 112
        %v1977 = vpop.permute.xlu0 %1976
        %1978 = vrot.lane.b32.xlu0 %v1853, 112
        %v1979 = vpop.permute.xlu0 %1978
        %1980 = vrot.lane.b32.xlu0 %v1845, 112
        %v1981 = vpop.permute.xlu0 %1980
        %1982 = vrot.lane.b32.xlu0 %v1854, 112
        %v1983 = vpop.permute.xlu0 %1982
        %1984 = vrot.lane.b32.xlu0 %v1846, 112
        %v1985 = vpop.permute.xlu0 %1984
        %1986 = vrot.lane.b32.xlu0 %v1855, 112
        %v1987 = vpop.permute.xlu0 %1986
        %1988 = vrot.lane.b32.xlu0 %v1847, 112
        %v1989 = vpop.permute.xlu0 %1988
        %1990 = vrot.lane.b32.xlu0 %v1856, 112
        %v1991 = vpop.permute.xlu0 %1990
        %vm1992 = vcmask 916480
        %v1993 = vsel %vm1992, %v1977, %v1979
        %v1994 = vsel %vm1992, %v1981, %v1983
        %v1995 = vsel %vm1992, %v1985, %v1987
        %v1996 = vsel %vm1992, %v1989, %v1991
        %v2002 = vsel %vm787, %v1972, 0
        %v2005 = vsel %vm787, %v1973, 0
        %v2008 = vsel %vm787, %v1974, 0
        %v2011 = vsel %vm787, %v1975, 0
        %2013 = vmatpush.msra.mxu0 0.0
        %2014 = vmatpush.msra.mxu0 0.0
        %2015 = vmatpush.msra.mxu0 0.0
        %2016 = vmatpush.msra.mxu0 0.0
        %2017 = vmatpush.msra.mxu0 0.0
        %2018 = vmatpush.msra.mxu0 0.0
        %2019 = vmatpush.msra.mxu0 0.0
        %2020 = vmatpush.msra.mxu0 0.0
        %2021 = vmatpush.msra.mxu0 0.0
        %2022 = vmatpush.msra.mxu0 0.0
        %2023 = vmatpush.msra.mxu0 0.0
        %2024 = vmatpush.msra.mxu0 0.0
        %2025 = vmatpush.msra.mxu0 %v1996
        %2026 = vmatpush.msra.mxu0 %v1995
        %2027 = vmatpush.msra.mxu0 %v1994
        %2028 = vmatpush.msra.mxu0 %v1993
        %2029 = vmatmul.f32.gmra.mxu0 %v2002
        %v2030 = vpop.f32.mrf.mxu0
        %v2031 = vadd.f32 0.0, %v2030
        %2032 = vmatmul.f32.gmra.mxu0 %v2005
        %v2033 = vpop.f32.mrf.mxu0
        %v2034 = vadd.f32 0.0, %v2033
        %2035 = vmatmul.f32.gmra.mxu0 %v2008
        %v2036 = vpop.f32.mrf.mxu0
        %v2037 = vadd.f32 0.0, %v2036
        %2038 = vmatmul.f32.gmra.mxu0 %v2011
        %v2039 = vpop.f32.mrf.mxu0
        %v2040 = vadd.f32 0.0, %v2039
        %2041 = vdwg.mxu0
        %v2042 = vadd.f32 %v1960, %v2031
        %v2043 = vadd.f32 %v1963, %v2034
        %v2044 = vadd.f32 %v1966, %v2037
        %v2045 = vadd.f32 %v1969, %v2040
        %s2046 = scalar_lea.vmem %s5, 96
        %v2047 = vld [vmem:[%s2046] sm:$0xff]
        %v2048 = vld [vmem:[%s2046 + $0x8] sm:$0xff]
        %v2049 = vld [vmem:[%s2046 + $0x10] sm:$0xff]
        %v2050 = vld [vmem:[%s2046 + $0x18] sm:$0xff]
        %2052 = vset.pattern.permute.xlu0 0
        %2053 = vperm.xlu0 %2052, %v2047
        %v2054 = vpop.permute.xlu0 %2053
        %2057 = vset.pattern.permute.xlu0 0
        %2058 = vperm.xlu0 %2057, %v2048
        %v2059 = vpop.permute.xlu0 %2058
        %2062 = vset.pattern.permute.xlu0 0
        %2063 = vperm.xlu0 %2062, %v2049
        %v2064 = vpop.permute.xlu0 %2063
        %2067 = vset.pattern.permute.xlu0 0
        %2068 = vperm.xlu0 %2067, %v2050
        %v2069 = vpop.permute.xlu0 %2068
        %v2071 = vadd.f32 %v2042, %v2054
        %v2072 = vadd.f32 %v2043, %v2059
        %v2073 = vadd.f32 %v2044, %v2064
        %v2074 = vadd.f32 %v2045, %v2069
        %v2075 = vmax.f32 %v2071, 0.0
        %v2076 = vmax.f32 %v2072, 0.0
        %v2077 = vmax.f32 %v2073, 0.0
        %v2078 = vmax.f32 %v2074, 0.0
        %s2079 = scalar_lea.vmem %s6, 96
        %v2080 = vld [vmem:[%s2079] sm:$0xff]
        %v2081 = vld [vmem:[%s2079 + $0x8] sm:$0xff]
        %v2082 = vld [vmem:[%s2079 + $0x10] sm:$0xff]
        %v2083 = vld [vmem:[%s2079 + $0x18] sm:$0xff]
        %s2084 = scalar_lea.vmem %s7, 96
        %v2085 = vld [vmem:[%s2084] sm:$0xff]
        %v2086 = vld [vmem:[%s2084 + $0x8] sm:$0xff]
        %v2087 = vld [vmem:[%s2084 + $0x10] sm:$0xff]
        %v2088 = vld [vmem:[%s2084 + $0x18] sm:$0xff]
        %2090 = vset.pattern.permute.xlu0 0
        %2091 = vperm.xlu0 %2090, %v2085
        %v2092 = vpop.permute.xlu0 %2091
        %2095 = vset.pattern.permute.xlu0 0
        %2096 = vperm.xlu0 %2095, %v2086
        %v2097 = vpop.permute.xlu0 %2096
        %2100 = vset.pattern.permute.xlu0 0
        %2101 = vperm.xlu0 %2100, %v2087
        %v2102 = vpop.permute.xlu0 %2101
        %2105 = vset.pattern.permute.xlu0 0
        %2106 = vperm.xlu0 %2105, %v2088
        %v2107 = vpop.permute.xlu0 %2106
        %v2110 = vsel %vm787, %v2080, 0
        %v2113 = vsel %vm787, %v2081, 0
        %v2116 = vsel %vm787, %v2082, 0
        %v2119 = vsel %vm787, %v2083, 0
        %2121 = vmatpush.msra.mxu0 0.0
        %2122 = vmatpush.msra.mxu0 0.0
        %2123 = vmatpush.msra.mxu0 0.0
        %2124 = vmatpush.msra.mxu0 0.0
        %2125 = vmatpush.msra.mxu0 0.0
        %2126 = vmatpush.msra.mxu0 0.0
        %2127 = vmatpush.msra.mxu0 0.0
        %2128 = vmatpush.msra.mxu0 0.0
        %2129 = vmatpush.msra.mxu0 0.0
        %2130 = vmatpush.msra.mxu0 0.0
        %2131 = vmatpush.msra.mxu0 0.0
        %2132 = vmatpush.msra.mxu0 0.0
        %2133 = vmatpush.msra.mxu0 %v2078
        %2134 = vmatpush.msra.mxu0 %v2077
        %2135 = vmatpush.msra.mxu0 %v2076
        %2136 = vmatpush.msra.mxu0 %v2075
        %2137 = vmatmul.f32.gmra.mxu0 %v2110
        %v2138 = vpop.f32.mrf.mxu0
        %v2139 = vadd.f32 %v2092, %v2138
        %2140 = vmatmul.f32.gmra.mxu0 %v2113
        %v2141 = vpop.f32.mrf.mxu0
        %v2142 = vadd.f32 %v2097, %v2141
        %2143 = vmatmul.f32.gmra.mxu0 %v2116
        %v2144 = vpop.f32.mrf.mxu0
        %v2145 = vadd.f32 %v2102, %v2144
        %2146 = vmatmul.f32.gmra.mxu0 %v2119
        %v2147 = vpop.f32.mrf.mxu0
        %v2148 = vadd.f32 %v2107, %v2147
        %2149 = vdwg.mxu0
        %v2150 = vadd.f32 %v1811, %v2139
        %v2151 = vadd.f32 %v1812, %v2142
        %v2152 = vadd.f32 %v1813, %v2145
        %v2153 = vadd.f32 %v1814, %v2148
        %v2154 = vmul.f32 %v2150, %v556
        %v2155 = vmul.f32 %v2151, %v556
        %v2156 = vmul.f32 %v2152, %v556
        %v2157 = vmul.f32 %v2153, %v556
        %2162 = vrot.lane.b32.xlu0 %v689, 16
        %v2163 = vpop.permute.xlu0 %2162
        %2164 = vrot.lane.b32.xlu0 %v690, 16
        %v2165 = vpop.permute.xlu0 %2164
        %2166 = vrot.lane.b32.xlu0 %v691, 16
        %v2167 = vpop.permute.xlu0 %2166
        %2168 = vrot.lane.b32.xlu0 %v692, 16
        %v2169 = vpop.permute.xlu0 %2168
        %vm2174 = vcmask 1047680
        %2175 = vst.msk [vmem:[#allocation3] sm:$0xff] %vm2174, %v2163
        %2176 = vst.msk [vmem:[#allocation3 + $0x8] sm:$0xff] %vm614, %v2163
        %2177 = vst.msk [vmem:[#allocation3 + $0x10] sm:$0xff] %vm2174, %v2165
        %2178 = vst.msk [vmem:[#allocation3 + $0x18] sm:$0xff] %vm614, %v2165
        %2179 = vst.msk [vmem:[#allocation3 + $0x20] sm:$0xff] %vm2174, %v2167
        %2180 = vst.msk [vmem:[#allocation3 + $0x28] sm:$0xff] %vm614, %v2167
        %2181 = vst.msk [vmem:[#allocation3 + $0x30] sm:$0xff] %vm2174, %v2169
        %2182 = vst.msk [vmem:[#allocation3 + $0x38] sm:$0xff] %vm614, %v2169
        %v2183 = vld [vmem:[#allocation7] sm:$0xff]
        %v2184 = vld [vmem:[#allocation7 + $0x8] sm:$0xff]
        %v2185 = vld [vmem:[#allocation7 + $0x10] sm:$0xff]
        %v2186 = vld [vmem:[#allocation7 + $0x18] sm:$0xff]
        %v2187 = vld [vmem:[#allocation3] sm:$0xff]
        %v2188 = vld [vmem:[#allocation3 + $0x8] sm:$0xff]
        %v2189 = vld [vmem:[#allocation3 + $0x10] sm:$0xff]
        %v2190 = vld [vmem:[#allocation3 + $0x18] sm:$0xff]
        %v2191 = vld [vmem:[#allocation3 + $0x20] sm:$0xff]
        %v2192 = vld [vmem:[#allocation3 + $0x28] sm:$0xff]
        %v2193 = vld [vmem:[#allocation3 + $0x30] sm:$0xff]
        %v2194 = vld [vmem:[#allocation3 + $0x38] sm:$0xff]
        %s2195 = scalar_lea.vmem [#allocation7], 32
        %v2196 = vld [vmem:[%s2195] sm:$0xff]
        %v2197 = vld [vmem:[%s2195 + $0x8] sm:$0xff]
        %v2198 = vld [vmem:[%s2195 + $0x10] sm:$0xff]
        %v2199 = vld [vmem:[%s2195 + $0x18] sm:$0xff]
        %2208 = vrot.lane.b32.xlu0 %v2187, 113
        %v2209 = vpop.permute.xlu0 %2208
        %2210 = vrot.lane.b32.xlu0 %v2188, 113
        %v2211 = vpop.permute.xlu0 %2210
        %2212 = vrot.lane.b32.xlu0 %v2189, 113
        %v2213 = vpop.permute.xlu0 %2212
        %2214 = vrot.lane.b32.xlu0 %v2190, 113
        %v2215 = vpop.permute.xlu0 %2214
        %2216 = vrot.lane.b32.xlu0 %v2191, 113
        %v2217 = vpop.permute.xlu0 %2216
        %2218 = vrot.lane.b32.xlu0 %v2192, 113
        %v2219 = vpop.permute.xlu0 %2218
        %2220 = vrot.lane.b32.xlu0 %v2193, 113
        %v2221 = vpop.permute.xlu0 %2220
        %2222 = vrot.lane.b32.xlu0 %v2194, 113
        %v2223 = vpop.permute.xlu0 %2222
        %vm2224 = vcmask 924672
        %v2225 = vsel %vm2224, %v2209, %v2211
        %v2226 = vsel %vm2224, %v2213, %v2215
        %v2227 = vsel %vm2224, %v2217, %v2219
        %v2228 = vsel %vm2224, %v2221, %v2223
        %v2234 = vsel %vm787, %v2196, 0
        %v2237 = vsel %vm787, %v2197, 0
        %v2240 = vsel %vm787, %v2198, 0
        %v2243 = vsel %vm787, %v2199, 0
        %2245 = vmatpush.msra.mxu0 0.0
        %2246 = vmatpush.msra.mxu0 0.0
        %2247 = vmatpush.msra.mxu0 0.0
        %2248 = vmatpush.msra.mxu0 0.0
        %2249 = vmatpush.msra.mxu0 0.0
        %2250 = vmatpush.msra.mxu0 0.0
        %2251 = vmatpush.msra.mxu0 0.0
        %2252 = vmatpush.msra.mxu0 0.0
        %2253 = vmatpush.msra.mxu0 0.0
        %2254 = vmatpush.msra.mxu0 0.0
        %2255 = vmatpush.msra.mxu0 0.0
        %2256 = vmatpush.msra.mxu0 0.0
        %2257 = vmatpush.msra.mxu0 %v2228
        %2258 = vmatpush.msra.mxu0 %v2227
        %2259 = vmatpush.msra.mxu0 %v2226
        %2260 = vmatpush.msra.mxu0 %v2225
        %2261 = vmatmul.f32.gmra.mxu0 %v2234
        %v2262 = vpop.f32.mrf.mxu0
        %v2263 = vadd.f32 0.0, %v2262
        %2264 = vmatmul.f32.gmra.mxu0 %v2237
        %v2265 = vpop.f32.mrf.mxu0
        %v2266 = vadd.f32 0.0, %v2265
        %2267 = vmatmul.f32.gmra.mxu0 %v2240
        %v2268 = vpop.f32.mrf.mxu0
        %v2269 = vadd.f32 0.0, %v2268
        %2270 = vmatmul.f32.gmra.mxu0 %v2243
        %v2271 = vpop.f32.mrf.mxu0
        %v2272 = vadd.f32 0.0, %v2271
        %2273 = vdwg.mxu0
        %2274 = vrot.lane.b32.xlu0 %v2187, 114
        %v2275 = vpop.permute.xlu0 %2274
        %2276 = vrot.lane.b32.xlu0 %v2188, 114
        %v2277 = vpop.permute.xlu0 %2276
        %2278 = vrot.lane.b32.xlu0 %v2189, 114
        %v2279 = vpop.permute.xlu0 %2278
        %2280 = vrot.lane.b32.xlu0 %v2190, 114
        %v2281 = vpop.permute.xlu0 %2280
        %2282 = vrot.lane.b32.xlu0 %v2191, 114
        %v2283 = vpop.permute.xlu0 %2282
        %2284 = vrot.lane.b32.xlu0 %v2192, 114
        %v2285 = vpop.permute.xlu0 %2284
        %2286 = vrot.lane.b32.xlu0 %v2193, 114
        %v2287 = vpop.permute.xlu0 %2286
        %2288 = vrot.lane.b32.xlu0 %v2194, 114
        %v2289 = vpop.permute.xlu0 %2288
        %vm2290 = vcmask 932864
        %v2291 = vsel %vm2290, %v2275, %v2277
        %v2292 = vsel %vm2290, %v2279, %v2281
        %v2293 = vsel %vm2290, %v2283, %v2285
        %v2294 = vsel %vm2290, %v2287, %v2289
        %v2300 = vsel %vm787, %v2183, 0
        %v2303 = vsel %vm787, %v2184, 0
        %v2306 = vsel %vm787, %v2185, 0
        %v2309 = vsel %vm787, %v2186, 0
        %2311 = vmatpush.msra.mxu0 0.0
        %2312 = vmatpush.msra.mxu0 0.0
        %2313 = vmatpush.msra.mxu0 0.0
        %2314 = vmatpush.msra.mxu0 0.0
        %2315 = vmatpush.msra.mxu0 0.0
        %2316 = vmatpush.msra.mxu0 0.0
        %2317 = vmatpush.msra.mxu0 0.0
        %2318 = vmatpush.msra.mxu0 0.0
        %2319 = vmatpush.msra.mxu0 0.0
        %2320 = vmatpush.msra.mxu0 0.0
        %2321 = vmatpush.msra.mxu0 0.0
        %2322 = vmatpush.msra.mxu0 0.0
        %2323 = vmatpush.msra.mxu0 %v2294
        %2324 = vmatpush.msra.mxu0 %v2293
        %2325 = vmatpush.msra.mxu0 %v2292
        %2326 = vmatpush.msra.mxu0 %v2291
        %2327 = vmatmul.f32.gmra.mxu0 %v2300
        %v2328 = vpop.f32.mrf.mxu0
        %v2329 = vadd.f32 %v2263, %v2328
        %2330 = vmatmul.f32.gmra.mxu0 %v2303
        %v2331 = vpop.f32.mrf.mxu0
        %v2332 = vadd.f32 %v2266, %v2331
        %2333 = vmatmul.f32.gmra.mxu0 %v2306
        %v2334 = vpop.f32.mrf.mxu0
        %v2335 = vadd.f32 %v2269, %v2334
        %2336 = vmatmul.f32.gmra.mxu0 %v2309
        %v2337 = vpop.f32.mrf.mxu0
        %v2338 = vadd.f32 %v2272, %v2337
        %2339 = vdwg.mxu0
        %s2340 = scalar_lea.vmem [#allocation7], 64
        %v2341 = vld [vmem:[%s2340] sm:$0xff]
        %v2342 = vld [vmem:[%s2340 + $0x8] sm:$0xff]
        %v2343 = vld [vmem:[%s2340 + $0x10] sm:$0xff]
        %v2344 = vld [vmem:[%s2340 + $0x18] sm:$0xff]
        %2345 = vrot.lane.b32.xlu0 %v2187, 112
        %v2346 = vpop.permute.xlu0 %2345
        %2347 = vrot.lane.b32.xlu0 %v2188, 112
        %v2348 = vpop.permute.xlu0 %2347
        %2349 = vrot.lane.b32.xlu0 %v2189, 112
        %v2350 = vpop.permute.xlu0 %2349
        %2351 = vrot.lane.b32.xlu0 %v2190, 112
        %v2352 = vpop.permute.xlu0 %2351
        %2353 = vrot.lane.b32.xlu0 %v2191, 112
        %v2354 = vpop.permute.xlu0 %2353
        %2355 = vrot.lane.b32.xlu0 %v2192, 112
        %v2356 = vpop.permute.xlu0 %2355
        %2357 = vrot.lane.b32.xlu0 %v2193, 112
        %v2358 = vpop.permute.xlu0 %2357
        %2359 = vrot.lane.b32.xlu0 %v2194, 112
        %v2360 = vpop.permute.xlu0 %2359
        %v2361 = vsel %vm1992, %v2346, %v2348
        %v2362 = vsel %vm1992, %v2350, %v2352
        %v2363 = vsel %vm1992, %v2354, %v2356
        %v2364 = vsel %vm1992, %v2358, %v2360
        %v2370 = vsel %vm787, %v2341, 0
        %v2373 = vsel %vm787, %v2342, 0
        %v2376 = vsel %vm787, %v2343, 0
        %v2379 = vsel %vm787, %v2344, 0
        %2381 = vmatpush.msra.mxu0 0.0
        %2382 = vmatpush.msra.mxu0 0.0
        %2383 = vmatpush.msra.mxu0 0.0
        %2384 = vmatpush.msra.mxu0 0.0
        %2385 = vmatpush.msra.mxu0 0.0
        %2386 = vmatpush.msra.mxu0 0.0
        %2387 = vmatpush.msra.mxu0 0.0
        %2388 = vmatpush.msra.mxu0 0.0
        %2389 = vmatpush.msra.mxu0 0.0
        %2390 = vmatpush.msra.mxu0 0.0
        %2391 = vmatpush.msra.mxu0 0.0
        %2392 = vmatpush.msra.mxu0 0.0
        %2393 = vmatpush.msra.mxu0 %v2364
        %2394 = vmatpush.msra.mxu0 %v2363
        %2395 = vmatpush.msra.mxu0 %v2362
        %2396 = vmatpush.msra.mxu0 %v2361
        %2397 = vmatmul.f32.gmra.mxu0 %v2370
        %v2398 = vpop.f32.mrf.mxu0
        %v2399 = vadd.f32 0.0, %v2398
        %2400 = vmatmul.f32.gmra.mxu0 %v2373
        %v2401 = vpop.f32.mrf.mxu0
        %v2402 = vadd.f32 0.0, %v2401
        %2403 = vmatmul.f32.gmra.mxu0 %v2376
        %v2404 = vpop.f32.mrf.mxu0
        %v2405 = vadd.f32 0.0, %v2404
        %2406 = vmatmul.f32.gmra.mxu0 %v2379
        %v2407 = vpop.f32.mrf.mxu0
        %v2408 = vadd.f32 0.0, %v2407
        %2409 = vdwg.mxu0
        %v2410 = vadd.f32 %v2329, %v2399
        %v2411 = vadd.f32 %v2332, %v2402
        %v2412 = vadd.f32 %v2335, %v2405
        %v2413 = vadd.f32 %v2338, %v2408
        %s2414 = scalar_lea.vmem [#allocation7], 96
        %v2415 = vld [vmem:[%s2414] sm:$0xff]
        %v2416 = vld [vmem:[%s2414 + $0x8] sm:$0xff]
        %v2417 = vld [vmem:[%s2414 + $0x10] sm:$0xff]
        %v2418 = vld [vmem:[%s2414 + $0x18] sm:$0xff]
        %2419 = vrot.lane.b32.xlu0 %v2187, 111
        %v2420 = vpop.permute.xlu0 %2419
        %2421 = vrot.lane.b32.xlu0 %v2188, 111
        %v2422 = vpop.permute.xlu0 %2421
        %2423 = vrot.lane.b32.xlu0 %v2189, 111
        %v2424 = vpop.permute.xlu0 %2423
        %2425 = vrot.lane.b32.xlu0 %v2190, 111
        %v2426 = vpop.permute.xlu0 %2425
        %2427 = vrot.lane.b32.xlu0 %v2191, 111
        %v2428 = vpop.permute.xlu0 %2427
        %2429 = vrot.lane.b32.xlu0 %v2192, 111
        %v2430 = vpop.permute.xlu0 %2429
        %2431 = vrot.lane.b32.xlu0 %v2193, 111
        %v2432 = vpop.permute.xlu0 %2431
        %2433 = vrot.lane.b32.xlu0 %v2194, 111
        %v2434 = vpop.permute.xlu0 %2433
        %vm2435 = vcmask 908288
        %v2436 = vsel %vm2435, %v2420, %v2422
        %v2437 = vsel %vm2435, %v2424, %v2426
        %v2438 = vsel %vm2435, %v2428, %v2430
        %v2439 = vsel %vm2435, %v2432, %v2434
        %v2445 = vsel %vm787, %v2415, 0
        %v2448 = vsel %vm787, %v2416, 0
        %v2451 = vsel %vm787, %v2417, 0
        %v2454 = vsel %vm787, %v2418, 0
        %2456 = vmatpush.msra.mxu0 0.0
        %2457 = vmatpush.msra.mxu0 0.0
        %2458 = vmatpush.msra.mxu0 0.0
        %2459 = vmatpush.msra.mxu0 0.0
        %2460 = vmatpush.msra.mxu0 0.0
        %2461 = vmatpush.msra.mxu0 0.0
        %2462 = vmatpush.msra.mxu0 0.0
        %2463 = vmatpush.msra.mxu0 0.0
        %2464 = vmatpush.msra.mxu0 0.0
        %2465 = vmatpush.msra.mxu0 0.0
        %2466 = vmatpush.msra.mxu0 0.0
        %2467 = vmatpush.msra.mxu0 0.0
        %2468 = vmatpush.msra.mxu0 %v2439
        %2469 = vmatpush.msra.mxu0 %v2438
        %2470 = vmatpush.msra.mxu0 %v2437
        %2471 = vmatpush.msra.mxu0 %v2436
        %2472 = vmatmul.f32.gmra.mxu0 %v2445
        %v2473 = vpop.f32.mrf.mxu0
        %v2474 = vadd.f32 0.0, %v2473
        %2475 = vmatmul.f32.gmra.mxu0 %v2448
        %v2476 = vpop.f32.mrf.mxu0
        %v2477 = vadd.f32 0.0, %v2476
        %2478 = vmatmul.f32.gmra.mxu0 %v2451
        %v2479 = vpop.f32.mrf.mxu0
        %v2480 = vadd.f32 0.0, %v2479
        %2481 = vmatmul.f32.gmra.mxu0 %v2454
        %v2482 = vpop.f32.mrf.mxu0
        %v2483 = vadd.f32 0.0, %v2482
        %2484 = vdwg.mxu0
        %v2485 = vadd.f32 %v2410, %v2474
        %v2486 = vadd.f32 %v2411, %v2477
        %v2487 = vadd.f32 %v2412, %v2480
        %v2488 = vadd.f32 %v2413, %v2483
        %s2489 = scalar_lea.vmem [#allocation7], 128
        %v2490 = vld [vmem:[%s2489] sm:$0xff]
        %v2491 = vld [vmem:[%s2489 + $0x8] sm:$0xff]
        %v2492 = vld [vmem:[%s2489 + $0x10] sm:$0xff]
        %v2493 = vld [vmem:[%s2489 + $0x18] sm:$0xff]
        %2494 = vrot.lane.b32.xlu0 %v2187, 110
        %v2495 = vpop.permute.xlu0 %2494
        %2496 = vrot.lane.b32.xlu0 %v2188, 110
        %v2497 = vpop.permute.xlu0 %2496
        %2498 = vrot.lane.b32.xlu0 %v2189, 110
        %v2499 = vpop.permute.xlu0 %2498
        %2500 = vrot.lane.b32.xlu0 %v2190, 110
        %v2501 = vpop.permute.xlu0 %2500
        %2502 = vrot.lane.b32.xlu0 %v2191, 110
        %v2503 = vpop.permute.xlu0 %2502
        %2504 = vrot.lane.b32.xlu0 %v2192, 110
        %v2505 = vpop.permute.xlu0 %2504
        %2506 = vrot.lane.b32.xlu0 %v2193, 110
        %v2507 = vpop.permute.xlu0 %2506
        %2508 = vrot.lane.b32.xlu0 %v2194, 110
        %v2509 = vpop.permute.xlu0 %2508
        %vm2510 = vcmask 900096
        %v2511 = vsel %vm2510, %v2495, %v2497
        %v2512 = vsel %vm2510, %v2499, %v2501
        %v2513 = vsel %vm2510, %v2503, %v2505
        %v2514 = vsel %vm2510, %v2507, %v2509
        %v2520 = vsel %vm787, %v2490, 0
        %v2523 = vsel %vm787, %v2491, 0
        %v2526 = vsel %vm787, %v2492, 0
        %v2529 = vsel %vm787, %v2493, 0
        %2531 = vmatpush.msra.mxu0 0.0
        %2532 = vmatpush.msra.mxu0 0.0
        %2533 = vmatpush.msra.mxu0 0.0
        %2534 = vmatpush.msra.mxu0 0.0
        %2535 = vmatpush.msra.mxu0 0.0
        %2536 = vmatpush.msra.mxu0 0.0
        %2537 = vmatpush.msra.mxu0 0.0
        %2538 = vmatpush.msra.mxu0 0.0
        %2539 = vmatpush.msra.mxu0 0.0
        %2540 = vmatpush.msra.mxu0 0.0
        %2541 = vmatpush.msra.mxu0 0.0
        %2542 = vmatpush.msra.mxu0 0.0
        %2543 = vmatpush.msra.mxu0 %v2514
        %2544 = vmatpush.msra.mxu0 %v2513
        %2545 = vmatpush.msra.mxu0 %v2512
        %2546 = vmatpush.msra.mxu0 %v2511
        %2547 = vmatmul.f32.gmra.mxu0 %v2520
        %v2548 = vpop.f32.mrf.mxu0
        %v2549 = vadd.f32 0.0, %v2548
        %2550 = vmatmul.f32.gmra.mxu0 %v2523
        %v2551 = vpop.f32.mrf.mxu0
        %v2552 = vadd.f32 0.0, %v2551
        %2553 = vmatmul.f32.gmra.mxu0 %v2526
        %v2554 = vpop.f32.mrf.mxu0
        %v2555 = vadd.f32 0.0, %v2554
        %2556 = vmatmul.f32.gmra.mxu0 %v2529
        %v2557 = vpop.f32.mrf.mxu0
        %v2558 = vadd.f32 0.0, %v2557
        %2559 = vdwg.mxu0
        %v2560 = vadd.f32 %v2485, %v2549
        %v2561 = vadd.f32 %v2486, %v2552
        %v2562 = vadd.f32 %v2487, %v2555
        %v2563 = vadd.f32 %v2488, %v2558
        %v2564 = vld [vmem:[%s9] sm:$0xff]
        %v2565 = vld [vmem:[%s9 + $0x8] sm:$0xff]
        %v2566 = vld [vmem:[%s9 + $0x10] sm:$0xff]
        %v2567 = vld [vmem:[%s9 + $0x18] sm:$0xff]
        %2569 = vset.pattern.permute.xlu0 0
        %2570 = vperm.xlu0 %2569, %v2564
        %v2571 = vpop.permute.xlu0 %2570
        %2574 = vset.pattern.permute.xlu0 0
        %2575 = vperm.xlu0 %2574, %v2565
        %v2576 = vpop.permute.xlu0 %2575
        %2579 = vset.pattern.permute.xlu0 0
        %2580 = vperm.xlu0 %2579, %v2566
        %v2581 = vpop.permute.xlu0 %2580
        %2584 = vset.pattern.permute.xlu0 0
        %2585 = vperm.xlu0 %2584, %v2567
        %v2586 = vpop.permute.xlu0 %2585
        %v2588 = vadd.f32 %v2560, %v2571
        %v2589 = vadd.f32 %v2561, %v2576
        %v2590 = vadd.f32 %v2562, %v2581
        %v2591 = vadd.f32 %v2563, %v2586
        %v2592 = vmax.f32 %v2588, 0.0
        %v2593 = vmax.f32 %v2589, 0.0
        %v2594 = vmax.f32 %v2590, 0.0
        %v2595 = vmax.f32 %v2591, 0.0
        %v2596 = vld [vmem:[%s10] sm:$0xff]
        %v2597 = vld [vmem:[%s10 + $0x8] sm:$0xff]
        %v2598 = vld [vmem:[%s10 + $0x10] sm:$0xff]
        %v2599 = vld [vmem:[%s10 + $0x18] sm:$0xff]
        %v2600 = vld [vmem:[%s11] sm:$0xff]
        %v2601 = vld [vmem:[%s11 + $0x8] sm:$0xff]
        %v2602 = vld [vmem:[%s11 + $0x10] sm:$0xff]
        %v2603 = vld [vmem:[%s11 + $0x18] sm:$0xff]
        %2605 = vset.pattern.permute.xlu0 0
        %2606 = vperm.xlu0 %2605, %v2600
        %v2607 = vpop.permute.xlu0 %2606
        %2610 = vset.pattern.permute.xlu0 0
        %2611 = vperm.xlu0 %2610, %v2601
        %v2612 = vpop.permute.xlu0 %2611
        %2615 = vset.pattern.permute.xlu0 0
        %2616 = vperm.xlu0 %2615, %v2602
        %v2617 = vpop.permute.xlu0 %2616
        %2620 = vset.pattern.permute.xlu0 0
        %2621 = vperm.xlu0 %2620, %v2603
        %v2622 = vpop.permute.xlu0 %2621
        %v2625 = vsel %vm787, %v2596, 0
        %v2628 = vsel %vm787, %v2597, 0
        %v2631 = vsel %vm787, %v2598, 0
        %v2634 = vsel %vm787, %v2599, 0
        %2636 = vmatpush.msra.mxu0 0.0
        %2637 = vmatpush.msra.mxu0 0.0
        %2638 = vmatpush.msra.mxu0 0.0
        %2639 = vmatpush.msra.mxu0 0.0
        %2640 = vmatpush.msra.mxu0 0.0
        %2641 = vmatpush.msra.mxu0 0.0
        %2642 = vmatpush.msra.mxu0 0.0
        %2643 = vmatpush.msra.mxu0 0.0
        %2644 = vmatpush.msra.mxu0 0.0
        %2645 = vmatpush.msra.mxu0 0.0
        %2646 = vmatpush.msra.mxu0 0.0
        %2647 = vmatpush.msra.mxu0 0.0
        %2648 = vmatpush.msra.mxu0 %v2595
        %2649 = vmatpush.msra.mxu0 %v2594
        %2650 = vmatpush.msra.mxu0 %v2593
        %2651 = vmatpush.msra.mxu0 %v2592
        %2652 = vmatmul.f32.gmra.mxu0 %v2625
        %v2653 = vpop.f32.mrf.mxu0
        %v2654 = vadd.f32 %v2607, %v2653
        %2655 = vmatmul.f32.gmra.mxu0 %v2628
        %v2656 = vpop.f32.mrf.mxu0
        %v2657 = vadd.f32 %v2612, %v2656
        %2658 = vmatmul.f32.gmra.mxu0 %v2631
        %v2659 = vpop.f32.mrf.mxu0
        %v2660 = vadd.f32 %v2617, %v2659
        %2661 = vmatmul.f32.gmra.mxu0 %v2634
        %v2662 = vpop.f32.mrf.mxu0
        %v2663 = vadd.f32 %v2622, %v2662
        %2664 = vdwg.mxu0
        %v2665 = vadd.f32 %v689, %v2654
        %v2666 = vadd.f32 %v690, %v2657
        %v2667 = vadd.f32 %v691, %v2660
        %v2668 = vadd.f32 %v692, %v2663
        %v2669 = vmul.f32 %v2665, %v556
        %v2670 = vmul.f32 %v2666, %v556
        %v2671 = vmul.f32 %v2667, %v556
        %v2672 = vmul.f32 %v2668, %v556
        %2677 = vrot.lane.b32.xlu0 %v2669, 16
        %v2678 = vpop.permute.xlu0 %2677
        %2679 = vrot.lane.b32.xlu0 %v2670, 16
        %v2680 = vpop.permute.xlu0 %2679
        %2681 = vrot.lane.b32.xlu0 %v2671, 16
        %v2682 = vpop.permute.xlu0 %2681
        %2683 = vrot.lane.b32.xlu0 %v2672, 16
        %v2684 = vpop.permute.xlu0 %2683
        %2689 = vst.msk [vmem:[#allocation3] sm:$0xff] %vm2174, %v2678
        %2690 = vst.msk [vmem:[#allocation3 + $0x8] sm:$0xff] %vm614, %v2678
        %2691 = vst.msk [vmem:[#allocation3 + $0x10] sm:$0xff] %vm2174, %v2680
        %2692 = vst.msk [vmem:[#allocation3 + $0x18] sm:$0xff] %vm614, %v2680
        %2693 = vst.msk [vmem:[#allocation3 + $0x20] sm:$0xff] %vm2174, %v2682
        %2694 = vst.msk [vmem:[#allocation3 + $0x28] sm:$0xff] %vm614, %v2682
        %2695 = vst.msk [vmem:[#allocation3 + $0x30] sm:$0xff] %vm2174, %v2684
        %2696 = vst.msk [vmem:[#allocation3 + $0x38] sm:$0xff] %vm614, %v2684
        %s2697 = scalar_lea.vmem [#allocation7], 160
        %v2698 = vld [vmem:[%s2697] sm:$0xff]
        %v2699 = vld [vmem:[%s2697 + $0x8] sm:$0xff]
        %v2700 = vld [vmem:[%s2697 + $0x10] sm:$0xff]
        %v2701 = vld [vmem:[%s2697 + $0x18] sm:$0xff]
        %v2702 = vld [vmem:[#allocation3] sm:$0xff]
        %v2703 = vld [vmem:[#allocation3 + $0x8] sm:$0xff]
        %v2704 = vld [vmem:[#allocation3 + $0x10] sm:$0xff]
        %v2705 = vld [vmem:[#allocation3 + $0x18] sm:$0xff]
        %v2706 = vld [vmem:[#allocation3 + $0x20] sm:$0xff]
        %v2707 = vld [vmem:[#allocation3 + $0x28] sm:$0xff]
        %v2708 = vld [vmem:[#allocation3 + $0x30] sm:$0xff]
        %v2709 = vld [vmem:[#allocation3 + $0x38] sm:$0xff]
        %s2710 = scalar_lea.vmem [#allocation7], 192
        %v2711 = vld [vmem:[%s2710] sm:$0xff]
        %v2712 = vld [vmem:[%s2710 + $0x8] sm:$0xff]
        %v2713 = vld [vmem:[%s2710 + $0x10] sm:$0xff]
        %v2714 = vld [vmem:[%s2710 + $0x18] sm:$0xff]
        %2723 = vrot.lane.b32.xlu0 %v2702, 114
        %v2724 = vpop.permute.xlu0 %2723
        %2725 = vrot.lane.b32.xlu0 %v2703, 114
        %v2726 = vpop.permute.xlu0 %2725
        %2727 = vrot.lane.b32.xlu0 %v2704, 114
        %v2728 = vpop.permute.xlu0 %2727
        %2729 = vrot.lane.b32.xlu0 %v2705, 114
        %v2730 = vpop.permute.xlu0 %2729
        %2731 = vrot.lane.b32.xlu0 %v2706, 114
        %v2732 = vpop.permute.xlu0 %2731
        %2733 = vrot.lane.b32.xlu0 %v2707, 114
        %v2734 = vpop.permute.xlu0 %2733
        %2735 = vrot.lane.b32.xlu0 %v2708, 114
        %v2736 = vpop.permute.xlu0 %2735
        %2737 = vrot.lane.b32.xlu0 %v2709, 114
        %v2738 = vpop.permute.xlu0 %2737
        %v2739 = vsel %vm2290, %v2724, %v2726
        %v2740 = vsel %vm2290, %v2728, %v2730
        %v2741 = vsel %vm2290, %v2732, %v2734
        %v2742 = vsel %vm2290, %v2736, %v2738
        %v2748 = vsel %vm787, %v2711, 0
        %v2751 = vsel %vm787, %v2712, 0
        %v2754 = vsel %vm787, %v2713, 0
        %v2757 = vsel %vm787, %v2714, 0
        %2759 = vmatpush.msra.mxu0 0.0
        %2760 = vmatpush.msra.mxu0 0.0
        %2761 = vmatpush.msra.mxu0 0.0
        %2762 = vmatpush.msra.mxu0 0.0
        %2763 = vmatpush.msra.mxu0 0.0
        %2764 = vmatpush.msra.mxu0 0.0
        %2765 = vmatpush.msra.mxu0 0.0
        %2766 = vmatpush.msra.mxu0 0.0
        %2767 = vmatpush.msra.mxu0 0.0
        %2768 = vmatpush.msra.mxu0 0.0
        %2769 = vmatpush.msra.mxu0 0.0
        %2770 = vmatpush.msra.mxu0 0.0
        %2771 = vmatpush.msra.mxu0 %v2742
        %2772 = vmatpush.msra.mxu0 %v2741
        %2773 = vmatpush.msra.mxu0 %v2740
        %2774 = vmatpush.msra.mxu0 %v2739
        %2775 = vmatmul.f32.gmra.mxu0 %v2748
        %v2776 = vpop.f32.mrf.mxu0
        %v2777 = vadd.f32 0.0, %v2776
        %2778 = vmatmul.f32.gmra.mxu0 %v2751
        %v2779 = vpop.f32.mrf.mxu0
        %v2780 = vadd.f32 0.0, %v2779
        %2781 = vmatmul.f32.gmra.mxu0 %v2754
        %v2782 = vpop.f32.mrf.mxu0
        %v2783 = vadd.f32 0.0, %v2782
        %2784 = vmatmul.f32.gmra.mxu0 %v2757
        %v2785 = vpop.f32.mrf.mxu0
        %v2786 = vadd.f32 0.0, %v2785
        %2787 = vdwg.mxu0
        %2788 = vrot.lane.b32.xlu0 %v2702, 116
        %v2789 = vpop.permute.xlu0 %2788
        %2790 = vrot.lane.b32.xlu0 %v2703, 116
        %v2791 = vpop.permute.xlu0 %2790
        %2792 = vrot.lane.b32.xlu0 %v2704, 116
        %v2793 = vpop.permute.xlu0 %2792
        %2794 = vrot.lane.b32.xlu0 %v2705, 116
        %v2795 = vpop.permute.xlu0 %2794
        %2796 = vrot.lane.b32.xlu0 %v2706, 116
        %v2797 = vpop.permute.xlu0 %2796
        %2798 = vrot.lane.b32.xlu0 %v2707, 116
        %v2799 = vpop.permute.xlu0 %2798
        %2800 = vrot.lane.b32.xlu0 %v2708, 116
        %v2801 = vpop.permute.xlu0 %2800
        %2802 = vrot.lane.b32.xlu0 %v2709, 116
        %v2803 = vpop.permute.xlu0 %2802
        %v2804 = vsel %vm1649, %v2789, %v2791
        %v2805 = vsel %vm1649, %v2793, %v2795
        %v2806 = vsel %vm1649, %v2797, %v2799
        %v2807 = vsel %vm1649, %v2801, %v2803
        %v2813 = vsel %vm787, %v2698, 0
        %v2816 = vsel %vm787, %v2699, 0
        %v2819 = vsel %vm787, %v2700, 0
        %v2822 = vsel %vm787, %v2701, 0
        %2824 = vmatpush.msra.mxu0 0.0
        %2825 = vmatpush.msra.mxu0 0.0
        %2826 = vmatpush.msra.mxu0 0.0
        %2827 = vmatpush.msra.mxu0 0.0
        %2828 = vmatpush.msra.mxu0 0.0
        %2829 = vmatpush.msra.mxu0 0.0
        %2830 = vmatpush.msra.mxu0 0.0
        %2831 = vmatpush.msra.mxu0 0.0
        %2832 = vmatpush.msra.mxu0 0.0
        %2833 = vmatpush.msra.mxu0 0.0
        %2834 = vmatpush.msra.mxu0 0.0
        %2835 = vmatpush.msra.mxu0 0.0
        %2836 = vmatpush.msra.mxu0 %v2807
        %2837 = vmatpush.msra.mxu0 %v2806
        %2838 = vmatpush.msra.mxu0 %v2805
        %2839 = vmatpush.msra.mxu0 %v2804
        %2840 = vmatmul.f32.gmra.mxu0 %v2813
        %v2841 = vpop.f32.mrf.mxu0
        %v2842 = vadd.f32 %v2777, %v2841
        %2843 = vmatmul.f32.gmra.mxu0 %v2816
        %v2844 = vpop.f32.mrf.mxu0
        %v2845 = vadd.f32 %v2780, %v2844
        %2846 = vmatmul.f32.gmra.mxu0 %v2819
        %v2847 = vpop.f32.mrf.mxu0
        %v2848 = vadd.f32 %v2783, %v2847
        %2849 = vmatmul.f32.gmra.mxu0 %v2822
        %v2850 = vpop.f32.mrf.mxu0
        %v2851 = vadd.f32 %v2786, %v2850
        %2852 = vdwg.mxu0
        %s2853 = scalar_lea.vmem [#allocation7], 224
        %v2854 = vld [vmem:[%s2853] sm:$0xff]
        %v2855 = vld [vmem:[%s2853 + $0x8] sm:$0xff]
        %v2856 = vld [vmem:[%s2853 + $0x10] sm:$0xff]
        %v2857 = vld [vmem:[%s2853 + $0x18] sm:$0xff]
        %2858 = vrot.lane.b32.xlu0 %v2702, 112
        %v2859 = vpop.permute.xlu0 %2858
        %2860 = vrot.lane.b32.xlu0 %v2703, 112
        %v2861 = vpop.permute.xlu0 %2860
        %2862 = vrot.lane.b32.xlu0 %v2704, 112
        %v2863 = vpop.permute.xlu0 %2862
        %2864 = vrot.lane.b32.xlu0 %v2705, 112
        %v2865 = vpop.permute.xlu0 %2864
        %2866 = vrot.lane.b32.xlu0 %v2706, 112
        %v2867 = vpop.permute.xlu0 %2866
        %2868 = vrot.lane.b32.xlu0 %v2707, 112
        %v2869 = vpop.permute.xlu0 %2868
        %2870 = vrot.lane.b32.xlu0 %v2708, 112
        %v2871 = vpop.permute.xlu0 %2870
        %2872 = vrot.lane.b32.xlu0 %v2709, 112
        %v2873 = vpop.permute.xlu0 %2872
        %v2874 = vsel %vm1992, %v2859, %v2861
        %v2875 = vsel %vm1992, %v2863, %v2865
        %v2876 = vsel %vm1992, %v2867, %v2869
        %v2877 = vsel %vm1992, %v2871, %v2873
        %v2883 = vsel %vm787, %v2854, 0
        %v2886 = vsel %vm787, %v2855, 0
        %v2889 = vsel %vm787, %v2856, 0
        %v2892 = vsel %vm787, %v2857, 0
        %2894 = vmatpush.msra.mxu0 0.0
        %2895 = vmatpush.msra.mxu0 0.0
        %2896 = vmatpush.msra.mxu0 0.0
        %2897 = vmatpush.msra.mxu0 0.0
        %2898 = vmatpush.msra.mxu0 0.0
        %2899 = vmatpush.msra.mxu0 0.0
        %2900 = vmatpush.msra.mxu0 0.0
        %2901 = vmatpush.msra.mxu0 0.0
        %2902 = vmatpush.msra.mxu0 0.0
        %2903 = vmatpush.msra.mxu0 0.0
        %2904 = vmatpush.msra.mxu0 0.0
        %2905 = vmatpush.msra.mxu0 0.0
        %2906 = vmatpush.msra.mxu0 %v2877
        %2907 = vmatpush.msra.mxu0 %v2876
        %2908 = vmatpush.msra.mxu0 %v2875
        %2909 = vmatpush.msra.mxu0 %v2874
        %2910 = vmatmul.f32.gmra.mxu0 %v2883
        %v2911 = vpop.f32.mrf.mxu0
        %v2912 = vadd.f32 0.0, %v2911
        %2913 = vmatmul.f32.gmra.mxu0 %v2886
        %v2914 = vpop.f32.mrf.mxu0
        %v2915 = vadd.f32 0.0, %v2914
        %2916 = vmatmul.f32.gmra.mxu0 %v2889
        %v2917 = vpop.f32.mrf.mxu0
        %v2918 = vadd.f32 0.0, %v2917
        %2919 = vmatmul.f32.gmra.mxu0 %v2892
        %v2920 = vpop.f32.mrf.mxu0
        %v2921 = vadd.f32 0.0, %v2920
        %2922 = vdwg.mxu0
        %v2923 = vadd.f32 %v2842, %v2912
        %v2924 = vadd.f32 %v2845, %v2915
        %v2925 = vadd.f32 %v2848, %v2918
        %v2926 = vadd.f32 %v2851, %v2921
        %s2927 = scalar_lea.vmem [#allocation7], 256
        %v2928 = vld [vmem:[%s2927] sm:$0xff]
        %v2929 = vld [vmem:[%s2927 + $0x8] sm:$0xff]
        %v2930 = vld [vmem:[%s2927 + $0x10] sm:$0xff]
        %v2931 = vld [vmem:[%s2927 + $0x18] sm:$0xff]
        %2932 = vrot.lane.b32.xlu0 %v2702, 110
        %v2933 = vpop.permute.xlu0 %2932
        %2934 = vrot.lane.b32.xlu0 %v2703, 110
        %v2935 = vpop.permute.xlu0 %2934
        %2936 = vrot.lane.b32.xlu0 %v2704, 110
        %v2937 = vpop.permute.xlu0 %2936
        %2938 = vrot.lane.b32.xlu0 %v2705, 110
        %v2939 = vpop.permute.xlu0 %2938
        %2940 = vrot.lane.b32.xlu0 %v2706, 110
        %v2941 = vpop.permute.xlu0 %2940
        %2942 = vrot.lane.b32.xlu0 %v2707, 110
        %v2943 = vpop.permute.xlu0 %2942
        %2944 = vrot.lane.b32.xlu0 %v2708, 110
        %v2945 = vpop.permute.xlu0 %2944
        %2946 = vrot.lane.b32.xlu0 %v2709, 110
        %v2947 = vpop.permute.xlu0 %2946
        %v2948 = vsel %vm2510, %v2933, %v2935
        %v2949 = vsel %vm2510, %v2937, %v2939
        %v2950 = vsel %vm2510, %v2941, %v2943
        %v2951 = vsel %vm2510, %v2945, %v2947
        %v2957 = vsel %vm787, %v2928, 0
        %v2960 = vsel %vm787, %v2929, 0
        %v2963 = vsel %vm787, %v2930, 0
        %v2966 = vsel %vm787, %v2931, 0
        %2968 = vmatpush.msra.mxu0 0.0
        %2969 = vmatpush.msra.mxu0 0.0
        %2970 = vmatpush.msra.mxu0 0.0
        %2971 = vmatpush.msra.mxu0 0.0
        %2972 = vmatpush.msra.mxu0 0.0
        %2973 = vmatpush.msra.mxu0 0.0
        %2974 = vmatpush.msra.mxu0 0.0
        %2975 = vmatpush.msra.mxu0 0.0
        %2976 = vmatpush.msra.mxu0 0.0
        %2977 = vmatpush.msra.mxu0 0.0
        %2978 = vmatpush.msra.mxu0 0.0
        %2979 = vmatpush.msra.mxu0 0.0
        %2980 = vmatpush.msra.mxu0 %v2951
        %2981 = vmatpush.msra.mxu0 %v2950
        %2982 = vmatpush.msra.mxu0 %v2949
        %2983 = vmatpush.msra.mxu0 %v2948
        %2984 = vmatmul.f32.gmra.mxu0 %v2957
        %v2985 = vpop.f32.mrf.mxu0
        %v2986 = vadd.f32 0.0, %v2985
        %2987 = vmatmul.f32.gmra.mxu0 %v2960
        %v2988 = vpop.f32.mrf.mxu0
        %v2989 = vadd.f32 0.0, %v2988
        %2990 = vmatmul.f32.gmra.mxu0 %v2963
        %v2991 = vpop.f32.mrf.mxu0
        %v2992 = vadd.f32 0.0, %v2991
        %2993 = vmatmul.f32.gmra.mxu0 %v2966
        %v2994 = vpop.f32.mrf.mxu0
        %v2995 = vadd.f32 0.0, %v2994
        %2996 = vdwg.mxu0
        %v2997 = vadd.f32 %v2923, %v2986
        %v2998 = vadd.f32 %v2924, %v2989
        %v2999 = vadd.f32 %v2925, %v2992
        %v3000 = vadd.f32 %v2926, %v2995
        %s3001 = scalar_lea.vmem [#allocation7], 288
        %v3002 = vld [vmem:[%s3001] sm:$0xff]
        %v3003 = vld [vmem:[%s3001 + $0x8] sm:$0xff]
        %v3004 = vld [vmem:[%s3001 + $0x10] sm:$0xff]
        %v3005 = vld [vmem:[%s3001 + $0x18] sm:$0xff]
        %3006 = vrot.lane.b32.xlu0 %v2702, 108
        %v3007 = vpop.permute.xlu0 %3006
        %3008 = vrot.lane.b32.xlu0 %v2703, 108
        %v3009 = vpop.permute.xlu0 %3008
        %3010 = vrot.lane.b32.xlu0 %v2704, 108
        %v3011 = vpop.permute.xlu0 %3010
        %3012 = vrot.lane.b32.xlu0 %v2705, 108
        %v3013 = vpop.permute.xlu0 %3012
        %3014 = vrot.lane.b32.xlu0 %v2706, 108
        %v3015 = vpop.permute.xlu0 %3014
        %3016 = vrot.lane.b32.xlu0 %v2707, 108
        %v3017 = vpop.permute.xlu0 %3016
        %3018 = vrot.lane.b32.xlu0 %v2708, 108
        %v3019 = vpop.permute.xlu0 %3018
        %3020 = vrot.lane.b32.xlu0 %v2709, 108
        %v3021 = vpop.permute.xlu0 %3020
        %vm3022 = vcmask 883712
        %v3023 = vsel %vm3022, %v3007, %v3009
        %v3024 = vsel %vm3022, %v3011, %v3013
        %v3025 = vsel %vm3022, %v3015, %v3017
        %v3026 = vsel %vm3022, %v3019, %v3021
        %v3032 = vsel %vm787, %v3002, 0
        %v3035 = vsel %vm787, %v3003, 0
        %v3038 = vsel %vm787, %v3004, 0
        %v3041 = vsel %vm787, %v3005, 0
        %3043 = vmatpush.msra.mxu0 0.0
        %3044 = vmatpush.msra.mxu0 0.0
        %3045 = vmatpush.msra.mxu0 0.0
        %3046 = vmatpush.msra.mxu0 0.0
        %3047 = vmatpush.msra.mxu0 0.0
        %3048 = vmatpush.msra.mxu0 0.0
        %3049 = vmatpush.msra.mxu0 0.0
        %3050 = vmatpush.msra.mxu0 0.0
        %3051 = vmatpush.msra.mxu0 0.0
        %3052 = vmatpush.msra.mxu0 0.0
        %3053 = vmatpush.msra.mxu0 0.0
        %3054 = vmatpush.msra.mxu0 0.0
        %3055 = vmatpush.msra.mxu0 %v3026
        %3056 = vmatpush.msra.mxu0 %v3025
        %3057 = vmatpush.msra.mxu0 %v3024
        %3058 = vmatpush.msra.mxu0 %v3023
        %3059 = vmatmul.f32.gmra.mxu0 %v3032
        %v3060 = vpop.f32.mrf.mxu0
        %v3061 = vadd.f32 0.0, %v3060
        %3062 = vmatmul.f32.gmra.mxu0 %v3035
        %v3063 = vpop.f32.mrf.mxu0
        %v3064 = vadd.f32 0.0, %v3063
        %3065 = vmatmul.f32.gmra.mxu0 %v3038
        %v3066 = vpop.f32.mrf.mxu0
        %v3067 = vadd.f32 0.0, %v3066
        %3068 = vmatmul.f32.gmra.mxu0 %v3041
        %v3069 = vpop.f32.mrf.mxu0
        %v3070 = vadd.f32 0.0, %v3069
        %3071 = vdwg.mxu0
        %v3072 = vadd.f32 %v2997, %v3061
        %v3073 = vadd.f32 %v2998, %v3064
        %v3074 = vadd.f32 %v2999, %v3067
        %v3075 = vadd.f32 %v3000, %v3070
        %s3076 = scalar_lea.vmem %s9, 32
        %v3077 = vld [vmem:[%s3076] sm:$0xff]
        %v3078 = vld [vmem:[%s3076 + $0x8] sm:$0xff]
        %v3079 = vld [vmem:[%s3076 + $0x10] sm:$0xff]
        %v3080 = vld [vmem:[%s3076 + $0x18] sm:$0xff]
        %3082 = vset.pattern.permute.xlu0 0
        %3083 = vperm.xlu0 %3082, %v3077
        %v3084 = vpop.permute.xlu0 %3083
        %3087 = vset.pattern.permute.xlu0 0
        %3088 = vperm.xlu0 %3087, %v3078
        %v3089 = vpop.permute.xlu0 %3088
        %3092 = vset.pattern.permute.xlu0 0
        %3093 = vperm.xlu0 %3092, %v3079
        %v3094 = vpop.permute.xlu0 %3093
        %3097 = vset.pattern.permute.xlu0 0
        %3098 = vperm.xlu0 %3097, %v3080
        %v3099 = vpop.permute.xlu0 %3098
        %v3101 = vadd.f32 %v3072, %v3084
        %v3102 = vadd.f32 %v3073, %v3089
        %v3103 = vadd.f32 %v3074, %v3094
        %v3104 = vadd.f32 %v3075, %v3099
        %v3105 = vmax.f32 %v3101, 0.0
        %v3106 = vmax.f32 %v3102, 0.0
        %v3107 = vmax.f32 %v3103, 0.0
        %v3108 = vmax.f32 %v3104, 0.0
        %s3109 = scalar_lea.vmem %s10, 32
        %v3110 = vld [vmem:[%s3109] sm:$0xff]
        %v3111 = vld [vmem:[%s3109 + $0x8] sm:$0xff]
        %v3112 = vld [vmem:[%s3109 + $0x10] sm:$0xff]
        %v3113 = vld [vmem:[%s3109 + $0x18] sm:$0xff]
        %s3114 = scalar_lea.vmem %s11, 32
        %v3115 = vld [vmem:[%s3114] sm:$0xff]
        %v3116 = vld [vmem:[%s3114 + $0x8] sm:$0xff]
        %v3117 = vld [vmem:[%s3114 + $0x10] sm:$0xff]
        %v3118 = vld [vmem:[%s3114 + $0x18] sm:$0xff]
        %3120 = vset.pattern.permute.xlu0 0
        %3121 = vperm.xlu0 %3120, %v3115
        %v3122 = vpop.permute.xlu0 %3121
        %3125 = vset.pattern.permute.xlu0 0
        %3126 = vperm.xlu0 %3125, %v3116
        %v3127 = vpop.permute.xlu0 %3126
        %3130 = vset.pattern.permute.xlu0 0
        %3131 = vperm.xlu0 %3130, %v3117
        %v3132 = vpop.permute.xlu0 %3131
        %3135 = vset.pattern.permute.xlu0 0
        %3136 = vperm.xlu0 %3135, %v3118
        %v3137 = vpop.permute.xlu0 %3136
        %v3140 = vsel %vm787, %v3110, 0
        %v3143 = vsel %vm787, %v3111, 0
        %v3146 = vsel %vm787, %v3112, 0
        %v3149 = vsel %vm787, %v3113, 0
        %3151 = vmatpush.msra.mxu0 0.0
        %3152 = vmatpush.msra.mxu0 0.0
        %3153 = vmatpush.msra.mxu0 0.0
        %3154 = vmatpush.msra.mxu0 0.0
        %3155 = vmatpush.msra.mxu0 0.0
        %3156 = vmatpush.msra.mxu0 0.0
        %3157 = vmatpush.msra.mxu0 0.0
        %3158 = vmatpush.msra.mxu0 0.0
        %3159 = vmatpush.msra.mxu0 0.0
        %3160 = vmatpush.msra.mxu0 0.0
        %3161 = vmatpush.msra.mxu0 0.0
        %3162 = vmatpush.msra.mxu0 0.0
        %3163 = vmatpush.msra.mxu0 %v3108
        %3164 = vmatpush.msra.mxu0 %v3107
        %3165 = vmatpush.msra.mxu0 %v3106
        %3166 = vmatpush.msra.mxu0 %v3105
        %3167 = vmatmul.f32.gmra.mxu0 %v3140
        %v3168 = vpop.f32.mrf.mxu0
        %v3169 = vadd.f32 %v3122, %v3168
        %3170 = vmatmul.f32.gmra.mxu0 %v3143
        %v3171 = vpop.f32.mrf.mxu0
        %v3172 = vadd.f32 %v3127, %v3171
        %3173 = vmatmul.f32.gmra.mxu0 %v3146
        %v3174 = vpop.f32.mrf.mxu0
        %v3175 = vadd.f32 %v3132, %v3174
        %3176 = vmatmul.f32.gmra.mxu0 %v3149
        %v3177 = vpop.f32.mrf.mxu0
        %v3178 = vadd.f32 %v3137, %v3177
        %3179 = vdwg.mxu0
        %v3180 = vadd.f32 %v2669, %v3169
        %v3181 = vadd.f32 %v2670, %v3172
        %v3182 = vadd.f32 %v2671, %v3175
        %v3183 = vadd.f32 %v2672, %v3178
        %v3184 = vmul.f32 %v3180, %v556
        %v3185 = vmul.f32 %v3181, %v556
        %v3186 = vmul.f32 %v3182, %v556
        %v3187 = vmul.f32 %v3183, %v556
        %3192 = vrot.lane.b32.xlu0 %v3184, 16
        %v3193 = vpop.permute.xlu0 %3192
        %3194 = vrot.lane.b32.xlu0 %v3185, 16
        %v3195 = vpop.permute.xlu0 %3194
        %3196 = vrot.lane.b32.xlu0 %v3186, 16
        %v3197 = vpop.permute.xlu0 %3196
        %3198 = vrot.lane.b32.xlu0 %v3187, 16
        %v3199 = vpop.permute.xlu0 %3198
        %3204 = vst.msk [vmem:[#allocation3] sm:$0xff] %vm2174, %v3193
        %3205 = vst.msk [vmem:[#allocation3 + $0x8] sm:$0xff] %vm614, %v3193
        %3206 = vst.msk [vmem:[#allocation3 + $0x10] sm:$0xff] %vm2174, %v3195
        %3207 = vst.msk [vmem:[#allocation3 + $0x18] sm:$0xff] %vm614, %v3195
        %3208 = vst.msk [vmem:[#allocation3 + $0x20] sm:$0xff] %vm2174, %v3197
        %3209 = vst.msk [vmem:[#allocation3 + $0x28] sm:$0xff] %vm614, %v3197
        %3210 = vst.msk [vmem:[#allocation3 + $0x30] sm:$0xff] %vm2174, %v3199
        %3211 = vst.msk [vmem:[#allocation3 + $0x38] sm:$0xff] %vm614, %v3199
        %s3212 = scalar_lea.vmem [#allocation7], 320
        %v3213 = vld [vmem:[%s3212] sm:$0xff]
        %v3214 = vld [vmem:[%s3212 + $0x8] sm:$0xff]
        %v3215 = vld [vmem:[%s3212 + $0x10] sm:$0xff]
        %v3216 = vld [vmem:[%s3212 + $0x18] sm:$0xff]
        %v3217 = vld [vmem:[#allocation3] sm:$0xff]
        %v3218 = vld [vmem:[#allocation3 + $0x8] sm:$0xff]
        %v3219 = vld [vmem:[#allocation3 + $0x10] sm:$0xff]
        %v3220 = vld [vmem:[#allocation3 + $0x18] sm:$0xff]
        %v3221 = vld [vmem:[#allocation3 + $0x20] sm:$0xff]
        %v3222 = vld [vmem:[#allocation3 + $0x28] sm:$0xff]
        %v3223 = vld [vmem:[#allocation3 + $0x30] sm:$0xff]
        %v3224 = vld [vmem:[#allocation3 + $0x38] sm:$0xff]
        %s3225 = scalar_lea.vmem [#allocation7], 352
        %v3226 = vld [vmem:[%s3225] sm:$0xff]
        %v3227 = vld [vmem:[%s3225 + $0x8] sm:$0xff]
        %v3228 = vld [vmem:[%s3225 + $0x10] sm:$0xff]
        %v3229 = vld [vmem:[%s3225 + $0x18] sm:$0xff]
        %3238 = vrot.lane.b32.xlu0 %v3217, 116
        %v3239 = vpop.permute.xlu0 %3238
        %3240 = vrot.lane.b32.xlu0 %v3218, 116
        %v3241 = vpop.permute.xlu0 %3240
        %3242 = vrot.lane.b32.xlu0 %v3219, 116
        %v3243 = vpop.permute.xlu0 %3242
        %3244 = vrot.lane.b32.xlu0 %v3220, 116
        %v3245 = vpop.permute.xlu0 %3244
        %3246 = vrot.lane.b32.xlu0 %v3221, 116
        %v3247 = vpop.permute.xlu0 %3246
        %3248 = vrot.lane.b32.xlu0 %v3222, 116
        %v3249 = vpop.permute.xlu0 %3248
        %3250 = vrot.lane.b32.xlu0 %v3223, 116
        %v3251 = vpop.permute.xlu0 %3250
        %3252 = vrot.lane.b32.xlu0 %v3224, 116
        %v3253 = vpop.permute.xlu0 %3252
        %v3254 = vsel %vm1649, %v3239, %v3241
        %v3255 = vsel %vm1649, %v3243, %v3245
        %v3256 = vsel %vm1649, %v3247, %v3249
        %v3257 = vsel %vm1649, %v3251, %v3253
        %v3263 = vsel %vm787, %v3226, 0
        %v3266 = vsel %vm787, %v3227, 0
        %v3269 = vsel %vm787, %v3228, 0
        %v3272 = vsel %vm787, %v3229, 0
        %3274 = vmatpush.msra.mxu0 0.0
        %3275 = vmatpush.msra.mxu0 0.0
        %3276 = vmatpush.msra.mxu0 0.0
        %3277 = vmatpush.msra.mxu0 0.0
        %3278 = vmatpush.msra.mxu0 0.0
        %3279 = vmatpush.msra.mxu0 0.0
        %3280 = vmatpush.msra.mxu0 0.0
        %3281 = vmatpush.msra.mxu0 0.0
        %3282 = vmatpush.msra.mxu0 0.0
        %3283 = vmatpush.msra.mxu0 0.0
        %3284 = vmatpush.msra.mxu0 0.0
        %3285 = vmatpush.msra.mxu0 0.0
        %3286 = vmatpush.msra.mxu0 %v3257
        %3287 = vmatpush.msra.mxu0 %v3256
        %3288 = vmatpush.msra.mxu0 %v3255
        %3289 = vmatpush.msra.mxu0 %v3254
        %3290 = vmatmul.f32.gmra.mxu0 %v3263
        %v3291 = vpop.f32.mrf.mxu0
        %v3292 = vadd.f32 0.0, %v3291
        %3293 = vmatmul.f32.gmra.mxu0 %v3266
        %v3294 = vpop.f32.mrf.mxu0
        %v3295 = vadd.f32 0.0, %v3294
        %3296 = vmatmul.f32.gmra.mxu0 %v3269
        %v3297 = vpop.f32.mrf.mxu0
        %v3298 = vadd.f32 0.0, %v3297
        %3299 = vmatmul.f32.gmra.mxu0 %v3272
        %v3300 = vpop.f32.mrf.mxu0
        %v3301 = vadd.f32 0.0, %v3300
        %3302 = vdwg.mxu0
        %3303 = vrot.lane.b32.xlu0 %v3217, 120
        %v3304 = vpop.permute.xlu0 %3303
        %3305 = vrot.lane.b32.xlu0 %v3218, 120
        %v3306 = vpop.permute.xlu0 %3305
        %3307 = vrot.lane.b32.xlu0 %v3219, 120
        %v3308 = vpop.permute.xlu0 %3307
        %3309 = vrot.lane.b32.xlu0 %v3220, 120
        %v3310 = vpop.permute.xlu0 %3309
        %3311 = vrot.lane.b32.xlu0 %v3221, 120
        %v3312 = vpop.permute.xlu0 %3311
        %3313 = vrot.lane.b32.xlu0 %v3222, 120
        %v3314 = vpop.permute.xlu0 %3313
        %3315 = vrot.lane.b32.xlu0 %v3223, 120
        %v3316 = vpop.permute.xlu0 %3315
        %3317 = vrot.lane.b32.xlu0 %v3224, 120
        %v3318 = vpop.permute.xlu0 %3317
        %v3319 = vsel %vm778, %v3304, %v3306
        %v3320 = vsel %vm778, %v3308, %v3310
        %v3321 = vsel %vm778, %v3312, %v3314
        %v3322 = vsel %vm778, %v3316, %v3318
        %v3328 = vsel %vm787, %v3213, 0
        %v3331 = vsel %vm787, %v3214, 0
        %v3334 = vsel %vm787, %v3215, 0
        %v3337 = vsel %vm787, %v3216, 0
        %3339 = vmatpush.msra.mxu0 0.0
        %3340 = vmatpush.msra.mxu0 0.0
        %3341 = vmatpush.msra.mxu0 0.0
        %3342 = vmatpush.msra.mxu0 0.0
        %3343 = vmatpush.msra.mxu0 0.0
        %3344 = vmatpush.msra.mxu0 0.0
        %3345 = vmatpush.msra.mxu0 0.0
        %3346 = vmatpush.msra.mxu0 0.0
        %3347 = vmatpush.msra.mxu0 0.0
        %3348 = vmatpush.msra.mxu0 0.0
        %3349 = vmatpush.msra.mxu0 0.0
        %3350 = vmatpush.msra.mxu0 0.0
        %3351 = vmatpush.msra.mxu0 %v3322
        %3352 = vmatpush.msra.mxu0 %v3321
        %3353 = vmatpush.msra.mxu0 %v3320
        %3354 = vmatpush.msra.mxu0 %v3319
        %3355 = vmatmul.f32.gmra.mxu0 %v3328
        %v3356 = vpop.f32.mrf.mxu0
        %v3357 = vadd.f32 %v3292, %v3356
        %3358 = vmatmul.f32.gmra.mxu0 %v3331
        %v3359 = vpop.f32.mrf.mxu0
        %v3360 = vadd.f32 %v3295, %v3359
        %3361 = vmatmul.f32.gmra.mxu0 %v3334
        %v3362 = vpop.f32.mrf.mxu0
        %v3363 = vadd.f32 %v3298, %v3362
        %3364 = vmatmul.f32.gmra.mxu0 %v3337
        %v3365 = vpop.f32.mrf.mxu0
        %v3366 = vadd.f32 %v3301, %v3365
        %3367 = vdwg.mxu0
        %s3368 = scalar_lea.vmem [#allocation7], 384
        %v3369 = vld [vmem:[%s3368] sm:$0xff]
        %v3370 = vld [vmem:[%s3368 + $0x8] sm:$0xff]
        %v3371 = vld [vmem:[%s3368 + $0x10] sm:$0xff]
        %v3372 = vld [vmem:[%s3368 + $0x18] sm:$0xff]
        %3373 = vrot.lane.b32.xlu0 %v3217, 112
        %v3374 = vpop.permute.xlu0 %3373
        %3375 = vrot.lane.b32.xlu0 %v3218, 112
        %v3376 = vpop.permute.xlu0 %3375
        %3377 = vrot.lane.b32.xlu0 %v3219, 112
        %v3378 = vpop.permute.xlu0 %3377
        %3379 = vrot.lane.b32.xlu0 %v3220, 112
        %v3380 = vpop.permute.xlu0 %3379
        %3381 = vrot.lane.b32.xlu0 %v3221, 112
        %v3382 = vpop.permute.xlu0 %3381
        %3383 = vrot.lane.b32.xlu0 %v3222, 112
        %v3384 = vpop.permute.xlu0 %3383
        %3385 = vrot.lane.b32.xlu0 %v3223, 112
        %v3386 = vpop.permute.xlu0 %3385
        %3387 = vrot.lane.b32.xlu0 %v3224, 112
        %v3388 = vpop.permute.xlu0 %3387
        %v3389 = vsel %vm1992, %v3374, %v3376
        %v3390 = vsel %vm1992, %v3378, %v3380
        %v3391 = vsel %vm1992, %v3382, %v3384
        %v3392 = vsel %vm1992, %v3386, %v3388
        %v3398 = vsel %vm787, %v3369, 0
        %v3401 = vsel %vm787, %v3370, 0
        %v3404 = vsel %vm787, %v3371, 0
        %v3407 = vsel %vm787, %v3372, 0
        %3409 = vmatpush.msra.mxu0 0.0
        %3410 = vmatpush.msra.mxu0 0.0
        %3411 = vmatpush.msra.mxu0 0.0
        %3412 = vmatpush.msra.mxu0 0.0
        %3413 = vmatpush.msra.mxu0 0.0
        %3414 = vmatpush.msra.mxu0 0.0
        %3415 = vmatpush.msra.mxu0 0.0
        %3416 = vmatpush.msra.mxu0 0.0
        %3417 = vmatpush.msra.mxu0 0.0
        %3418 = vmatpush.msra.mxu0 0.0
        %3419 = vmatpush.msra.mxu0 0.0
        %3420 = vmatpush.msra.mxu0 0.0
        %3421 = vmatpush.msra.mxu0 %v3392
        %3422 = vmatpush.msra.mxu0 %v3391
        %3423 = vmatpush.msra.mxu0 %v3390
        %3424 = vmatpush.msra.mxu0 %v3389
        %3425 = vmatmul.f32.gmra.mxu0 %v3398
        %v3426 = vpop.f32.mrf.mxu0
        %v3427 = vadd.f32 0.0, %v3426
        %3428 = vmatmul.f32.gmra.mxu0 %v3401
        %v3429 = vpop.f32.mrf.mxu0
        %v3430 = vadd.f32 0.0, %v3429
        %3431 = vmatmul.f32.gmra.mxu0 %v3404
        %v3432 = vpop.f32.mrf.mxu0
        %v3433 = vadd.f32 0.0, %v3432
        %3434 = vmatmul.f32.gmra.mxu0 %v3407
        %v3435 = vpop.f32.mrf.mxu0
        %v3436 = vadd.f32 0.0, %v3435
        %3437 = vdwg.mxu0
        %v3438 = vadd.f32 %v3357, %v3427
        %v3439 = vadd.f32 %v3360, %v3430
        %v3440 = vadd.f32 %v3363, %v3433
        %v3441 = vadd.f32 %v3366, %v3436
        %s3442 = scalar_lea.vmem [#allocation7], 416
        %v3443 = vld [vmem:[%s3442] sm:$0xff]
        %v3444 = vld [vmem:[%s3442 + $0x8] sm:$0xff]
        %v3445 = vld [vmem:[%s3442 + $0x10] sm:$0xff]
        %v3446 = vld [vmem:[%s3442 + $0x18] sm:$0xff]
        %3447 = vrot.lane.b32.xlu0 %v3217, 108
        %v3448 = vpop.permute.xlu0 %3447
        %3449 = vrot.lane.b32.xlu0 %v3218, 108
        %v3450 = vpop.permute.xlu0 %3449
        %3451 = vrot.lane.b32.xlu0 %v3219, 108
        %v3452 = vpop.permute.xlu0 %3451
        %3453 = vrot.lane.b32.xlu0 %v3220, 108
        %v3454 = vpop.permute.xlu0 %3453
        %3455 = vrot.lane.b32.xlu0 %v3221, 108
        %v3456 = vpop.permute.xlu0 %3455
        %3457 = vrot.lane.b32.xlu0 %v3222, 108
        %v3458 = vpop.permute.xlu0 %3457
        %3459 = vrot.lane.b32.xlu0 %v3223, 108
        %v3460 = vpop.permute.xlu0 %3459
        %3461 = vrot.lane.b32.xlu0 %v3224, 108
        %v3462 = vpop.permute.xlu0 %3461
        %v3463 = vsel %vm3022, %v3448, %v3450
        %v3464 = vsel %vm3022, %v3452, %v3454
        %v3465 = vsel %vm3022, %v3456, %v3458
        %v3466 = vsel %vm3022, %v3460, %v3462
        %v3472 = vsel %vm787, %v3443, 0
        %v3475 = vsel %vm787, %v3444, 0
        %v3478 = vsel %vm787, %v3445, 0
        %v3481 = vsel %vm787, %v3446, 0
        %3483 = vmatpush.msra.mxu0 0.0
        %3484 = vmatpush.msra.mxu0 0.0
        %3485 = vmatpush.msra.mxu0 0.0
        %3486 = vmatpush.msra.mxu0 0.0
        %3487 = vmatpush.msra.mxu0 0.0
        %3488 = vmatpush.msra.mxu0 0.0
        %3489 = vmatpush.msra.mxu0 0.0
        %3490 = vmatpush.msra.mxu0 0.0
        %3491 = vmatpush.msra.mxu0 0.0
        %3492 = vmatpush.msra.mxu0 0.0
        %3493 = vmatpush.msra.mxu0 0.0
        %3494 = vmatpush.msra.mxu0 0.0
        %3495 = vmatpush.msra.mxu0 %v3466
        %3496 = vmatpush.msra.mxu0 %v3465
        %3497 = vmatpush.msra.mxu0 %v3464
        %3498 = vmatpush.msra.mxu0 %v3463
        %3499 = vmatmul.f32.gmra.mxu0 %v3472
        %v3500 = vpop.f32.mrf.mxu0
        %v3501 = vadd.f32 0.0, %v3500
        %3502 = vmatmul.f32.gmra.mxu0 %v3475
        %v3503 = vpop.f32.mrf.mxu0
        %v3504 = vadd.f32 0.0, %v3503
        %3505 = vmatmul.f32.gmra.mxu0 %v3478
        %v3506 = vpop.f32.mrf.mxu0
        %v3507 = vadd.f32 0.0, %v3506
        %3508 = vmatmul.f32.gmra.mxu0 %v3481
        %v3509 = vpop.f32.mrf.mxu0
        %v3510 = vadd.f32 0.0, %v3509
        %3511 = vdwg.mxu0
        %v3512 = vadd.f32 %v3438, %v3501
        %v3513 = vadd.f32 %v3439, %v3504
        %v3514 = vadd.f32 %v3440, %v3507
        %v3515 = vadd.f32 %v3441, %v3510
        %s3516 = scalar_lea.vmem [#allocation7], 448
        %v3517 = vld [vmem:[%s3516] sm:$0xff]
        %v3518 = vld [vmem:[%s3516 + $0x8] sm:$0xff]
        %v3519 = vld [vmem:[%s3516 + $0x10] sm:$0xff]
        %v3520 = vld [vmem:[%s3516 + $0x18] sm:$0xff]
        %3521 = vrot.lane.b32.xlu0 %v3217, 104
        %v3522 = vpop.permute.xlu0 %3521
        %3523 = vrot.lane.b32.xlu0 %v3218, 104
        %v3524 = vpop.permute.xlu0 %3523
        %3525 = vrot.lane.b32.xlu0 %v3219, 104
        %v3526 = vpop.permute.xlu0 %3525
        %3527 = vrot.lane.b32.xlu0 %v3220, 104
        %v3528 = vpop.permute.xlu0 %3527
        %3529 = vrot.lane.b32.xlu0 %v3221, 104
        %v3530 = vpop.permute.xlu0 %3529
        %3531 = vrot.lane.b32.xlu0 %v3222, 104
        %v3532 = vpop.permute.xlu0 %3531
        %3533 = vrot.lane.b32.xlu0 %v3223, 104
        %v3534 = vpop.permute.xlu0 %3533
        %3535 = vrot.lane.b32.xlu0 %v3224, 104
        %v3536 = vpop.permute.xlu0 %3535
        %vm3537 = vcmask 850944
        %v3538 = vsel %vm3537, %v3522, %v3524
        %v3539 = vsel %vm3537, %v3526, %v3528
        %v3540 = vsel %vm3537, %v3530, %v3532
        %v3541 = vsel %vm3537, %v3534, %v3536
        %v3547 = vsel %vm787, %v3517, 0
        %v3550 = vsel %vm787, %v3518, 0
        %v3553 = vsel %vm787, %v3519, 0
        %v3556 = vsel %vm787, %v3520, 0
        %3558 = vmatpush.msra.mxu0 0.0
        %3559 = vmatpush.msra.mxu0 0.0
        %3560 = vmatpush.msra.mxu0 0.0
        %3561 = vmatpush.msra.mxu0 0.0
        %3562 = vmatpush.msra.mxu0 0.0
        %3563 = vmatpush.msra.mxu0 0.0
        %3564 = vmatpush.msra.mxu0 0.0
        %3565 = vmatpush.msra.mxu0 0.0
        %3566 = vmatpush.msra.mxu0 0.0
        %3567 = vmatpush.msra.mxu0 0.0
        %3568 = vmatpush.msra.mxu0 0.0
        %3569 = vmatpush.msra.mxu0 0.0
        %3570 = vmatpush.msra.mxu0 %v3541
        %3571 = vmatpush.msra.mxu0 %v3540
        %3572 = vmatpush.msra.mxu0 %v3539
        %3573 = vmatpush.msra.mxu0 %v3538
        %3574 = vmatmul.f32.gmra.mxu0 %v3547
        %v3575 = vpop.f32.mrf.mxu0
        %v3576 = vadd.f32 0.0, %v3575
        %3577 = vmatmul.f32.gmra.mxu0 %v3550
        %v3578 = vpop.f32.mrf.mxu0
        %v3579 = vadd.f32 0.0, %v3578
        %3580 = vmatmul.f32.gmra.mxu0 %v3553
        %v3581 = vpop.f32.mrf.mxu0
        %v3582 = vadd.f32 0.0, %v3581
        %3583 = vmatmul.f32.gmra.mxu0 %v3556
        %v3584 = vpop.f32.mrf.mxu0
        %v3585 = vadd.f32 0.0, %v3584
        %3586 = vdwg.mxu0
        %v3587 = vadd.f32 %v3512, %v3576
        %v3588 = vadd.f32 %v3513, %v3579
        %v3589 = vadd.f32 %v3514, %v3582
        %v3590 = vadd.f32 %v3515, %v3585
        %s3591 = scalar_lea.vmem %s9, 64
        %v3592 = vld [vmem:[%s3591] sm:$0xff]
        %v3593 = vld [vmem:[%s3591 + $0x8] sm:$0xff]
        %v3594 = vld [vmem:[%s3591 + $0x10] sm:$0xff]
        %v3595 = vld [vmem:[%s3591 + $0x18] sm:$0xff]
        %3597 = vset.pattern.permute.xlu0 0
        %3598 = vperm.xlu0 %3597, %v3592
        %v3599 = vpop.permute.xlu0 %3598
        %3602 = vset.pattern.permute.xlu0 0
        %3603 = vperm.xlu0 %3602, %v3593
        %v3604 = vpop.permute.xlu0 %3603
        %3607 = vset.pattern.permute.xlu0 0
        %3608 = vperm.xlu0 %3607, %v3594
        %v3609 = vpop.permute.xlu0 %3608
        %3612 = vset.pattern.permute.xlu0 0
        %3613 = vperm.xlu0 %3612, %v3595
        %v3614 = vpop.permute.xlu0 %3613
        %v3616 = vadd.f32 %v3587, %v3599
        %v3617 = vadd.f32 %v3588, %v3604
        %v3618 = vadd.f32 %v3589, %v3609
        %v3619 = vadd.f32 %v3590, %v3614
        %v3620 = vmax.f32 %v3616, 0.0
        %v3621 = vmax.f32 %v3617, 0.0
        %v3622 = vmax.f32 %v3618, 0.0
        %v3623 = vmax.f32 %v3619, 0.0
        %s3624 = scalar_lea.vmem %s10, 64
        %v3625 = vld [vmem:[%s3624] sm:$0xff]
        %v3626 = vld [vmem:[%s3624 + $0x8] sm:$0xff]
        %v3627 = vld [vmem:[%s3624 + $0x10] sm:$0xff]
        %v3628 = vld [vmem:[%s3624 + $0x18] sm:$0xff]
        %s3629 = scalar_lea.vmem %s11, 64
        %v3630 = vld [vmem:[%s3629] sm:$0xff]
        %v3631 = vld [vmem:[%s3629 + $0x8] sm:$0xff]
        %v3632 = vld [vmem:[%s3629 + $0x10] sm:$0xff]
        %v3633 = vld [vmem:[%s3629 + $0x18] sm:$0xff]
        %3635 = vset.pattern.permute.xlu0 0
        %3636 = vperm.xlu0 %3635, %v3630
        %v3637 = vpop.permute.xlu0 %3636
        %3640 = vset.pattern.permute.xlu0 0
        %3641 = vperm.xlu0 %3640, %v3631
        %v3642 = vpop.permute.xlu0 %3641
        %3645 = vset.pattern.permute.xlu0 0
        %3646 = vperm.xlu0 %3645, %v3632
        %v3647 = vpop.permute.xlu0 %3646
        %3650 = vset.pattern.permute.xlu0 0
        %3651 = vperm.xlu0 %3650, %v3633
        %v3652 = vpop.permute.xlu0 %3651
        %v3655 = vsel %vm787, %v3625, 0
        %v3658 = vsel %vm787, %v3626, 0
        %v3661 = vsel %vm787, %v3627, 0
        %v3664 = vsel %vm787, %v3628, 0
        %3666 = vmatpush.msra.mxu0 0.0
        %3667 = vmatpush.msra.mxu0 0.0
        %3668 = vmatpush.msra.mxu0 0.0
        %3669 = vmatpush.msra.mxu0 0.0
        %3670 = vmatpush.msra.mxu0 0.0
        %3671 = vmatpush.msra.mxu0 0.0
        %3672 = vmatpush.msra.mxu0 0.0
        %3673 = vmatpush.msra.mxu0 0.0
        %3674 = vmatpush.msra.mxu0 0.0
        %3675 = vmatpush.msra.mxu0 0.0
        %3676 = vmatpush.msra.mxu0 0.0
        %3677 = vmatpush.msra.mxu0 0.0
        %3678 = vmatpush.msra.mxu0 %v3623
        %3679 = vmatpush.msra.mxu0 %v3622
        %3680 = vmatpush.msra.mxu0 %v3621
        %3681 = vmatpush.msra.mxu0 %v3620
        %3682 = vmatmul.f32.gmra.mxu0 %v3655
        %v3683 = vpop.f32.mrf.mxu0
        %v3684 = vadd.f32 %v3637, %v3683
        %3685 = vmatmul.f32.gmra.mxu0 %v3658
        %v3686 = vpop.f32.mrf.mxu0
        %v3687 = vadd.f32 %v3642, %v3686
        %3688 = vmatmul.f32.gmra.mxu0 %v3661
        %v3689 = vpop.f32.mrf.mxu0
        %v3690 = vadd.f32 %v3647, %v3689
        %3691 = vmatmul.f32.gmra.mxu0 %v3664
        %v3692 = vpop.f32.mrf.mxu0
        %v3693 = vadd.f32 %v3652, %v3692
        %3694 = vdwg.mxu0
        %v3695 = vadd.f32 %v3184, %v3684
        %v3696 = vadd.f32 %v3185, %v3687
        %v3697 = vadd.f32 %v3186, %v3690
        %v3698 = vadd.f32 %v3187, %v3693
        %v3699 = vmul.f32 %v3695, %v556
        %v3700 = vmul.f32 %v3696, %v556
        %v3701 = vmul.f32 %v3697, %v556
        %v3702 = vmul.f32 %v3698, %v556
        %3707 = vrot.lane.b32.xlu0 %v3699, 16
        %v3708 = vpop.permute.xlu0 %3707
        %3709 = vrot.lane.b32.xlu0 %v3700, 16
        %v3710 = vpop.permute.xlu0 %3709
        %3711 = vrot.lane.b32.xlu0 %v3701, 16
        %v3712 = vpop.permute.xlu0 %3711
        %3713 = vrot.lane.b32.xlu0 %v3702, 16
        %v3714 = vpop.permute.xlu0 %3713
        %3719 = vst.msk [vmem:[#allocation3] sm:$0xff] %vm2174, %v3708
        %3720 = vst.msk [vmem:[#allocation3 + $0x8] sm:$0xff] %vm614, %v3708
        %3721 = vst.msk [vmem:[#allocation3 + $0x10] sm:$0xff] %vm2174, %v3710
        %3722 = vst.msk [vmem:[#allocation3 + $0x18] sm:$0xff] %vm614, %v3710
        %3723 = vst.msk [vmem:[#allocation3 + $0x20] sm:$0xff] %vm2174, %v3712
        %3724 = vst.msk [vmem:[#allocation3 + $0x28] sm:$0xff] %vm614, %v3712
        %3725 = vst.msk [vmem:[#allocation3 + $0x30] sm:$0xff] %vm2174, %v3714
        %3726 = vst.msk [vmem:[#allocation3 + $0x38] sm:$0xff] %vm614, %v3714
        %s3727 = scalar_lea.vmem [#allocation7], 480
        %v3728 = vld [vmem:[%s3727] sm:$0xff]
        %v3729 = vld [vmem:[%s3727 + $0x8] sm:$0xff]
        %v3730 = vld [vmem:[%s3727 + $0x10] sm:$0xff]
        %v3731 = vld [vmem:[%s3727 + $0x18] sm:$0xff]
        %v3732 = vld [vmem:[#allocation3] sm:$0xff]
        %v3733 = vld [vmem:[#allocation3 + $0x10] sm:$0xff]
        %v3734 = vld [vmem:[#allocation3 + $0x20] sm:$0xff]
        %v3735 = vld [vmem:[#allocation3 + $0x30] sm:$0xff]
        %s3736 = scalar_lea.vmem [#allocation7], 512
        %v3737 = vld [vmem:[%s3736] sm:$0xff]
        %v3738 = vld [vmem:[%s3736 + $0x8] sm:$0xff]
        %v3739 = vld [vmem:[%s3736 + $0x10] sm:$0xff]
        %v3740 = vld [vmem:[%s3736 + $0x18] sm:$0xff]
        %v3741 = vld [vmem:[#allocation3 + $0x8] sm:$0xff]
        %v3742 = vld [vmem:[#allocation3 + $0x18] sm:$0xff]
        %v3743 = vld [vmem:[#allocation3 + $0x28] sm:$0xff]
        %v3744 = vld [vmem:[#allocation3 + $0x38] sm:$0xff]
        %3753 = vrot.lane.b32.xlu0 %v3732, 120
        %v3754 = vpop.permute.xlu0 %3753
        %3755 = vrot.lane.b32.xlu0 %v3741, 120
        %v3756 = vpop.permute.xlu0 %3755
        %3757 = vrot.lane.b32.xlu0 %v3733, 120
        %v3758 = vpop.permute.xlu0 %3757
        %3759 = vrot.lane.b32.xlu0 %v3742, 120
        %v3760 = vpop.permute.xlu0 %3759
        %3761 = vrot.lane.b32.xlu0 %v3734, 120
        %v3762 = vpop.permute.xlu0 %3761
        %3763 = vrot.lane.b32.xlu0 %v3743, 120
        %v3764 = vpop.permute.xlu0 %3763
        %3765 = vrot.lane.b32.xlu0 %v3735, 120
        %v3766 = vpop.permute.xlu0 %3765
        %3767 = vrot.lane.b32.xlu0 %v3744, 120
        %v3768 = vpop.permute.xlu0 %3767
        %v3769 = vsel %vm778, %v3754, %v3756
        %v3770 = vsel %vm778, %v3758, %v3760
        %v3771 = vsel %vm778, %v3762, %v3764
        %v3772 = vsel %vm778, %v3766, %v3768
        %v3778 = vsel %vm787, %v3737, 0
        %v3781 = vsel %vm787, %v3738, 0
        %v3784 = vsel %vm787, %v3739, 0
        %v3787 = vsel %vm787, %v3740, 0
        %3789 = vmatpush.msra.mxu0 0.0
        %3790 = vmatpush.msra.mxu0 0.0
        %3791 = vmatpush.msra.mxu0 0.0
        %3792 = vmatpush.msra.mxu0 0.0
        %3793 = vmatpush.msra.mxu0 0.0
        %3794 = vmatpush.msra.mxu0 0.0
        %3795 = vmatpush.msra.mxu0 0.0
        %3796 = vmatpush.msra.mxu0 0.0
        %3797 = vmatpush.msra.mxu0 0.0
        %3798 = vmatpush.msra.mxu0 0.0
        %3799 = vmatpush.msra.mxu0 0.0
        %3800 = vmatpush.msra.mxu0 0.0
        %3801 = vmatpush.msra.mxu0 %v3772
        %3802 = vmatpush.msra.mxu0 %v3771
        %3803 = vmatpush.msra.mxu0 %v3770
        %3804 = vmatpush.msra.mxu0 %v3769
        %3805 = vmatmul.f32.gmra.mxu0 %v3778
        %v3806 = vpop.f32.mrf.mxu0
        %v3807 = vadd.f32 0.0, %v3806
        %3808 = vmatmul.f32.gmra.mxu0 %v3781
        %v3809 = vpop.f32.mrf.mxu0
        %v3810 = vadd.f32 0.0, %v3809
        %3811 = vmatmul.f32.gmra.mxu0 %v3784
        %v3812 = vpop.f32.mrf.mxu0
        %v3813 = vadd.f32 0.0, %v3812
        %3814 = vmatmul.f32.gmra.mxu0 %v3787
        %v3815 = vpop.f32.mrf.mxu0
        %v3816 = vadd.f32 0.0, %v3815
        %3817 = vdwg.mxu0
        %v3819 = vsel %vm787, %v3728, 0
        %v3822 = vsel %vm787, %v3729, 0
        %v3825 = vsel %vm787, %v3730, 0
        %v3828 = vsel %vm787, %v3731, 0
        %3830 = vmatpush.msra.mxu0 0.0
        %3831 = vmatpush.msra.mxu0 0.0
        %3832 = vmatpush.msra.mxu0 0.0
        %3833 = vmatpush.msra.mxu0 0.0
        %3834 = vmatpush.msra.mxu0 0.0
        %3835 = vmatpush.msra.mxu0 0.0
        %3836 = vmatpush.msra.mxu0 0.0
        %3837 = vmatpush.msra.mxu0 0.0
        %3838 = vmatpush.msra.mxu0 0.0
        %3839 = vmatpush.msra.mxu0 0.0
        %3840 = vmatpush.msra.mxu0 0.0
        %3841 = vmatpush.msra.mxu0 0.0
        %3842 = vmatpush.msra.mxu0 %v3735
        %3843 = vmatpush.msra.mxu0 %v3734
        %3844 = vmatpush.msra.mxu0 %v3733
        %3845 = vmatpush.msra.mxu0 %v3732
        %3846 = vmatmul.f32.gmra.mxu0 %v3819
        %v3847 = vpop.f32.mrf.mxu0
        %v3848 = vadd.f32 %v3807, %v3847
        %3849 = vmatmul.f32.gmra.mxu0 %v3822
        %v3850 = vpop.f32.mrf.mxu0
        %v3851 = vadd.f32 %v3810, %v3850
        %3852 = vmatmul.f32.gmra.mxu0 %v3825
        %v3853 = vpop.f32.mrf.mxu0
        %v3854 = vadd.f32 %v3813, %v3853
        %3855 = vmatmul.f32.gmra.mxu0 %v3828
        %v3856 = vpop.f32.mrf.mxu0
        %v3857 = vadd.f32 %v3816, %v3856
        %3858 = vdwg.mxu0
        %s3859 = scalar_lea.vmem [#allocation7], 544
        %v3860 = vld [vmem:[%s3859] sm:$0xff]
        %v3861 = vld [vmem:[%s3859 + $0x8] sm:$0xff]
        %v3862 = vld [vmem:[%s3859 + $0x10] sm:$0xff]
        %v3863 = vld [vmem:[%s3859 + $0x18] sm:$0xff]
        %3864 = vrot.lane.b32.xlu0 %v3732, 112
        %v3865 = vpop.permute.xlu0 %3864
        %3866 = vrot.lane.b32.xlu0 %v3741, 112
        %v3867 = vpop.permute.xlu0 %3866
        %3868 = vrot.lane.b32.xlu0 %v3733, 112
        %v3869 = vpop.permute.xlu0 %3868
        %3870 = vrot.lane.b32.xlu0 %v3742, 112
        %v3871 = vpop.permute.xlu0 %3870
        %3872 = vrot.lane.b32.xlu0 %v3734, 112
        %v3873 = vpop.permute.xlu0 %3872
        %3874 = vrot.lane.b32.xlu0 %v3743, 112
        %v3875 = vpop.permute.xlu0 %3874
        %3876 = vrot.lane.b32.xlu0 %v3735, 112
        %v3877 = vpop.permute.xlu0 %3876
        %3878 = vrot.lane.b32.xlu0 %v3744, 112
        %v3879 = vpop.permute.xlu0 %3878
        %v3880 = vsel %vm1992, %v3865, %v3867
        %v3881 = vsel %vm1992, %v3869, %v3871
        %v3882 = vsel %vm1992, %v3873, %v3875
        %v3883 = vsel %vm1992, %v3877, %v3879
        %v3889 = vsel %vm787, %v3860, 0
        %v3892 = vsel %vm787, %v3861, 0
        %v3895 = vsel %vm787, %v3862, 0
        %v3898 = vsel %vm787, %v3863, 0
        %3900 = vmatpush.msra.mxu0 0.0
        %3901 = vmatpush.msra.mxu0 0.0
        %3902 = vmatpush.msra.mxu0 0.0
        %3903 = vmatpush.msra.mxu0 0.0
        %3904 = vmatpush.msra.mxu0 0.0
        %3905 = vmatpush.msra.mxu0 0.0
        %3906 = vmatpush.msra.mxu0 0.0
        %3907 = vmatpush.msra.mxu0 0.0
        %3908 = vmatpush.msra.mxu0 0.0
        %3909 = vmatpush.msra.mxu0 0.0
        %3910 = vmatpush.msra.mxu0 0.0
        %3911 = vmatpush.msra.mxu0 0.0
        %3912 = vmatpush.msra.mxu0 %v3883
        %3913 = vmatpush.msra.mxu0 %v3882
        %3914 = vmatpush.msra.mxu0 %v3881
        %3915 = vmatpush.msra.mxu0 %v3880
        %3916 = vmatmul.f32.gmra.mxu0 %v3889
        %v3917 = vpop.f32.mrf.mxu0
        %v3918 = vadd.f32 0.0, %v3917
        %3919 = vmatmul.f32.gmra.mxu0 %v3892
        %v3920 = vpop.f32.mrf.mxu0
        %v3921 = vadd.f32 0.0, %v3920
        %3922 = vmatmul.f32.gmra.mxu0 %v3895
        %v3923 = vpop.f32.mrf.mxu0
        %v3924 = vadd.f32 0.0, %v3923
        %3925 = vmatmul.f32.gmra.mxu0 %v3898
        %v3926 = vpop.f32.mrf.mxu0
        %v3927 = vadd.f32 0.0, %v3926
        %3928 = vdwg.mxu0
        %v3929 = vadd.f32 %v3848, %v3918
        %v3930 = vadd.f32 %v3851, %v3921
        %v3931 = vadd.f32 %v3854, %v3924
        %v3932 = vadd.f32 %v3857, %v3927
        %s3933 = scalar_lea.vmem [#allocation7], 576
        %v3934 = vld [vmem:[%s3933] sm:$0xff]
        %v3935 = vld [vmem:[%s3933 + $0x8] sm:$0xff]
        %v3936 = vld [vmem:[%s3933 + $0x10] sm:$0xff]
        %v3937 = vld [vmem:[%s3933 + $0x18] sm:$0xff]
        %3938 = vrot.lane.b32.xlu0 %v3732, 104
        %v3939 = vpop.permute.xlu0 %3938
        %3940 = vrot.lane.b32.xlu0 %v3741, 104
        %v3941 = vpop.permute.xlu0 %3940
        %3942 = vrot.lane.b32.xlu0 %v3733, 104
        %v3943 = vpop.permute.xlu0 %3942
        %3944 = vrot.lane.b32.xlu0 %v3742, 104
        %v3945 = vpop.permute.xlu0 %3944
        %3946 = vrot.lane.b32.xlu0 %v3734, 104
        %v3947 = vpop.permute.xlu0 %3946
        %3948 = vrot.lane.b32.xlu0 %v3743, 104
        %v3949 = vpop.permute.xlu0 %3948
        %3950 = vrot.lane.b32.xlu0 %v3735, 104
        %v3951 = vpop.permute.xlu0 %3950
        %3952 = vrot.lane.b32.xlu0 %v3744, 104
        %v3953 = vpop.permute.xlu0 %3952
        %v3954 = vsel %vm3537, %v3939, %v3941
        %v3955 = vsel %vm3537, %v3943, %v3945
        %v3956 = vsel %vm3537, %v3947, %v3949
        %v3957 = vsel %vm3537, %v3951, %v3953
        %v3963 = vsel %vm787, %v3934, 0
        %v3966 = vsel %vm787, %v3935, 0
        %v3969 = vsel %vm787, %v3936, 0
        %v3972 = vsel %vm787, %v3937, 0
        %3974 = vmatpush.msra.mxu0 0.0
        %3975 = vmatpush.msra.mxu0 0.0
        %3976 = vmatpush.msra.mxu0 0.0
        %3977 = vmatpush.msra.mxu0 0.0
        %3978 = vmatpush.msra.mxu0 0.0
        %3979 = vmatpush.msra.mxu0 0.0
        %3980 = vmatpush.msra.mxu0 0.0
        %3981 = vmatpush.msra.mxu0 0.0
        %3982 = vmatpush.msra.mxu0 0.0
        %3983 = vmatpush.msra.mxu0 0.0
        %3984 = vmatpush.msra.mxu0 0.0
        %3985 = vmatpush.msra.mxu0 0.0
        %3986 = vmatpush.msra.mxu0 %v3957
        %3987 = vmatpush.msra.mxu0 %v3956
        %3988 = vmatpush.msra.mxu0 %v3955
        %3989 = vmatpush.msra.mxu0 %v3954
        %3990 = vmatmul.f32.gmra.mxu0 %v3963
        %v3991 = vpop.f32.mrf.mxu0
        %v3992 = vadd.f32 0.0, %v3991
        %3993 = vmatmul.f32.gmra.mxu0 %v3966
        %v3994 = vpop.f32.mrf.mxu0
        %v3995 = vadd.f32 0.0, %v3994
        %3996 = vmatmul.f32.gmra.mxu0 %v3969
        %v3997 = vpop.f32.mrf.mxu0
        %v3998 = vadd.f32 0.0, %v3997
        %3999 = vmatmul.f32.gmra.mxu0 %v3972
        %v4000 = vpop.f32.mrf.mxu0
        %v4001 = vadd.f32 0.0, %v4000
        %4002 = vdwg.mxu0
        %v4003 = vadd.f32 %v3929, %v3992
        %v4004 = vadd.f32 %v3930, %v3995
        %v4005 = vadd.f32 %v3931, %v3998
        %v4006 = vadd.f32 %v3932, %v4001
        %s4007 = scalar_lea.vmem [#allocation7], 608
        %v4008 = vld [vmem:[%s4007] sm:$0xff]
        %v4009 = vld [vmem:[%s4007 + $0x8] sm:$0xff]
        %v4010 = vld [vmem:[%s4007 + $0x10] sm:$0xff]
        %v4011 = vld [vmem:[%s4007 + $0x18] sm:$0xff]
        %4012 = vrot.lane.b32.xlu0 %v3732, 96
        %v4013 = vpop.permute.xlu0 %4012
        %4014 = vrot.lane.b32.xlu0 %v3741, 96
        %v4015 = vpop.permute.xlu0 %4014
        %4016 = vrot.lane.b32.xlu0 %v3733, 96
        %v4017 = vpop.permute.xlu0 %4016
        %4018 = vrot.lane.b32.xlu0 %v3742, 96
        %v4019 = vpop.permute.xlu0 %4018
        %4020 = vrot.lane.b32.xlu0 %v3734, 96
        %v4021 = vpop.permute.xlu0 %4020
        %4022 = vrot.lane.b32.xlu0 %v3743, 96
        %v4023 = vpop.permute.xlu0 %4022
        %4024 = vrot.lane.b32.xlu0 %v3735, 96
        %v4025 = vpop.permute.xlu0 %4024
        %4026 = vrot.lane.b32.xlu0 %v3744, 96
        %v4027 = vpop.permute.xlu0 %4026
        %vm4028 = vcmask 785408
        %v4029 = vsel %vm4028, %v4013, %v4015
        %v4030 = vsel %vm4028, %v4017, %v4019
        %v4031 = vsel %vm4028, %v4021, %v4023
        %v4032 = vsel %vm4028, %v4025, %v4027
        %v4038 = vsel %vm787, %v4008, 0
        %v4041 = vsel %vm787, %v4009, 0
        %v4044 = vsel %vm787, %v4010, 0
        %v4047 = vsel %vm787, %v4011, 0
        %4049 = vmatpush.msra.mxu0 0.0
        %4050 = vmatpush.msra.mxu0 0.0
        %4051 = vmatpush.msra.mxu0 0.0
        %4052 = vmatpush.msra.mxu0 0.0
        %4053 = vmatpush.msra.mxu0 0.0
        %4054 = vmatpush.msra.mxu0 0.0
        %4055 = vmatpush.msra.mxu0 0.0
        %4056 = vmatpush.msra.mxu0 0.0
        %4057 = vmatpush.msra.mxu0 0.0
        %4058 = vmatpush.msra.mxu0 0.0
        %4059 = vmatpush.msra.mxu0 0.0
        %4060 = vmatpush.msra.mxu0 0.0
        %4061 = vmatpush.msra.mxu0 %v4032
        %4062 = vmatpush.msra.mxu0 %v4031
        %4063 = vmatpush.msra.mxu0 %v4030
        %4064 = vmatpush.msra.mxu0 %v4029
        %4065 = vmatmul.f32.gmra.mxu0 %v4038
        %v4066 = vpop.f32.mrf.mxu0
        %v4067 = vadd.f32 0.0, %v4066
        %4068 = vmatmul.f32.gmra.mxu0 %v4041
        %v4069 = vpop.f32.mrf.mxu0
        %v4070 = vadd.f32 0.0, %v4069
        %4071 = vmatmul.f32.gmra.mxu0 %v4044
        %v4072 = vpop.f32.mrf.mxu0
        %v4073 = vadd.f32 0.0, %v4072
        %4074 = vmatmul.f32.gmra.mxu0 %v4047
        %v4075 = vpop.f32.mrf.mxu0
        %v4076 = vadd.f32 0.0, %v4075
        %4077 = vdwg.mxu0
        %v4078 = vadd.f32 %v4003, %v4067
        %v4079 = vadd.f32 %v4004, %v4070
        %v4080 = vadd.f32 %v4005, %v4073
        %v4081 = vadd.f32 %v4006, %v4076
        %s4082 = scalar_lea.vmem %s9, 96
        %v4083 = vld [vmem:[%s4082] sm:$0xff]
        %v4084 = vld [vmem:[%s4082 + $0x8] sm:$0xff]
        %v4085 = vld [vmem:[%s4082 + $0x10] sm:$0xff]
        %v4086 = vld [vmem:[%s4082 + $0x18] sm:$0xff]
        %4088 = vset.pattern.permute.xlu0 0
        %4089 = vperm.xlu0 %4088, %v4083
        %v4090 = vpop.permute.xlu0 %4089
        %4093 = vset.pattern.permute.xlu0 0
        %4094 = vperm.xlu0 %4093, %v4084
        %v4095 = vpop.permute.xlu0 %4094
        %4098 = vset.pattern.permute.xlu0 0
        %4099 = vperm.xlu0 %4098, %v4085
        %v4100 = vpop.permute.xlu0 %4099
        %4103 = vset.pattern.permute.xlu0 0
        %4104 = vperm.xlu0 %4103, %v4086
        %v4105 = vpop.permute.xlu0 %4104
        %v4107 = vadd.f32 %v4078, %v4090
        %v4108 = vadd.f32 %v4079, %v4095
        %v4109 = vadd.f32 %v4080, %v4100
        %v4110 = vadd.f32 %v4081, %v4105
        %v4111 = vmax.f32 %v4107, 0.0
        %v4112 = vmax.f32 %v4108, 0.0
        %v4113 = vmax.f32 %v4109, 0.0
        %v4114 = vmax.f32 %v4110, 0.0
        %s4115 = scalar_lea.vmem %s10, 96
        %v4116 = vld [vmem:[%s4115] sm:$0xff]
        %v4117 = vld [vmem:[%s4115 + $0x8] sm:$0xff]
        %v4118 = vld [vmem:[%s4115 + $0x10] sm:$0xff]
        %v4119 = vld [vmem:[%s4115 + $0x18] sm:$0xff]
        %s4120 = scalar_lea.vmem %s11, 96
        %v4121 = vld [vmem:[%s4120] sm:$0xff]
        %v4122 = vld [vmem:[%s4120 + $0x8] sm:$0xff]
        %v4123 = vld [vmem:[%s4120 + $0x10] sm:$0xff]
        %v4124 = vld [vmem:[%s4120 + $0x18] sm:$0xff]
        %4126 = vset.pattern.permute.xlu0 0
        %4127 = vperm.xlu0 %4126, %v4121
        %v4128 = vpop.permute.xlu0 %4127
        %4131 = vset.pattern.permute.xlu0 0
        %4132 = vperm.xlu0 %4131, %v4122
        %v4133 = vpop.permute.xlu0 %4132
        %4136 = vset.pattern.permute.xlu0 0
        %4137 = vperm.xlu0 %4136, %v4123
        %v4138 = vpop.permute.xlu0 %4137
        %4141 = vset.pattern.permute.xlu0 0
        %4142 = vperm.xlu0 %4141, %v4124
        %v4143 = vpop.permute.xlu0 %4142
        %v4146 = vsel %vm787, %v4116, 0
        %v4149 = vsel %vm787, %v4117, 0
        %v4152 = vsel %vm787, %v4118, 0
        %v4155 = vsel %vm787, %v4119, 0
        %4157 = vmatpush.msra.mxu0 0.0
        %4158 = vmatpush.msra.mxu0 0.0
        %4159 = vmatpush.msra.mxu0 0.0
        %4160 = vmatpush.msra.mxu0 0.0
        %4161 = vmatpush.msra.mxu0 0.0
        %4162 = vmatpush.msra.mxu0 0.0
        %4163 = vmatpush.msra.mxu0 0.0
        %4164 = vmatpush.msra.mxu0 0.0
        %4165 = vmatpush.msra.mxu0 0.0
        %4166 = vmatpush.msra.mxu0 0.0
        %4167 = vmatpush.msra.mxu0 0.0
        %4168 = vmatpush.msra.mxu0 0.0
        %4169 = vmatpush.msra.mxu0 %v4114
        %4170 = vmatpush.msra.mxu0 %v4113
        %4171 = vmatpush.msra.mxu0 %v4112
        %4172 = vmatpush.msra.mxu0 %v4111
        %4173 = vmatmul.f32.gmra.mxu0 %v4146
        %v4174 = vpop.f32.mrf.mxu0
        %v4175 = vadd.f32 %v4128, %v4174
        %4176 = vmatmul.f32.gmra.mxu0 %v4149
        %v4177 = vpop.f32.mrf.mxu0
        %v4178 = vadd.f32 %v4133, %v4177
        %4179 = vmatmul.f32.gmra.mxu0 %v4152
        %v4180 = vpop.f32.mrf.mxu0
        %v4181 = vadd.f32 %v4138, %v4180
        %4182 = vmatmul.f32.gmra.mxu0 %v4155
        %v4183 = vpop.f32.mrf.mxu0
        %v4184 = vadd.f32 %v4143, %v4183
        %4185 = vdwg.mxu0
        %v4186 = vadd.f32 %v3699, %v4175
        %v4187 = vadd.f32 %v3700, %v4178
        %v4188 = vadd.f32 %v3701, %v4181
        %v4189 = vadd.f32 %v3702, %v4184
        %v4190 = vmul.f32 %v4186, %v556
        %v4191 = vmul.f32 %v4187, %v556
        %v4192 = vmul.f32 %v4188, %v556
        %v4193 = vmul.f32 %v4189, %v556
        %v4194 = vld [vmem:[%s12] sm:$0xff]
        %v4195 = vld [vmem:[%s13] sm:$0xff]
        %4197 = vset.pattern.permute.xlu0 0
        %4198 = vperm.xlu0 %4197, %v4195
        %v4199 = vpop.permute.xlu0 %4198
        %vm4201 = vcmask 523264
        %v4203 = vsel %vm4201, %v4194, 0
        %4205 = vmatpush.msra.mxu0 0.0
        %4206 = vmatpush.msra.mxu0 0.0
        %4207 = vmatpush.msra.mxu0 0.0
        %4208 = vmatpush.msra.mxu0 0.0
        %4209 = vmatpush.msra.mxu0 0.0
        %4210 = vmatpush.msra.mxu0 0.0
        %4211 = vmatpush.msra.mxu0 0.0
        %4212 = vmatpush.msra.mxu0 0.0
        %4213 = vmatpush.msra.mxu0 %v4193
        %4214 = vmatpush.msra.mxu0 %v4192
        %4215 = vmatpush.msra.mxu0 %v4191
        %4216 = vmatpush.msra.mxu0 %v4190
        %4217 = vmatpush.msra.mxu0 %v2157
        %4218 = vmatpush.msra.mxu0 %v2156
        %4219 = vmatpush.msra.mxu0 %v2155
        %4220 = vmatpush.msra.mxu0 %v2154
        %4221 = vmatmul.f32.gmra.mxu0 %v4203
        %v4222 = vpop.f32.mrf.mxu0
        %v4223 = vadd.f32 %v4199, %v4222
        %4224 = vdwg.mxu0
        %v4225 = vmul.f32 %v4223, %v556
        %v4226 = vadd.f32 %v2154, %v4190
        %v4227 = vadd.f32 %v2155, %v4191
        %v4228 = vadd.f32 %v2156, %v4192
        %v4229 = vadd.f32 %v2157, %v4193
        %4230 = vst [vmem:[%s536] sm:$0xff] %v4226
        %4231 = vst [vmem:[%s536 + $0x8] sm:$0xff] %v4227
        %4232 = vst [vmem:[%s536 + $0x10] sm:$0xff] %v4228
        %4233 = vst [vmem:[%s536 + $0x18] sm:$0xff] %v4229
        %4234 = vst [vmem:[%s543] sm:$0xff] %v4225
        %s4235 = sand.u32 %s347, 1
        %s4236 = scalar_lea.sflag [#allocation6], %s4235
        %s4237 = sand.u32 %s347, 1
        %s4238 = smul.addr %s4237, 32
        %s4239 = scalar_lea.vmem [#allocation9], %s4238
        %s4240 = sand.u32 %s373, 1
        %s4241 = scalar_lea.sflag [#allocation11], %s4240
        %s4242 = sand.u32 %s373, 1
        %s4243 = smul.addr %s4242, 8
        %s4244 = scalar_lea.vmem [#allocation10], %s4243
        // Predicated region
        $region85: #{tower_forward.1} parent=75 // pred_check
          %p4245 = pneg %p357
        $region86: #{tower_forward.1} parent=75 // pred_check_branch
          %4247 = sbr.rel (%p4245) target = $region88
        $region87: #{tower_forward.1} parent=75 // pred_region
          %4249 = vsyncadd %s4236, 0
          %s4250 = smul.addr %s35, 4
          %s4251 = smul.addr %s4250, 8
          %s4252 = scalar_lea.hbm %s14, %s4251
          %s4253 = sshll.u32 %s4239, 4
          %s4254 = int_to_ptr.vmem [resolvable:$true] %s4253
          %s4255 = sshll.u32 %s4252, 4
          %s4256 = int_to_ptr.hbm [resolvable:$true] %s4255
          %4261 = dma.vmem_to_hbm [thread:$0]  %s4254, 512, %s4256, %s4236, 128, 128, 8
        $region88: #{tower_forward.1} parent=75 // pred_fallthru
          _
        // Predicated region
        $region89: #{tower_forward.1} parent=75 // pred_check
          %p4262 = pneg %p383
        $region90: #{tower_forward.1} parent=75 // pred_check_branch
          %4264 = sbr.rel (%p4262) target = $region92
        $region91: #{tower_forward.1} parent=75 // pred_region
          %4266 = vsyncadd %s4241, 0
          %s4267 = smul.addr %s35, 8
          %s4268 = scalar_lea.hbm %s15, %s4267
          %s4270 = sshll.u32 %s4244, 4
          %s4271 = int_to_ptr.vmem [resolvable:$true] %s4270
          %s4272 = sshll.u32 %s4268, 4
          %s4273 = int_to_ptr.hbm [resolvable:$true] %s4272
          %4275 = dma.vmem_to_hbm [thread:$0]  %s4271, 128, %s4273, %s4241
        $region92: #{tower_forward.1} parent=75 // pred_fallthru
          _
      $region76: #{tower_forward.1} parent=5 // pred_fallthru
        _
      %p4276 = scmp.le.s32.totalorder 2, %s30
      // Predicated region
      $region93: #{tower_forward.1} parent=5 // pred_check
        %p4277 = pneg %p4276
      $region94: #{tower_forward.1} parent=5 // pred_check_branch
        %4279 = sbr.rel (%p4277) target = $region96
      $region95: #{tower_forward.1} parent=5 // pred_region
        %s4280 = ssub.s32 %s30, 2
        // Predicated region
        $region97: #{tower_forward.1} parent=95 // pred_check
          %p4281 = pneg %p363
        $region98: #{tower_forward.1} parent=95 // pred_check_branch
          %4283 = sbr.rel (%p4281) target = $region100
        $region99: #{tower_forward.1} parent=95 // pred_region
          %s4284 = sand.u32 %s348, 1
          %s4285 = scalar_lea.sflag [#allocation6], %s4284
          %s4286 = sand.u32 %s348, 1
          %s4287 = smul.addr %s4286, 32
          %s4288 = scalar_lea.vmem [#allocation9], %s4287
          %4290 = dma.done %s4285, 512
        $region100: #{tower_forward.1} parent=95 // pred_fallthru
          _
        // Predicated region
        $region101: #{tower_forward.1} parent=95 // pred_check
          %p4291 = pneg %p389
        $region102: #{tower_forward.1} parent=95 // pred_check_branch
          %4293 = sbr.rel (%p4291) target = $region104
        $region103: #{tower_forward.1} parent=95 // pred_region
          %s4294 = sand.u32 %s374, 1
          %s4295 = scalar_lea.sflag [#allocation11], %s4294
          %s4296 = sand.u32 %s374, 1
          %s4297 = smul.addr %s4296, 8
          %s4298 = scalar_lea.vmem [#allocation10], %s4297
          %4300 = dma.done %s4295, 128
        $region104: #{tower_forward.1} parent=95 // pred_fallthru
          _
      $region96: #{tower_forward.1} parent=5 // pred_fallthru
        _
    $region6: #{tower_forward.1} parent=1 // loop_footer
      %s34 = sadd.s32 1, %s30
    $region7: #{tower_forward.1} parent=1 // loop_footer_branch
      %29 = sbr.rel target = $region3
    $region8: #{tower_forward.1} parent=1 // loop_exit
      _
    %4301 = vsyncpa [#allocation5], 1
    %s4302 = scalar_lea.sflag [#allocation5], 1
    %4303 = vsyncpa %s4302, 1
    %4304 = vsyncpa [#allocation8], 1
    %4305 = vsyncpa [#allocation6], 1
    %s4306 = scalar_lea.sflag [#allocation6], 1
    %4307 = vsyncpa %s4306, 1
    %4308 = vsyncpa [#allocation11], 1
    %s4309 = scalar_lea.sflag [#allocation11], 1
    %4310 = vsyncpa %s4309, 1

</llo_original>
